<compile_context>
chip_gen: v5e
topology: v5e:2x2
jax: 0.10.0
libtpu: 0.0.40
codegen_flags: <defaults>
</compile_context>

<pallas_src>
import math
from functools import partial

import jax
import jax.numpy as jnp
import numpy as np
from jax.experimental import pallas as pl
from jax.experimental.pallas import tpu as pltpu

EPS = 1e-5  # torch.nn.LayerNorm default eps


def _layernorm(x, gamma, beta):
    mu = jnp.mean(x, axis=-1, keepdims=True)
    var = jnp.mean((x - mu) ** 2, axis=-1, keepdims=True)
    return (x - mu) * jax.lax.rsqrt(var + EPS) * gamma + beta


# ------------------------------ fused kernel ------------------------------- #

def speechformer_fused_kernel(
        x_ref, ln0_g_ref, ln0_b_ref,
        wqkv_ref, bqkv_ref, wo_ref, bo_ref, g1_ref, b1_ref,
        w1_ref, bf1_ref, w2_ref, bf2_ref, g2_ref, b2_ref,
        o_ref, acc_ref, *, num_heads):
    layer = pl.program_id(1)                     # innermost ("arbitrary") axis
    Bt, T, E = x_ref.shape
    N = Bt * T
    H = num_heads
    dh = E // H
    scaling = float(dh) ** -0.5

    # ---- prologue (layer 0): load input, apply the block's input LayerNorm.
    @pl.when(layer == 0)
    def _():
        x0 = x_ref[...].astype(jnp.float32).reshape(N, E)
        acc_ref[...] = _layernorm(x0, ln0_g_ref[...], ln0_b_ref[...])

    x = acc_ref[...]                             # (N, E) f32 activation carry
    x_bf = x.astype(jnp.bfloat16)

    # ---- Speech_MSA (local_size == 0 -> global attention) -----------------
    # QKV: q/k/v split along the *leading* axis of wqkv (no lane slicing),
    # each a full-width (N,E)@(E,E) bf16 matmul with f32 accumulation.
    q = (jnp.dot(x_bf, wqkv_ref[0], preferred_element_type=jnp.float32)
         + bqkv_ref[0]) * scaling
    k = jnp.dot(x_bf, wqkv_ref[1], preferred_element_type=jnp.float32) + bqkv_ref[1]
    v = jnp.dot(x_bf, wqkv_ref[2], preferred_element_type=jnp.float32) + bqkv_ref[2]

    # Head-batched attention per batch row: assemble (H, T, dh) once, then one
    # batched einsum for scores and one for PV (flash-style 'bqd,bkd->bqk').
    # TODO(synk): for production T, tile KV with an online-softmax accumulator
    # instead of materializing the full (H, T, T) score tensor.
    ctx_rows = []
    for b in range(Bt):                          # static unroll over batch rows
        r0 = b * T
        qb = jnp.stack([q[r0:r0 + T, h * dh:(h + 1) * dh] for h in range(H)],
                       axis=0).astype(jnp.bfloat16)          # (H, T, dh)
        kb = jnp.stack([k[r0:r0 + T, h * dh:(h + 1) * dh] for h in range(H)],
                       axis=0).astype(jnp.bfloat16)
        vb = jnp.stack([v[r0:r0 + T, h * dh:(h + 1) * dh] for h in range(H)],
                       axis=0).astype(jnp.bfloat16)
        s = jnp.einsum('htd,hsd->hts', qb, kb,
                       preferred_element_type=jnp.float32)    # (H, T, T) f32
        s = s - jnp.max(s, axis=-1, keepdims=True)
        p = jnp.exp(s)
        p = p * pl.reciprocal(jnp.sum(p, axis=-1, keepdims=True), approx=True)
        cb = jnp.einsum('hts,hsd->htd', p.astype(jnp.bfloat16), vb,
                        preferred_element_type=jnp.float32)   # (H, T, dh) f32
        # reassemble heads back into the embedding lane order (T, E)
        ctx_rows.append(jnp.concatenate([cb[h] for h in range(H)], axis=-1))
    ctx = ctx_rows[0] if Bt == 1 else jnp.concatenate(ctx_rows, axis=0)  # (N, E)

    # Single full-E output projection (one matmul, full contraction width).
    attn = jnp.dot(ctx.astype(jnp.bfloat16), wo_ref[...],
                   preferred_element_type=jnp.float32) + bo_ref[...]
    # TODO(synk): dropout (p=0.1) is identity at inference time; not implemented.

    x = _layernorm(x + attn, g1_ref[...], b1_ref[...])

    # ---- position-wise feed-forward (relu) --------------------------------
    h1 = jnp.dot(x.astype(jnp.bfloat16), w1_ref[...],
                 preferred_element_type=jnp.float32) + bf1_ref[...]
    h1 = jnp.maximum(h1, 0.0)
    h2 = jnp.dot(h1.astype(jnp.bfloat16), w2_ref[...],
                 preferred_element_type=jnp.float32) + bf2_ref[...]
    x = _layernorm(x + h2, g2_ref[...], b2_ref[...])

    acc_ref[...] = x                              # carry to next layer (VMEM)

    @pl.when(layer == pl.num_programs(1) - 1)
    def _():                                      # write HBM only once per batch block
        o_ref[...] = x.reshape(Bt, T, E).astype(o_ref.dtype)


# ----------------------------- pallas_call glue ----------------------------- #

def speechformer_blocks_forward(x, params, num_heads, *, batch_block=None):
    B, T, E = x.shape
    L = params["wqkv"].shape[0]
    F = params["w1"].shape[-1]
    assert E % num_heads == 0
    Bt = B if batch_block is None else batch_block
    assert B % Bt == 0
    nb = B // Bt

    act_map = lambda b, l: (b, 0, 0)              # same block across the layer axis
    lay3 = lambda b, l: (l, 0, 0)                 # per-layer stacked weights
    lay4 = lambda b, l: (l, 0, 0, 0)
    const2 = lambda b, l: (0, 0)

    in_specs = [
        pl.BlockSpec((Bt, T, E), act_map),        # x
        pl.BlockSpec((1, E), const2),             # input_norm gamma
        pl.BlockSpec((1, E), const2),             # input_norm beta
        pl.BlockSpec((None, 3, E, E), lay4),      # wqkv   (bf16)
        pl.BlockSpec((None, 3, 1, E), lay4),      # bqkv
        pl.BlockSpec((None, E, E), lay3),         # wo     (bf16)
        pl.BlockSpec((None, 1, E), lay3),         # bo
        pl.BlockSpec((None, 1, E), lay3),         # ln1 gamma
        pl.BlockSpec((None, 1, E), lay3),         # ln1 beta
        pl.BlockSpec((None, E, F), lay3),         # w1     (bf16)
        pl.BlockSpec((None, 1, F), lay3),         # b1
        pl.BlockSpec((None, F, E), lay3),         # w2     (bf16)
        pl.BlockSpec((None, 1, E), lay3),         # b2
        pl.BlockSpec((None, 1, E), lay3),         # ln2 gamma
        pl.BlockSpec((None, 1, E), lay3),         # ln2 beta
    ]
    out_specs = pl.BlockSpec((Bt, T, E), act_map)

    return pl.pallas_call(
        partial(speechformer_fused_kernel, num_heads=num_heads),
        out_shape=jax.ShapeDtypeStruct((B, T, E), x.dtype),
        grid_spec=pltpu.PrefetchScalarGridSpec(
            num_scalar_prefetch=0,
            grid=(nb, L),                          # (batch tiles, layers)
            in_specs=in_specs,
            out_specs=out_specs,
            scratch_shapes=[pltpu.VMEM((Bt * T, E), jnp.float32)],  # activation carry
        ),
        compiler_params=pltpu.CompilerParams(
            dimension_semantics=("parallel", "arbitrary"),
            vmem_limit_bytes=48 * 1024 * 1024,
        ),
    )(x, params["ln0_g"], params["ln0_b"],
      params["wqkv"], params["bqkv"], params["wo"], params["bo"],
      params["g1"], params["b1"], params["w1"], params["bf1"],
      params["w2"], params["bf2"], params["g2"], params["b2"])


# ----------------------------- parameter init ------------------------------ #

def init_params(key, num_layers, embed_dim, ffn_dim):
    E, F, L = embed_dim, ffn_dim, num_layers

    def xavier(k, shape, fan_in, fan_out):
        bound = math.sqrt(6.0 / (fan_in + fan_out))
        return jax.random.uniform(k, shape, jnp.float32, -bound, bound)

    ks = jax.random.split(key, 16)
    # LayerNorm affine params slightly perturbed from the (1, 0) defaults so the
    # test exercises the affine path.  Matmul weights stored bf16 (MXU operands).
    return {
        "ln0_g": 1.0 + 0.05 * jax.random.normal(ks[0], (1, E), jnp.float32),
        "ln0_b": 0.05 * jax.random.normal(ks[1], (1, E), jnp.float32),
        "wqkv": xavier(ks[2], (L, 3, E, E), E, 3 * E).astype(jnp.bfloat16),
        "bqkv": 0.02 * jax.random.normal(ks[3], (L, 3, 1, E), jnp.float32),
        "wo":   xavier(ks[4], (L, E, E), E, E).astype(jnp.bfloat16),
        "bo":   0.02 * jax.random.normal(ks[5], (L, 1, E), jnp.float32),
        "g1":   1.0 + 0.05 * jax.random.normal(ks[6], (L, 1, E), jnp.float32),
        "b1":   0.05 * jax.random.normal(ks[7], (L, 1, E), jnp.float32),
        "w1":   xavier(ks[8], (L, E, F), E, F).astype(jnp.bfloat16),
        "bf1":  0.02 * jax.random.normal(ks[9], (L, 1, F), jnp.float32),
        "w2":   xavier(ks[10], (L, F, E), F, E).astype(jnp.bfloat16),
        "bf2":  0.02 * jax.random.normal(ks[11], (L, 1, E), jnp.float32),
        "g2":   1.0 + 0.05 * jax.random.normal(ks[12], (L, 1, E), jnp.float32),
        "b2":   0.05 * jax.random.normal(ks[13], (L, 1, E), jnp.float32),
    }


# ------------------------------ pure-JAX ref -------------------------------- #

def reference_forward(x, params, num_heads):
    """f32 reference with the exact PyTorch-module semantics."""
    def ln(y, g, b):
        mu = y.mean(-1, keepdims=True)
        var = ((y - mu) ** 2).mean(-1, keepdims=True)
        return (y - mu) / jnp.sqrt(var + EPS) * g + b

    f32 = lambda a: a.astype(jnp.float32)
    B, T, E = x.shape
    H = num_heads
    dh = E // H
    L = params["wqkv"].shape[0]

    out = ln(x, params["ln0_g"], params["ln0_b"])
    for l in range(L):
        res = out
        q = (out @ f32(params["wqkv"][l, 0]) + params["bqkv"][l, 0]) * dh ** -0.5
        k = out @ f32(params["wqkv"][l, 1]) + params["bqkv"][l, 1]
        v = out @ f32(params["wqkv"][l, 2]) + params["bqkv"][l, 2]
        qh = q.reshape(B, T, H, dh).transpose(0, 2, 1, 3)
        kh = k.reshape(B, T, H, dh).transpose(0, 2, 1, 3)
        vh = v.reshape(B, T, H, dh).transpose(0, 2, 1, 3)
        s = jnp.einsum("bhtd,bhsd->bhts", qh, kh)
        p = jax.nn.softmax(s, axis=-1)
        a = jnp.einsum("bhts,bhsd->bhtd", p, vh).transpose(0, 2, 1, 3).reshape(B, T, E)
        a = a @ f32(params["wo"][l]) + params["bo"][l]
        out = ln(res + a, params["g1"][l], params["b1"][l])
        res = out
        h = jax.nn.relu(out @ f32(params["w1"][l]) + params["bf1"][l])
        h = h @ f32(params["w2"][l]) + params["bf2"][l]
        out = ln(res + h, params["g2"][l], params["b2"][l])
    return out


# ---------------------------------- main ------------------------------------ #

if __name__ == "__main__":
    # E chosen as a multiple of 128 (lane-dense stores); T a multiple of 8.
    B, T, EMBED, HEADS, FFN, LAYERS = 2, 8, 128, 8, 256, 2

    key = jax.random.PRNGKey(0)
    kx, kp = jax.random.split(key)
    x = jax.random.normal(kx, (B, T, EMBED), jnp.float32)
    params = init_params(kp, LAYERS, EMBED, FFN)

    out = jax.block_until_ready(speechformer_blocks_forward(x, params, HEADS))
    ref = reference_forward(x, params, HEADS)

    assert out.shape == (B, T, EMBED)
    # Loose tolerance: kernel uses bf16 MXU operands + approx EUP reciprocal,
    # reference is pure f32.
    np.testing.assert_allclose(np.asarray(out), np.asarray(ref), rtol=5e-2, atol=5e-2)
    print("KERNEL_OK")
</pallas_src>

<mosaic_0001>
module attributes {stable_mosaic.version = 11 : i64} {
  func.func @speechformer_fused_kernel(%arg0: i32, %arg1: i32, %arg2: memref<2x8x128xf32, #tpu.memory_space<vmem>>, %arg3: memref<1x128xf32, #tpu.memory_space<vmem>>, %arg4: memref<1x128xf32, #tpu.memory_space<vmem>>, %arg5: memref<1x3x128x128xbf16, #tpu.memory_space<vmem>>, %arg6: memref<1x3x1x128xf32, #tpu.memory_space<vmem>>, %arg7: memref<1x128x128xbf16, #tpu.memory_space<vmem>>, %arg8: memref<1x1x128xf32, #tpu.memory_space<vmem>>, %arg9: memref<1x1x128xf32, #tpu.memory_space<vmem>>, %arg10: memref<1x1x128xf32, #tpu.memory_space<vmem>>, %arg11: memref<1x128x256xbf16, #tpu.memory_space<vmem>>, %arg12: memref<1x1x256xf32, #tpu.memory_space<vmem>>, %arg13: memref<1x256x128xbf16, #tpu.memory_space<vmem>>, %arg14: memref<1x1x128xf32, #tpu.memory_space<vmem>>, %arg15: memref<1x1x128xf32, #tpu.memory_space<vmem>>, %arg16: memref<1x1x128xf32, #tpu.memory_space<vmem>>, %arg17: memref<2x8x128xf32, #tpu.memory_space<vmem>>, %arg18: memref<16x128xf32, #tpu.memory_space<vmem>>) attributes {dimension_semantics = [#tpu.dimension_semantics<parallel>, #tpu.dimension_semantics<arbitrary>], iteration_bounds = array<i64: 1, 2>, scalar_prefetch = 0 : i64, scratch_operands = 1 : i64, tpu.core_type = #tpu.core_type<tc>, window_params = [{transform_indices = @transform_0, window_bounds = array<i64: 2, 8, 128>}, {pipeline_mode = #tpu.pipeline_mode<synchronous>, transform_indices = @transform_1, window_bounds = array<i64: 1, 128>}, {pipeline_mode = #tpu.pipeline_mode<synchronous>, transform_indices = @transform_2, window_bounds = array<i64: 1, 128>}, {transform_indices = @transform_3, window_bounds = array<i64: 1, 3, 128, 128>}, {transform_indices = @transform_4, window_bounds = array<i64: 1, 3, 1, 128>}, {transform_indices = @transform_5, window_bounds = array<i64: 1, 128, 128>}, {transform_indices = @transform_6, window_bounds = array<i64: 1, 1, 128>}, {transform_indices = @transform_7, window_bounds = array<i64: 1, 1, 128>}, {transform_indices = @transform_8, window_bounds = array<i64: 1, 1, 128>}, {transform_indices = @transform_9, window_bounds = array<i64: 1, 128, 256>}, {transform_indices = @transform_10, window_bounds = array<i64: 1, 1, 256>}, {transform_indices = @transform_11, window_bounds = array<i64: 1, 256, 128>}, {transform_indices = @transform_12, window_bounds = array<i64: 1, 1, 128>}, {transform_indices = @transform_13, window_bounds = array<i64: 1, 1, 128>}, {transform_indices = @transform_14, window_bounds = array<i64: 1, 1, 128>}, {transform_indices = @transform_15, window_bounds = array<i64: 2, 8, 128>}]} {
    %c0_i32 = arith.constant 0 : i32
    %0 = arith.cmpi eq, %arg1, %c0_i32 : i32
    %1 = arith.extui %0 : i1 to i32
    %c0_i32_0 = arith.constant 0 : i32
    %2 = arith.cmpi ne, %1, %c0_i32_0 : i32
    scf.if %2 {
      %c0_82 = arith.constant 0 : index
      %c0_83 = arith.constant 0 : index
      %c0_84 = arith.constant 0 : index
      %281 = vector.load %arg2[%c0_82, %c0_83, %c0_84] : memref<2x8x128xf32, #tpu.memory_space<vmem>>, vector<2x8x128xf32>
      %282 = vector.shape_cast %281 : vector<2x8x128xf32> to vector<16x128xf32>
      %c0_85 = arith.constant 0 : index
      %c0_86 = arith.constant 0 : index
      %283 = vector.load %arg3[%c0_85, %c0_86] : memref<1x128xf32, #tpu.memory_space<vmem>>, vector<1x128xf32>
      %c0_87 = arith.constant 0 : index
      %c0_88 = arith.constant 0 : index
      %284 = vector.load %arg4[%c0_87, %c0_88] : memref<1x128xf32, #tpu.memory_space<vmem>>, vector<1x128xf32>
      %cst_89 = arith.constant dense<0.000000e+00> : vector<16xf32>
      %285 = vector.multi_reduction <add>, %282, %cst_89 [1] : vector<16x128xf32> to vector<16xf32>
      %286 = vector.shape_cast %285 : vector<16xf32> to vector<16x1xf32>
      %cst_90 = arith.constant 1.280000e+02 : f32
      %287 = vector.broadcast %cst_90 : f32 to vector<16x1xf32>
      %288 = arith.divf %286, %287 : vector<16x1xf32>
      %289 = vector.broadcast %288 : vector<16x1xf32> to vector<16x128xf32>
      %290 = arith.subf %282, %289 : vector<16x128xf32>
      %291 = arith.mulf %290, %290 : vector<16x128xf32>
      %cst_91 = arith.constant dense<0.000000e+00> : vector<16xf32>
      %292 = vector.multi_reduction <add>, %291, %cst_91 [1] : vector<16x128xf32> to vector<16xf32>
      %293 = vector.shape_cast %292 : vector<16xf32> to vector<16x1xf32>
      %cst_92 = arith.constant 1.280000e+02 : f32
      %294 = vector.broadcast %cst_92 : f32 to vector<16x1xf32>
      %295 = arith.divf %293, %294 : vector<16x1xf32>
      %296 = vector.broadcast %288 : vector<16x1xf32> to vector<16x128xf32>
      %297 = arith.subf %282, %296 : vector<16x128xf32>
      %cst_93 = arith.constant 9.99999974E-6 : f32
      %298 = vector.broadcast %cst_93 : f32 to vector<16x1xf32>
      %299 = arith.addf %295, %298 : vector<16x1xf32>
      %300 = math.rsqrt %299 : vector<16x1xf32>
      %301 = vector.broadcast %300 : vector<16x1xf32> to vector<16x128xf32>
      %302 = arith.mulf %297, %301 : vector<16x128xf32>
      %303 = vector.broadcast %283 : vector<1x128xf32> to vector<16x128xf32>
      %304 = arith.mulf %302, %303 : vector<16x128xf32>
      %305 = vector.broadcast %284 : vector<1x128xf32> to vector<16x128xf32>
      %306 = arith.addf %304, %305 : vector<16x128xf32>
      %c0_94 = arith.constant 0 : index
      %c0_95 = arith.constant 0 : index
      %307 = vector.load %arg18[%c0_94, %c0_95] : memref<16x128xf32, #tpu.memory_space<vmem>>, vector<16x128xf32>
      tpu.vector_store %arg18[%c0_94, %c0_95], %306 {strides = array<i32>} : memref<16x128xf32, #tpu.memory_space<vmem>>, vector<16x128xf32>,
    } else {
    }
    %c0 = arith.constant 0 : index
    %c0_1 = arith.constant 0 : index
    %3 = vector.load %arg18[%c0, %c0_1] : memref<16x128xf32, #tpu.memory_space<vmem>>, vector<16x128xf32>
    %4 = arith.truncf %3 : vector<16x128xf32> to vector<16x128xbf16>
    %c0_2 = arith.constant 0 : index
    %c0_3 = arith.constant 0 : index
    %c0_4 = arith.constant 0 : index
    %c0_5 = arith.constant 0 : index
    %5 = vector.load %arg5[%c0_2, %c0_3, %c0_4, %c0_5] : memref<1x3x128x128xbf16, #tpu.memory_space<vmem>>, vector<1x1x128x128xbf16>
    %6 = vector.shape_cast %5 : vector<1x1x128x128xbf16> to vector<128x128xbf16>
    %cst = arith.constant dense<0.000000e+00> : vector<16x128xf32>
    %7 = tpu.matmul %4, %6, %cst {dimension_numbers = #tpu.dot_dimension_numbers<[1], [0], [0], [1], [0, 0, 1, 1], [], []>} : vector<16x128xbf16>, vector<128x128xbf16>, vector<16x128xf32> -> vector<16x128xf32>
    %c0_6 = arith.constant 0 : index
    %c0_7 = arith.constant 0 : index
    %c0_8 = arith.constant 0 : index
    %c0_9 = arith.constant 0 : index
    %8 = vector.load %arg6[%c0_6, %c0_7, %c0_8, %c0_9] : memref<1x3x1x128xf32, #tpu.memory_space<vmem>>, vector<1x1x1x128xf32>
    %9 = vector.shape_cast %8 : vector<1x1x1x128xf32> to vector<1x128xf32>
    %10 = vector.broadcast %9 : vector<1x128xf32> to vector<16x128xf32>
    %11 = arith.addf %7, %10 : vector<16x128xf32>
    %cst_10 = arith.constant 2.500000e-01 : f32
    %12 = vector.broadcast %cst_10 : f32 to vector<16x128xf32>
    %13 = arith.mulf %11, %12 : vector<16x128xf32>
    %c0_11 = arith.constant 0 : index
    %c1 = arith.constant 1 : index
    %c0_12 = arith.constant 0 : index
    %c0_13 = arith.constant 0 : index
    %14 = vector.load %arg5[%c0_11, %c1, %c0_12, %c0_13] : memref<1x3x128x128xbf16, #tpu.memory_space<vmem>>, vector<1x1x128x128xbf16>
    %15 = vector.shape_cast %14 : vector<1x1x128x128xbf16> to vector<128x128xbf16>
    %cst_14 = arith.constant dense<0.000000e+00> : vector<16x128xf32>
    %16 = tpu.matmul %4, %15, %cst_14 {dimension_numbers = #tpu.dot_dimension_numbers<[1], [0], [0], [1], [0, 0, 1, 1], [], []>} : vector<16x128xbf16>, vector<128x128xbf16>, vector<16x128xf32> -> vector<16x128xf32>
    %c0_15 = arith.constant 0 : index
    %c1_16 = arith.constant 1 : index
    %c0_17 = arith.constant 0 : index
    %c0_18 = arith.constant 0 : index
    %17 = vector.load %arg6[%c0_15, %c1_16, %c0_17, %c0_18] : memref<1x3x1x128xf32, #tpu.memory_space<vmem>>, vector<1x1x1x128xf32>
    %18 = vector.shape_cast %17 : vector<1x1x1x128xf32> to vector<1x128xf32>
    %19 = vector.broadcast %18 : vector<1x128xf32> to vector<16x128xf32>
    %20 = arith.addf %16, %19 : vector<16x128xf32>
    %c0_19 = arith.constant 0 : index
    %c2 = arith.constant 2 : index
    %c0_20 = arith.constant 0 : index
    %c0_21 = arith.constant 0 : index
    %21 = vector.load %arg5[%c0_19, %c2, %c0_20, %c0_21] : memref<1x3x128x128xbf16, #tpu.memory_space<vmem>>, vector<1x1x128x128xbf16>
    %22 = vector.shape_cast %21 : vector<1x1x128x128xbf16> to vector<128x128xbf16>
    %cst_22 = arith.constant dense<0.000000e+00> : vector<16x128xf32>
    %23 = tpu.matmul %4, %22, %cst_22 {dimension_numbers = #tpu.dot_dimension_numbers<[1], [0], [0], [1], [0, 0, 1, 1], [], []>} : vector<16x128xbf16>, vector<128x128xbf16>, vector<16x128xf32> -> vector<16x128xf32>
    %c0_23 = arith.constant 0 : index
    %c2_24 = arith.constant 2 : index
    %c0_25 = arith.constant 0 : index
    %c0_26 = arith.constant 0 : index
    %24 = vector.load %arg6[%c0_23, %c2_24, %c0_25, %c0_26] : memref<1x3x1x128xf32, #tpu.memory_space<vmem>>, vector<1x1x1x128xf32>
    %25 = vector.shape_cast %24 : vector<1x1x1x128xf32> to vector<1x128xf32>
    %26 = vector.broadcast %25 : vector<1x128xf32> to vector<16x128xf32>
    %27 = arith.addf %23, %26 : vector<16x128xf32>
    %28 = vector.extract_strided_slice %13 {offsets = [0, 0], sizes = [8, 16], strides = [1, 1]} : vector<16x128xf32> to vector<8x16xf32>
    %29 = vector.extract_strided_slice %13 {offsets = [0, 16], sizes = [8, 16], strides = [1, 1]} : vector<16x128xf32> to vector<8x16xf32>
    %30 = vector.extract_strided_slice %13 {offsets = [0, 32], sizes = [8, 16], strides = [1, 1]} : vector<16x128xf32> to vector<8x16xf32>
    %31 = vector.extract_strided_slice %13 {offsets = [0, 48], sizes = [8, 16], strides = [1, 1]} : vector<16x128xf32> to vector<8x16xf32>
    %32 = vector.extract_strided_slice %13 {offsets = [0, 64], sizes = [8, 16], strides = [1, 1]} : vector<16x128xf32> to vector<8x16xf32>
    %33 = vector.extract_strided_slice %13 {offsets = [0, 80], sizes = [8, 16], strides = [1, 1]} : vector<16x128xf32> to vector<8x16xf32>
    %34 = vector.extract_strided_slice %13 {offsets = [0, 96], sizes = [8, 16], strides = [1, 1]} : vector<16x128xf32> to vector<8x16xf32>
    %35 = vector.extract_strided_slice %13 {offsets = [0, 112], sizes = [8, 16], strides = [1, 1]} : vector<16x128xf32> to vector<8x16xf32>
    %36 = vector.shape_cast %28 : vector<8x16xf32> to vector<1x8x16xf32>
    %37 = vector.shape_cast %29 : vector<8x16xf32> to vector<1x8x16xf32>
    %38 = vector.shape_cast %30 : vector<8x16xf32> to vector<1x8x16xf32>
    %39 = vector.shape_cast %31 : vector<8x16xf32> to vector<1x8x16xf32>
    %40 = vector.shape_cast %32 : vector<8x16xf32> to vector<1x8x16xf32>
    %41 = vector.shape_cast %33 : vector<8x16xf32> to vector<1x8x16xf32>
    %42 = vector.shape_cast %34 : vector<8x16xf32> to vector<1x8x16xf32>
    %43 = vector.shape_cast %35 : vector<8x16xf32> to vector<1x8x16xf32>
    %44 = tpu.concatenate %36, %37, %38, %39, %40, %41, %42, %43 in 0 : vector<1x8x16xf32>, vector<1x8x16xf32>, vector<1x8x16xf32>, vector<1x8x16xf32>, vector<1x8x16xf32>, vector<1x8x16xf32>, vector<1x8x16xf32>, vector<1x8x16xf32> -> vector<8x8x16xf32>
    %45 = arith.truncf %44 : vector<8x8x16xf32> to vector<8x8x16xbf16>
    %46 = vector.extract_strided_slice %20 {offsets = [0, 0], sizes = [8, 16], strides = [1, 1]} : vector<16x128xf32> to vector<8x16xf32>
    %47 = vector.extract_strided_slice %20 {offsets = [0, 16], sizes = [8, 16], strides = [1, 1]} : vector<16x128xf32> to vector<8x16xf32>
    %48 = vector.extract_strided_slice %20 {offsets = [0, 32], sizes = [8, 16], strides = [1, 1]} : vector<16x128xf32> to vector<8x16xf32>
    %49 = vector.extract_strided_slice %20 {offsets = [0, 48], sizes = [8, 16], strides = [1, 1]} : vector<16x128xf32> to vector<8x16xf32>
    %50 = vector.extract_strided_slice %20 {offsets = [0, 64], sizes = [8, 16], strides = [1, 1]} : vector<16x128xf32> to vector<8x16xf32>
    %51 = vector.extract_strided_slice %20 {offsets = [0, 80], sizes = [8, 16], strides = [1, 1]} : vector<16x128xf32> to vector<8x16xf32>
    %52 = vector.extract_strided_slice %20 {offsets = [0, 96], sizes = [8, 16], strides = [1, 1]} : vector<16x128xf32> to vector<8x16xf32>
    %53 = vector.extract_strided_slice %20 {offsets = [0, 112], sizes = [8, 16], strides = [1, 1]} : vector<16x128xf32> to vector<8x16xf32>
    %54 = vector.shape_cast %46 : vector<8x16xf32> to vector<1x8x16xf32>
    %55 = vector.shape_cast %47 : vector<8x16xf32> to vector<1x8x16xf32>
    %56 = vector.shape_cast %48 : vector<8x16xf32> to vector<1x8x16xf32>
    %57 = vector.shape_cast %49 : vector<8x16xf32> to vector<1x8x16xf32>
    %58 = vector.shape_cast %50 : vector<8x16xf32> to vector<1x8x16xf32>
    %59 = vector.shape_cast %51 : vector<8x16xf32> to vector<1x8x16xf32>
    %60 = vector.shape_cast %52 : vector<8x16xf32> to vector<1x8x16xf32>
    %61 = vector.shape_cast %53 : vector<8x16xf32> to vector<1x8x16xf32>
    %62 = tpu.concatenate %54, %55, %56, %57, %58, %59, %60, %61 in 0 : vector<1x8x16xf32>, vector<1x8x16xf32>, vector<1x8x16xf32>, vector<1x8x16xf32>, vector<1x8x16xf32>, vector<1x8x16xf32>, vector<1x8x16xf32>, vector<1x8x16xf32> -> vector<8x8x16xf32>
    %63 = arith.truncf %62 : vector<8x8x16xf32> to vector<8x8x16xbf16>
    %64 = vector.extract_strided_slice %27 {offsets = [0, 0], sizes = [8, 16], strides = [1, 1]} : vector<16x128xf32> to vector<8x16xf32>
    %65 = vector.extract_strided_slice %27 {offsets = [0, 16], sizes = [8, 16], strides = [1, 1]} : vector<16x128xf32> to vector<8x16xf32>
    %66 = vector.extract_strided_slice %27 {offsets = [0, 32], sizes = [8, 16], strides = [1, 1]} : vector<16x128xf32> to vector<8x16xf32>
    %67 = vector.extract_strided_slice %27 {offsets = [0, 48], sizes = [8, 16], strides = [1, 1]} : vector<16x128xf32> to vector<8x16xf32>
    %68 = vector.extract_strided_slice %27 {offsets = [0, 64], sizes = [8, 16], strides = [1, 1]} : vector<16x128xf32> to vector<8x16xf32>
    %69 = vector.extract_strided_slice %27 {offsets = [0, 80], sizes = [8, 16], strides = [1, 1]} : vector<16x128xf32> to vector<8x16xf32>
    %70 = vector.extract_strided_slice %27 {offsets = [0, 96], sizes = [8, 16], strides = [1, 1]} : vector<16x128xf32> to vector<8x16xf32>
    %71 = vector.extract_strided_slice %27 {offsets = [0, 112], sizes = [8, 16], strides = [1, 1]} : vector<16x128xf32> to vector<8x16xf32>
    %72 = vector.shape_cast %64 : vector<8x16xf32> to vector<1x8x16xf32>
    %73 = vector.shape_cast %65 : vector<8x16xf32> to vector<1x8x16xf32>
    %74 = vector.shape_cast %66 : vector<8x16xf32> to vector<1x8x16xf32>
    %75 = vector.shape_cast %67 : vector<8x16xf32> to vector<1x8x16xf32>
    %76 = vector.shape_cast %68 : vector<8x16xf32> to vector<1x8x16xf32>
    %77 = vector.shape_cast %69 : vector<8x16xf32> to vector<1x8x16xf32>
    %78 = vector.shape_cast %70 : vector<8x16xf32> to vector<1x8x16xf32>
    %79 = vector.shape_cast %71 : vector<8x16xf32> to vector<1x8x16xf32>
    %80 = tpu.concatenate %72, %73, %74, %75, %76, %77, %78, %79 in 0 : vector<1x8x16xf32>, vector<1x8x16xf32>, vector<1x8x16xf32>, vector<1x8x16xf32>, vector<1x8x16xf32>, vector<1x8x16xf32>, vector<1x8x16xf32>, vector<1x8x16xf32> -> vector<8x8x16xf32>
    %81 = arith.truncf %80 : vector<8x8x16xf32> to vector<8x8x16xbf16>
    "tpu.trace_start"() <{level = 10 : i32, message = "htd,hsd->hts"}> : () -> ()
    %cst_27 = arith.constant dense<0.000000e+00> : vector<8x8x8xf32>
    %82 = tpu.matmul %45, %63, %cst_27 {dimension_numbers = #tpu.dot_dimension_numbers<[2], [2], [1], [1], [0, 0, 0, 1, 1, 1], [0], [0]>} : vector<8x8x16xbf16>, vector<8x8x16xbf16>, vector<8x8x8xf32> -> vector<8x8x8xf32>
    "tpu.trace_stop"() : () -> ()
    %cst_28 = arith.constant dense<0xFF800000> : vector<8x8xf32>
    %83 = vector.multi_reduction <maximumf>, %82, %cst_28 [2] : vector<8x8x8xf32> to vector<8x8xf32>
    %84 = vector.shape_cast %83 : vector<8x8xf32> to vector<8x8x1xf32>
    %85 = vector.broadcast %84 : vector<8x8x1xf32> to vector<8x8x8xf32>
    %86 = arith.subf %82, %85 : vector<8x8x8xf32>
    %87 = math.exp %86 : vector<8x8x8xf32>
    %cst_29 = arith.constant dense<0.000000e+00> : vector<8x8xf32>
    %88 = vector.multi_reduction <add>, %87, %cst_29 [2] : vector<8x8x8xf32> to vector<8x8xf32>
    %89 = vector.shape_cast %88 : vector<8x8xf32> to vector<8x8x1xf32>
    %90 = tpu.reciprocal %89 {approx = true} : vector<8x8x1xf32> -> vector<8x8x1xf32>
    %91 = vector.broadcast %90 : vector<8x8x1xf32> to vector<8x8x8xf32>
    %92 = arith.mulf %87, %91 : vector<8x8x8xf32>
    %93 = arith.truncf %92 : vector<8x8x8xf32> to vector<8x8x8xbf16>
    "tpu.trace_start"() <{level = 10 : i32, message = "hts,hsd->htd"}> : () -> ()
    %cst_30 = arith.constant dense<0.000000e+00> : vector<8x8x16xf32>
    %94 = tpu.matmul %93, %81, %cst_30 {dimension_numbers = #tpu.dot_dimension_numbers<[2], [1], [1], [2], [0, 0, 0, 1, 1, 2], [0], [0]>} : vector<8x8x8xbf16>, vector<8x8x16xbf16>, vector<8x8x16xf32> -> vector<8x8x16xf32>
    "tpu.trace_stop"() : () -> ()
    %95 = vector.extract_strided_slice %94 {offsets = [0, 0, 0], sizes = [1, 8, 16], strides = [1, 1, 1]} : vector<8x8x16xf32> to vector<1x8x16xf32>
    %96 = vector.shape_cast %95 : vector<1x8x16xf32> to vector<8x16xf32>
    %97 = vector.extract_strided_slice %94 {offsets = [1, 0, 0], sizes = [1, 8, 16], strides = [1, 1, 1]} : vector<8x8x16xf32> to vector<1x8x16xf32>
    %98 = vector.shape_cast %97 : vector<1x8x16xf32> to vector<8x16xf32>
    %99 = vector.extract_strided_slice %94 {offsets = [2, 0, 0], sizes = [1, 8, 16], strides = [1, 1, 1]} : vector<8x8x16xf32> to vector<1x8x16xf32>
    %100 = vector.shape_cast %99 : vector<1x8x16xf32> to vector<8x16xf32>
    %101 = vector.extract_strided_slice %94 {offsets = [3, 0, 0], sizes = [1, 8, 16], strides = [1, 1, 1]} : vector<8x8x16xf32> to vector<1x8x16xf32>
    %102 = vector.shape_cast %101 : vector<1x8x16xf32> to vector<8x16xf32>
    %103 = vector.extract_strided_slice %94 {offsets = [4, 0, 0], sizes = [1, 8, 16], strides = [1, 1, 1]} : vector<8x8x16xf32> to vector<1x8x16xf32>
    %104 = vector.shape_cast %103 : vector<1x8x16xf32> to vector<8x16xf32>
    %105 = vector.extract_strided_slice %94 {offsets = [5, 0, 0], sizes = [1, 8, 16], strides = [1, 1, 1]} : vector<8x8x16xf32> to vector<1x8x16xf32>
    %106 = vector.shape_cast %105 : vector<1x8x16xf32> to vector<8x16xf32>
    %107 = vector.extract_strided_slice %94 {offsets = [6, 0, 0], sizes = [1, 8, 16], strides = [1, 1, 1]} : vector<8x8x16xf32> to vector<1x8x16xf32>
    %108 = vector.shape_cast %107 : vector<1x8x16xf32> to vector<8x16xf32>
    %109 = vector.extract_strided_slice %94 {offsets = [7, 0, 0], sizes = [1, 8, 16], strides = [1, 1, 1]} : vector<8x8x16xf32> to vector<1x8x16xf32>
    %110 = vector.shape_cast %109 : vector<1x8x16xf32> to vector<8x16xf32>
    %111 = tpu.concatenate %96, %98, %100, %102, %104, %106, %108, %110 in 1 : vector<8x16xf32>, vector<8x16xf32>, vector<8x16xf32>, vector<8x16xf32>, vector<8x16xf32>, vector<8x16xf32>, vector<8x16xf32>, vector<8x16xf32> -> vector<8x128xf32>
    %112 = vector.extract_strided_slice %13 {offsets = [8, 0], sizes = [8, 16], strides = [1, 1]} : vector<16x128xf32> to vector<8x16xf32>
    %113 = vector.extract_strided_slice %13 {offsets = [8, 16], sizes = [8, 16], strides = [1, 1]} : vector<16x128xf32> to vector<8x16xf32>
    %114 = vector.extract_strided_slice %13 {offsets = [8, 32], sizes = [8, 16], strides = [1, 1]} : vector<16x128xf32> to vector<8x16xf32>
    %115 = vector.extract_strided_slice %13 {offsets = [8, 48], sizes = [8, 16], strides = [1, 1]} : vector<16x128xf32> to vector<8x16xf32>
    %116 = vector.extract_strided_slice %13 {offsets = [8, 64], sizes = [8, 16], strides = [1, 1]} : vector<16x128xf32> to vector<8x16xf32>
    %117 = vector.extract_strided_slice %13 {offsets = [8, 80], sizes = [8, 16], strides = [1, 1]} : vector<16x128xf32> to vector<8x16xf32>
    %118 = vector.extract_strided_slice %13 {offsets = [8, 96], sizes = [8, 16], strides = [1, 1]} : vector<16x128xf32> to vector<8x16xf32>
    %119 = vector.extract_strided_slice %13 {offsets = [8, 112], sizes = [8, 16], strides = [1, 1]} : vector<16x128xf32> to vector<8x16xf32>
    %120 = vector.shape_cast %112 : vector<8x16xf32> to vector<1x8x16xf32>
    %121 = vector.shape_cast %113 : vector<8x16xf32> to vector<1x8x16xf32>
    %122 = vector.shape_cast %114 : vector<8x16xf32> to vector<1x8x16xf32>
    %123 = vector.shape_cast %115 : vector<8x16xf32> to vector<1x8x16xf32>
    %124 = vector.shape_cast %116 : vector<8x16xf32> to vector<1x8x16xf32>
    %125 = vector.shape_cast %117 : vector<8x16xf32> to vector<1x8x16xf32>
    %126 = vector.shape_cast %118 : vector<8x16xf32> to vector<1x8x16xf32>
    %127 = vector.shape_cast %119 : vector<8x16xf32> to vector<1x8x16xf32>
    %128 = tpu.concatenate %120, %121, %122, %123, %124, %125, %126, %127 in 0 : vector<1x8x16xf32>, vector<1x8x16xf32>, vector<1x8x16xf32>, vector<1x8x16xf32>, vector<1x8x16xf32>, vector<1x8x16xf32>, vector<1x8x16xf32>, vector<1x8x16xf32> -> vector<8x8x16xf32>
    %129 = arith.truncf %128 : vector<8x8x16xf32> to vector<8x8x16xbf16>
    %130 = vector.extract_strided_slice %20 {offsets = [8, 0], sizes = [8, 16], strides = [1, 1]} : vector<16x128xf32> to vector<8x16xf32>
    %131 = vector.extract_strided_slice %20 {offsets = [8, 16], sizes = [8, 16], strides = [1, 1]} : vector<16x128xf32> to vector<8x16xf32>
    %132 = vector.extract_strided_slice %20 {offsets = [8, 32], sizes = [8, 16], strides = [1, 1]} : vector<16x128xf32> to vector<8x16xf32>
    %133 = vector.extract_strided_slice %20 {offsets = [8, 48], sizes = [8, 16], strides = [1, 1]} : vector<16x128xf32> to vector<8x16xf32>
    %134 = vector.extract_strided_slice %20 {offsets = [8, 64], sizes = [8, 16], strides = [1, 1]} : vector<16x128xf32> to vector<8x16xf32>
    %135 = vector.extract_strided_slice %20 {offsets = [8, 80], sizes = [8, 16], strides = [1, 1]} : vector<16x128xf32> to vector<8x16xf32>
    %136 = vector.extract_strided_slice %20 {offsets = [8, 96], sizes = [8, 16], strides = [1, 1]} : vector<16x128xf32> to vector<8x16xf32>
    %137 = vector.extract_strided_slice %20 {offsets = [8, 112], sizes = [8, 16], strides = [1, 1]} : vector<16x128xf32> to vector<8x16xf32>
    %138 = vector.shape_cast %130 : vector<8x16xf32> to vector<1x8x16xf32>
    %139 = vector.shape_cast %131 : vector<8x16xf32> to vector<1x8x16xf32>
    %140 = vector.shape_cast %132 : vector<8x16xf32> to vector<1x8x16xf32>
    %141 = vector.shape_cast %133 : vector<8x16xf32> to vector<1x8x16xf32>
    %142 = vector.shape_cast %134 : vector<8x16xf32> to vector<1x8x16xf32>
    %143 = vector.shape_cast %135 : vector<8x16xf32> to vector<1x8x16xf32>
    %144 = vector.shape_cast %136 : vector<8x16xf32> to vector<1x8x16xf32>
    %145 = vector.shape_cast %137 : vector<8x16xf32> to vector<1x8x16xf32>
    %146 = tpu.concatenate %138, %139, %140, %141, %142, %143, %144, %145 in 0 : vector<1x8x16xf32>, vector<1x8x16xf32>, vector<1x8x16xf32>, vector<1x8x16xf32>, vector<1x8x16xf32>, vector<1x8x16xf32>, vector<1x8x16xf32>, vector<1x8x16xf32> -> vector<8x8x16xf32>
    %147 = arith.truncf %146 : vector<8x8x16xf32> to vector<8x8x16xbf16>
    %148 = vector.extract_strided_slice %27 {offsets = [8, 0], sizes = [8, 16], strides = [1, 1]} : vector<16x128xf32> to vector<8x16xf32>
    %149 = vector.extract_strided_slice %27 {offsets = [8, 16], sizes = [8, 16], strides = [1, 1]} : vector<16x128xf32> to vector<8x16xf32>
    %150 = vector.extract_strided_slice %27 {offsets = [8, 32], sizes = [8, 16], strides = [1, 1]} : vector<16x128xf32> to vector<8x16xf32>
    %151 = vector.extract_strided_slice %27 {offsets = [8, 48], sizes = [8, 16], strides = [1, 1]} : vector<16x128xf32> to vector<8x16xf32>
    %152 = vector.extract_strided_slice %27 {offsets = [8, 64], sizes = [8, 16], strides = [1, 1]} : vector<16x128xf32> to vector<8x16xf32>
    %153 = vector.extract_strided_slice %27 {offsets = [8, 80], sizes = [8, 16], strides = [1, 1]} : vector<16x128xf32> to vector<8x16xf32>
    %154 = vector.extract_strided_slice %27 {offsets = [8, 96], sizes = [8, 16], strides = [1, 1]} : vector<16x128xf32> to vector<8x16xf32>
    %155 = vector.extract_strided_slice %27 {offsets = [8, 112], sizes = [8, 16], strides = [1, 1]} : vector<16x128xf32> to vector<8x16xf32>
    %156 = vector.shape_cast %148 : vector<8x16xf32> to vector<1x8x16xf32>
    %157 = vector.shape_cast %149 : vector<8x16xf32> to vector<1x8x16xf32>
    %158 = vector.shape_cast %150 : vector<8x16xf32> to vector<1x8x16xf32>
    %159 = vector.shape_cast %151 : vector<8x16xf32> to vector<1x8x16xf32>
    %160 = vector.shape_cast %152 : vector<8x16xf32> to vector<1x8x16xf32>
    %161 = vector.shape_cast %153 : vector<8x16xf32> to vector<1x8x16xf32>
    %162 = vector.shape_cast %154 : vector<8x16xf32> to vector<1x8x16xf32>
    %163 = vector.shape_cast %155 : vector<8x16xf32> to vector<1x8x16xf32>
    %164 = tpu.concatenate %156, %157, %158, %159, %160, %161, %162, %163 in 0 : vector<1x8x16xf32>, vector<1x8x16xf32>, vector<1x8x16xf32>, vector<1x8x16xf32>, vector<1x8x16xf32>, vector<1x8x16xf32>, vector<1x8x16xf32>, vector<1x8x16xf32> -> vector<8x8x16xf32>
    %165 = arith.truncf %164 : vector<8x8x16xf32> to vector<8x8x16xbf16>
    "tpu.trace_start"() <{level = 10 : i32, message = "htd,hsd->hts"}> : () -> ()
    %cst_31 = arith.constant dense<0.000000e+00> : vector<8x8x8xf32>
    %166 = tpu.matmul %129, %147, %cst_31 {dimension_numbers = #tpu.dot_dimension_numbers<[2], [2], [1], [1], [0, 0, 0, 1, 1, 1], [0], [0]>} : vector<8x8x16xbf16>, vector<8x8x16xbf16>, vector<8x8x8xf32> -> vector<8x8x8xf32>
    "tpu.trace_stop"() : () -> ()
    %cst_32 = arith.constant dense<0xFF800000> : vector<8x8xf32>
    %167 = vector.multi_reduction <maximumf>, %166, %cst_32 [2] : vector<8x8x8xf32> to vector<8x8xf32>
    %168 = vector.shape_cast %167 : vector<8x8xf32> to vector<8x8x1xf32>
    %169 = vector.broadcast %168 : vector<8x8x1xf32> to vector<8x8x8xf32>
    %170 = arith.subf %166, %169 : vector<8x8x8xf32>
    %171 = math.exp %170 : vector<8x8x8xf32>
    %cst_33 = arith.constant dense<0.000000e+00> : vector<8x8xf32>
    %172 = vector.multi_reduction <add>, %171, %cst_33 [2] : vector<8x8x8xf32> to vector<8x8xf32>
    %173 = vector.shape_cast %172 : vector<8x8xf32> to vector<8x8x1xf32>
    %174 = tpu.reciprocal %173 {approx = true} : vector<8x8x1xf32> -> vector<8x8x1xf32>
    %175 = vector.broadcast %174 : vector<8x8x1xf32> to vector<8x8x8xf32>
    %176 = arith.mulf %171, %175 : vector<8x8x8xf32>
    %177 = arith.truncf %176 : vector<8x8x8xf32> to vector<8x8x8xbf16>
    "tpu.trace_start"() <{level = 10 : i32, message = "hts,hsd->htd"}> : () -> ()
    %cst_34 = arith.constant dense<0.000000e+00> : vector<8x8x16xf32>
    %178 = tpu.matmul %177, %165, %cst_34 {dimension_numbers = #tpu.dot_dimension_numbers<[2], [1], [1], [2], [0, 0, 0, 1, 1, 2], [0], [0]>} : vector<8x8x8xbf16>, vector<8x8x16xbf16>, vector<8x8x16xf32> -> vector<8x8x16xf32>
    "tpu.trace_stop"() : () -> ()
    %179 = vector.extract_strided_slice %178 {offsets = [0, 0, 0], sizes = [1, 8, 16], strides = [1, 1, 1]} : vector<8x8x16xf32> to vector<1x8x16xf32>
    %180 = vector.shape_cast %179 : vector<1x8x16xf32> to vector<8x16xf32>
    %181 = vector.extract_strided_slice %178 {offsets = [1, 0, 0], sizes = [1, 8, 16], strides = [1, 1, 1]} : vector<8x8x16xf32> to vector<1x8x16xf32>
    %182 = vector.shape_cast %181 : vector<1x8x16xf32> to vector<8x16xf32>
    %183 = vector.extract_strided_slice %178 {offsets = [2, 0, 0], sizes = [1, 8, 16], strides = [1, 1, 1]} : vector<8x8x16xf32> to vector<1x8x16xf32>
    %184 = vector.shape_cast %183 : vector<1x8x16xf32> to vector<8x16xf32>
    %185 = vector.extract_strided_slice %178 {offsets = [3, 0, 0], sizes = [1, 8, 16], strides = [1, 1, 1]} : vector<8x8x16xf32> to vector<1x8x16xf32>
    %186 = vector.shape_cast %185 : vector<1x8x16xf32> to vector<8x16xf32>
    %187 = vector.extract_strided_slice %178 {offsets = [4, 0, 0], sizes = [1, 8, 16], strides = [1, 1, 1]} : vector<8x8x16xf32> to vector<1x8x16xf32>
    %188 = vector.shape_cast %187 : vector<1x8x16xf32> to vector<8x16xf32>
    %189 = vector.extract_strided_slice %178 {offsets = [5, 0, 0], sizes = [1, 8, 16], strides = [1, 1, 1]} : vector<8x8x16xf32> to vector<1x8x16xf32>
    %190 = vector.shape_cast %189 : vector<1x8x16xf32> to vector<8x16xf32>
    %191 = vector.extract_strided_slice %178 {offsets = [6, 0, 0], sizes = [1, 8, 16], strides = [1, 1, 1]} : vector<8x8x16xf32> to vector<1x8x16xf32>
    %192 = vector.shape_cast %191 : vector<1x8x16xf32> to vector<8x16xf32>
    %193 = vector.extract_strided_slice %178 {offsets = [7, 0, 0], sizes = [1, 8, 16], strides = [1, 1, 1]} : vector<8x8x16xf32> to vector<1x8x16xf32>
    %194 = vector.shape_cast %193 : vector<1x8x16xf32> to vector<8x16xf32>
    %195 = tpu.concatenate %180, %182, %184, %186, %188, %190, %192, %194 in 1 : vector<8x16xf32>, vector<8x16xf32>, vector<8x16xf32>, vector<8x16xf32>, vector<8x16xf32>, vector<8x16xf32>, vector<8x16xf32>, vector<8x16xf32> -> vector<8x128xf32>
    %196 = tpu.concatenate %111, %195 in 0 : vector<8x128xf32>, vector<8x128xf32> -> vector<16x128xf32>
    %197 = arith.truncf %196 : vector<16x128xf32> to vector<16x128xbf16>
    %c0_35 = arith.constant 0 : index
    %c0_36 = arith.constant 0 : index
    %c0_37 = arith.constant 0 : index
    %198 = vector.load %arg7[%c0_35, %c0_36, %c0_37] : memref<1x128x128xbf16, #tpu.memory_space<vmem>>, vector<1x128x128xbf16>
    %199 = vector.shape_cast %198 : vector<1x128x128xbf16> to vector<128x128xbf16>
    %cst_38 = arith.constant dense<0.000000e+00> : vector<16x128xf32>
    %200 = tpu.matmul %197, %199, %cst_38 {dimension_numbers = #tpu.dot_dimension_numbers<[1], [0], [0], [1], [0, 0, 1, 1], [], []>} : vector<16x128xbf16>, vector<128x128xbf16>, vector<16x128xf32> -> vector<16x128xf32>
    %c0_39 = arith.constant 0 : index
    %c0_40 = arith.constant 0 : index
    %c0_41 = arith.constant 0 : index
    %201 = vector.load %arg8[%c0_39, %c0_40, %c0_41] : memref<1x1x128xf32, #tpu.memory_space<vmem>>, vector<1x1x128xf32>
    %202 = vector.shape_cast %201 : vector<1x1x128xf32> to vector<1x128xf32>
    %203 = vector.broadcast %202 : vector<1x128xf32> to vector<16x128xf32>
    %204 = arith.addf %200, %203 : vector<16x128xf32>
    %205 = arith.addf %3, %204 : vector<16x128xf32>
    %c0_42 = arith.constant 0 : index
    %c0_43 = arith.constant 0 : index
    %c0_44 = arith.constant 0 : index
    %206 = vector.load %arg9[%c0_42, %c0_43, %c0_44] : memref<1x1x128xf32, #tpu.memory_space<vmem>>, vector<1x1x128xf32>
    %207 = vector.shape_cast %206 : vector<1x1x128xf32> to vector<1x128xf32>
    %c0_45 = arith.constant 0 : index
    %c0_46 = arith.constant 0 : index
    %c0_47 = arith.constant 0 : index
    %208 = vector.load %arg10[%c0_45, %c0_46, %c0_47] : memref<1x1x128xf32, #tpu.memory_space<vmem>>, vector<1x1x128xf32>
    %209 = vector.shape_cast %208 : vector<1x1x128xf32> to vector<1x128xf32>
    %cst_48 = arith.constant dense<0.000000e+00> : vector<16xf32>
    %210 = vector.multi_reduction <add>, %205, %cst_48 [1] : vector<16x128xf32> to vector<16xf32>
    %211 = vector.shape_cast %210 : vector<16xf32> to vector<16x1xf32>
    %cst_49 = arith.constant 1.280000e+02 : f32
    %212 = vector.broadcast %cst_49 : f32 to vector<16x1xf32>
    %213 = arith.divf %211, %212 : vector<16x1xf32>
    %214 = vector.broadcast %213 : vector<16x1xf32> to vector<16x128xf32>
    %215 = arith.subf %205, %214 : vector<16x128xf32>
    %216 = arith.mulf %215, %215 : vector<16x128xf32>
    %cst_50 = arith.constant dense<0.000000e+00> : vector<16xf32>
    %217 = vector.multi_reduction <add>, %216, %cst_50 [1] : vector<16x128xf32> to vector<16xf32>
    %218 = vector.shape_cast %217 : vector<16xf32> to vector<16x1xf32>
    %cst_51 = arith.constant 1.280000e+02 : f32
    %219 = vector.broadcast %cst_51 : f32 to vector<16x1xf32>
    %220 = arith.divf %218, %219 : vector<16x1xf32>
    %221 = vector.broadcast %213 : vector<16x1xf32> to vector<16x128xf32>
    %222 = arith.subf %205, %221 : vector<16x128xf32>
    %cst_52 = arith.constant 9.99999974E-6 : f32
    %223 = vector.broadcast %cst_52 : f32 to vector<16x1xf32>
    %224 = arith.addf %220, %223 : vector<16x1xf32>
    %225 = math.rsqrt %224 : vector<16x1xf32>
    %226 = vector.broadcast %225 : vector<16x1xf32> to vector<16x128xf32>
    %227 = arith.mulf %222, %226 : vector<16x128xf32>
    %228 = vector.broadcast %207 : vector<1x128xf32> to vector<16x128xf32>
    %229 = arith.mulf %227, %228 : vector<16x128xf32>
    %230 = vector.broadcast %209 : vector<1x128xf32> to vector<16x128xf32>
    %231 = arith.addf %229, %230 : vector<16x128xf32>
    %232 = arith.truncf %231 : vector<16x128xf32> to vector<16x128xbf16>
    %c0_53 = arith.constant 0 : index
    %c0_54 = arith.constant 0 : index
    %c0_55 = arith.constant 0 : index
    %233 = vector.load %arg11[%c0_53, %c0_54, %c0_55] : memref<1x128x256xbf16, #tpu.memory_space<vmem>>, vector<1x128x256xbf16>
    %234 = vector.shape_cast %233 : vector<1x128x256xbf16> to vector<128x256xbf16>
    %cst_56 = arith.constant dense<0.000000e+00> : vector<16x256xf32>
    %235 = tpu.matmul %232, %234, %cst_56 {dimension_numbers = #tpu.dot_dimension_numbers<[1], [0], [0], [1], [0, 0, 1, 1], [], []>} : vector<16x128xbf16>, vector<128x256xbf16>, vector<16x256xf32> -> vector<16x256xf32>
    %c0_57 = arith.constant 0 : index
    %c0_58 = arith.constant 0 : index
    %c0_59 = arith.constant 0 : index
    %236 = vector.load %arg12[%c0_57, %c0_58, %c0_59] : memref<1x1x256xf32, #tpu.memory_space<vmem>>, vector<1x1x256xf32>
    %237 = vector.shape_cast %236 : vector<1x1x256xf32> to vector<1x256xf32>
    %238 = vector.broadcast %237 : vector<1x256xf32> to vector<16x256xf32>
    %239 = arith.addf %235, %238 : vector<16x256xf32>
    %cst_60 = arith.constant 0.000000e+00 : f32
    %240 = vector.broadcast %cst_60 : f32 to vector<16x256xf32>
    %241 = arith.maximumf %239, %240 : vector<16x256xf32>
    %242 = arith.truncf %241 : vector<16x256xf32> to vector<16x256xbf16>
    %c0_61 = arith.constant 0 : index
    %c0_62 = arith.constant 0 : index
    %c0_63 = arith.constant 0 : index
    %243 = vector.load %arg13[%c0_61, %c0_62, %c0_63] : memref<1x256x128xbf16, #tpu.memory_space<vmem>>, vector<1x256x128xbf16>
    %244 = vector.shape_cast %243 : vector<1x256x128xbf16> to vector<256x128xbf16>
    %cst_64 = arith.constant dense<0.000000e+00> : vector<16x128xf32>
    %245 = tpu.matmul %242, %244, %cst_64 {dimension_numbers = #tpu.dot_dimension_numbers<[1], [0], [0], [1], [0, 0, 1, 1], [], []>} : vector<16x256xbf16>, vector<256x128xbf16>, vector<16x128xf32> -> vector<16x128xf32>
    %c0_65 = arith.constant 0 : index
    %c0_66 = arith.constant 0 : index
    %c0_67 = arith.constant 0 : index
    %246 = vector.load %arg14[%c0_65, %c0_66, %c0_67] : memref<1x1x128xf32, #tpu.memory_space<vmem>>, vector<1x1x128xf32>
    %247 = vector.shape_cast %246 : vector<1x1x128xf32> to vector<1x128xf32>
    %248 = vector.broadcast %247 : vector<1x128xf32> to vector<16x128xf32>
    %249 = arith.addf %245, %248 : vector<16x128xf32>
    %250 = arith.addf %231, %249 : vector<16x128xf32>
    %c0_68 = arith.constant 0 : index
    %c0_69 = arith.constant 0 : index
    %c0_70 = arith.constant 0 : index
    %251 = vector.load %arg15[%c0_68, %c0_69, %c0_70] : memref<1x1x128xf32, #tpu.memory_space<vmem>>, vector<1x1x128xf32>
    %252 = vector.shape_cast %251 : vector<1x1x128xf32> to vector<1x128xf32>
    %c0_71 = arith.constant 0 : index
    %c0_72 = arith.constant 0 : index
    %c0_73 = arith.constant 0 : index
    %253 = vector.load %arg16[%c0_71, %c0_72, %c0_73] : memref<1x1x128xf32, #tpu.memory_space<vmem>>, vector<1x1x128xf32>
    %254 = vector.shape_cast %253 : vector<1x1x128xf32> to vector<1x128xf32>
    %cst_74 = arith.constant dense<0.000000e+00> : vector<16xf32>
    %255 = vector.multi_reduction <add>, %250, %cst_74 [1] : vector<16x128xf32> to vector<16xf32>
    %256 = vector.shape_cast %255 : vector<16xf32> to vector<16x1xf32>
    %cst_75 = arith.constant 1.280000e+02 : f32
    %257 = vector.broadcast %cst_75 : f32 to vector<16x1xf32>
    %258 = arith.divf %256, %257 : vector<16x1xf32>
    %259 = vector.broadcast %258 : vector<16x1xf32> to vector<16x128xf32>
    %260 = arith.subf %250, %259 : vector<16x128xf32>
    %261 = arith.mulf %260, %260 : vector<16x128xf32>
    %cst_76 = arith.constant dense<0.000000e+00> : vector<16xf32>
    %262 = vector.multi_reduction <add>, %261, %cst_76 [1] : vector<16x128xf32> to vector<16xf32>
    %263 = vector.shape_cast %262 : vector<16xf32> to vector<16x1xf32>
    %cst_77 = arith.constant 1.280000e+02 : f32
    %264 = vector.broadcast %cst_77 : f32 to vector<16x1xf32>
    %265 = arith.divf %263, %264 : vector<16x1xf32>
    %266 = vector.broadcast %258 : vector<16x1xf32> to vector<16x128xf32>
    %267 = arith.subf %250, %266 : vector<16x128xf32>
    %cst_78 = arith.constant 9.99999974E-6 : f32
    %268 = vector.broadcast %cst_78 : f32 to vector<16x1xf32>
    %269 = arith.addf %265, %268 : vector<16x1xf32>
    %270 = math.rsqrt %269 : vector<16x1xf32>
    %271 = vector.broadcast %270 : vector<16x1xf32> to vector<16x128xf32>
    %272 = arith.mulf %267, %271 : vector<16x128xf32>
    %273 = vector.broadcast %252 : vector<1x128xf32> to vector<16x128xf32>
    %274 = arith.mulf %272, %273 : vector<16x128xf32>
    %275 = vector.broadcast %254 : vector<1x128xf32> to vector<16x128xf32>
    %276 = arith.addf %274, %275 : vector<16x128xf32>
    %c0_79 = arith.constant 0 : index
    %c0_80 = arith.constant 0 : index
    %277 = vector.load %arg18[%c0_79, %c0_80] : memref<16x128xf32, #tpu.memory_space<vmem>>, vector<16x128xf32>
    tpu.vector_store %arg18[%c0_79, %c0_80], %276 {strides = array<i32>} : memref<16x128xf32, #tpu.memory_space<vmem>>, vector<16x128xf32>,
    %c1_i32 = arith.constant 1 : i32
    %278 = arith.cmpi eq, %arg1, %c1_i32 : i32
    %279 = arith.extui %278 : i1 to i32
    %c0_i32_81 = arith.constant 0 : i32
    %280 = arith.cmpi ne, %279, %c0_i32_81 : i32
    scf.if %280 {
      %281 = vector.shape_cast %276 : vector<16x128xf32> to vector<2x8x128xf32>
      %c0_82 = arith.constant 0 : index
      %c0_83 = arith.constant 0 : index
      %c0_84 = arith.constant 0 : index
      %282 = vector.load %arg17[%c0_82, %c0_83, %c0_84] : memref<2x8x128xf32, #tpu.memory_space<vmem>>, vector<2x8x128xf32>
      tpu.vector_store %arg17[%c0_82, %c0_83, %c0_84], %281 {strides = array<i32>} : memref<2x8x128xf32, #tpu.memory_space<vmem>>, vector<2x8x128xf32>,
    } else {
    }
    return
  }
  func.func @transform_0(%arg0: i32, %arg1: i32) -> (i32, i32, i32) {
    %c0_i32 = arith.constant 0 : i32
    %c0_i32_0 = arith.constant 0 : i32
    %c0_i32_1 = arith.constant 0 : i32
    return %arg0, %c0_i32, %c0_i32_0 : i32, i32, i32
  }
  func.func @transform_1(%arg0: i32, %arg1: i32) -> (i32, i32) {
    %c0_i32 = arith.constant 0 : i32
    %c0_i32_0 = arith.constant 0 : i32
    %c0_i32_1 = arith.constant 0 : i32
    return %c0_i32, %c0_i32_0 : i32, i32
  }
  func.func @transform_2(%arg0: i32, %arg1: i32) -> (i32, i32) {
    %c0_i32 = arith.constant 0 : i32
    %c0_i32_0 = arith.constant 0 : i32
    %c0_i32_1 = arith.constant 0 : i32
    return %c0_i32, %c0_i32_0 : i32, i32
  }
  func.func @transform_3(%arg0: i32, %arg1: i32) -> (i32, i32, i32, i32) {
    %c0_i32 = arith.constant 0 : i32
    %c0_i32_0 = arith.constant 0 : i32
    %c0_i32_1 = arith.constant 0 : i32
    %c0_i32_2 = arith.constant 0 : i32
    return %arg1, %c0_i32, %c0_i32_0, %c0_i32_1 : i32, i32, i32, i32
  }
  func.func @transform_4(%arg0: i32, %arg1: i32) -> (i32, i32, i32, i32) {
    %c0_i32 = arith.constant 0 : i32
    %c0_i32_0 = arith.constant 0 : i32
    %c0_i32_1 = arith.constant 0 : i32
    %c0_i32_2 = arith.constant 0 : i32
    return %arg1, %c0_i32, %c0_i32_0, %c0_i32_1 : i32, i32, i32, i32
  }
  func.func @transform_5(%arg0: i32, %arg1: i32) -> (i32, i32, i32) {
    %c0_i32 = arith.constant 0 : i32
    %c0_i32_0 = arith.constant 0 : i32
    %c0_i32_1 = arith.constant 0 : i32
    return %arg1, %c0_i32, %c0_i32_0 : i32, i32, i32
  }
  func.func @transform_6(%arg0: i32, %arg1: i32) -> (i32, i32, i32) {
    %c0_i32 = arith.constant 0 : i32
    %c0_i32_0 = arith.constant 0 : i32
    %c0_i32_1 = arith.constant 0 : i32
    return %arg1, %c0_i32, %c0_i32_0 : i32, i32, i32
  }
  func.func @transform_7(%arg0: i32, %arg1: i32) -> (i32, i32, i32) {
    %c0_i32 = arith.constant 0 : i32
    %c0_i32_0 = arith.constant 0 : i32
    %c0_i32_1 = arith.constant 0 : i32
    return %arg1, %c0_i32, %c0_i32_0 : i32, i32, i32
  }
  func.func @transform_8(%arg0: i32, %arg1: i32) -> (i32, i32, i32) {
    %c0_i32 = arith.constant 0 : i32
    %c0_i32_0 = arith.constant 0 : i32
    %c0_i32_1 = arith.constant 0 : i32
    return %arg1, %c0_i32, %c0_i32_0 : i32, i32, i32
  }
  func.func @transform_9(%arg0: i32, %arg1: i32) -> (i32, i32, i32) {
    %c0_i32 = arith.constant 0 : i32
    %c0_i32_0 = arith.constant 0 : i32
    %c0_i32_1 = arith.constant 0 : i32
    return %arg1, %c0_i32, %c0_i32_0 : i32, i32, i32
  }
  func.func @transform_10(%arg0: i32, %arg1: i32) -> (i32, i32, i32) {
    %c0_i32 = arith.constant 0 : i32
    %c0_i32_0 = arith.constant 0 : i32
    %c0_i32_1 = arith.constant 0 : i32
    return %arg1, %c0_i32, %c0_i32_0 : i32, i32, i32
  }
  func.func @transform_11(%arg0: i32, %arg1: i32) -> (i32, i32, i32) {
    %c0_i32 = arith.constant 0 : i32
    %c0_i32_0 = arith.constant 0 : i32
    %c0_i32_1 = arith.constant 0 : i32
    return %arg1, %c0_i32, %c0_i32_0 : i32, i32, i32
  }
  func.func @transform_12(%arg0: i32, %arg1: i32) -> (i32, i32, i32) {
    %c0_i32 = arith.constant 0 : i32
    %c0_i32_0 = arith.constant 0 : i32
    %c0_i32_1 = arith.constant 0 : i32
    return %arg1, %c0_i32, %c0_i32_0 : i32, i32, i32
  }
  func.func @transform_13(%arg0: i32, %arg1: i32) -> (i32, i32, i32) {
    %c0_i32 = arith.constant 0 : i32
    %c0_i32_0 = arith.constant 0 : i32
    %c0_i32_1 = arith.constant 0 : i32
    return %arg1, %c0_i32, %c0_i32_0 : i32, i32, i32
  }
  func.func @transform_14(%arg0: i32, %arg1: i32) -> (i32, i32, i32) {
    %c0_i32 = arith.constant 0 : i32
    %c0_i32_0 = arith.constant 0 : i32
    %c0_i32_1 = arith.constant 0 : i32
    return %arg1, %c0_i32, %c0_i32_0 : i32, i32, i32
  }
  func.func @transform_15(%arg0: i32, %arg1: i32) -> (i32, i32, i32) {
    %c0_i32 = arith.constant 0 : i32
    %c0_i32_0 = arith.constant 0 : i32
    %c0_i32_1 = arith.constant 0 : i32
    return %arg0, %c0_i32, %c0_i32_0 : i32, i32, i32
  }
}

</mosaic_0001>

<llo_original>
// kernel: tpu_custom_call.1
$region0: #{tpu_custom_call.1}
  #allocation0 [shape = 'u32[]', space=smem, size = 0x4, offset = 0x4, fixed_abs, tag = 'smem constant byte address 0x4 - core index']
  #allocation1 [shape = 'u32[72,128]{1,0:T(1,128)}', space=vmem, size = 0x9000, scoped, tag = 'internal scratch']
  #allocation2 [shape = 'f32[16,128]{1,0:T(8,128)}', space=vmem, size = 0x2000, scoped, tag = 'scratch operand']
  %s0 = inlined_call_operand.hbm [shape: f32[2,8,128], index: 0, kind: input, shape index: {}]
  %s1 = inlined_call_operand.hbm [shape: f32[1,128], index: 1, kind: input, shape index: {}]
  %s2 = inlined_call_operand.hbm [shape: f32[1,128], index: 2, kind: input, shape index: {}]
  %s3 = inlined_call_operand.hbm [shape: bf16[2,3,128,128], index: 3, kind: input, shape index: {}]
  %s4 = inlined_call_operand.hbm [shape: f32[2,3,1,128], index: 4, kind: input, shape index: {}]
  %s5 = inlined_call_operand.hbm [shape: bf16[2,128,128], index: 5, kind: input, shape index: {}]
  %s6 = inlined_call_operand.vmem [shape: f32[2,1,128], index: 6, kind: input, shape index: {}]
  %s7 = inlined_call_operand.hbm [shape: f32[2,1,128], index: 7, kind: input, shape index: {}]
  %s8 = inlined_call_operand.hbm [shape: f32[2,1,128], index: 8, kind: input, shape index: {}]
  %s9 = inlined_call_operand.hbm [shape: bf16[2,128,256], index: 9, kind: input, shape index: {}]
  %s10 = inlined_call_operand.vmem [shape: f32[2,1,256], index: 10, kind: input, shape index: {}]
  %s11 = inlined_call_operand.hbm [shape: bf16[2,256,128], index: 11, kind: input, shape index: {}]
  %s12 = inlined_call_operand.vmem [shape: f32[2,1,128], index: 12, kind: input, shape index: {}]
  %s13 = inlined_call_operand.vmem [shape: f32[2,1,128], index: 13, kind: input, shape index: {}]
  %s14 = inlined_call_operand.vmem [shape: f32[2,1,128], index: 14, kind: input, shape index: {}]
  %s15 = inlined_call_operand.hbm [shape: f32[2,8,128], index: 15, kind: output, shape index: {}]
  %s16 = sld [smem:[#allocation0]]
  $region141: #{tpu_custom_call.1} parent=0
    _
  %s18 = ssub.s32 1, %s16
  %s19 = scalar_select 0, %s18, %s16
  $region1: #{tpu_custom_call.1} parent=0
    #allocation3 [shape = 'u8[8192]{0}', space=vmem, size = 0x2000, scoped, tag = 'input window, operand 0, single buffered']
    #allocation4 [shape = 's32[2]{0}', space=sflag, size = 0x8, scoped, tag = 'scoped memory for tpu_custom_call.1']
    #allocation5 [shape = 's32[2]{0}', space=sflag, size = 0x8, scoped, tag = 'scoped memory for tpu_custom_call.1']
    #allocation6 [shape = 'u8[512]{0}', space=vmem, size = 0x400, scoped, tag = 'input window, operand 1, single buffered']
    #allocation7 [shape = 's32[1]{0}', space=sflag, size = 0x4, scoped, tag = 'scoped memory for tpu_custom_call.1']
    #allocation8 [shape = 'u8[512]{0}', space=vmem, size = 0x400, scoped, tag = 'input window, operand 2, single buffered']
    #allocation9 [shape = 'u8[196608]{0}', space=vmem, size = 0x30000, scoped, tag = 'input window, operand 3']
    #allocation10 [shape = 's32[2]{0}', space=sflag, size = 0x8, scoped, tag = 'scoped memory for tpu_custom_call.1']
    #allocation11 [shape = 'u8[3072]{0}', space=vmem, size = 0xc00, scoped, tag = 'input window, operand 4']
    #allocation12 [shape = 'u8[65536]{0}', space=vmem, size = 0x10000, scoped, tag = 'input window, operand 5']
    #allocation13 [shape = 's32[2]{0}', space=sflag, size = 0x8, scoped, tag = 'scoped memory for tpu_custom_call.1']
    #allocation14 [shape = 'u8[1024]{0}', space=vmem, size = 0x400, scoped, tag = 'input window, operand 7']
    #allocation15 [shape = 'u8[1024]{0}', space=vmem, size = 0x400, scoped, tag = 'input window, operand 8']
    #allocation16 [shape = 's32[2]{0}', space=sflag, size = 0x8, scoped, tag = 'scoped memory for tpu_custom_call.1']
    #allocation17 [shape = 'u8[131072]{0}', space=vmem, size = 0x20000, scoped, tag = 'input window, operand 9']
    #allocation18 [shape = 'u8[131072]{0}', space=vmem, size = 0x20000, scoped, tag = 'input window, operand 11']
    #allocation19 [shape = 's32[2]{0}', space=sflag, size = 0x8, scoped, tag = 'scoped memory for tpu_custom_call.1']
    #allocation20 [shape = 'u8[8192]{0}', space=vmem, size = 0x2000, scoped, tag = 'output window, operand 0, single buffered']
    %20 = vsyncpa [#allocation4], 0
    %21 = vsyncpa [#allocation7], 0
    %22 = vsyncpa [#allocation10], 0
    %s23 = scalar_lea.sflag [#allocation10], 1
    %24 = vsyncpa %s23, 0
    %25 = vsyncpa [#allocation13], 0
    %s26 = scalar_lea.sflag [#allocation13], 1
    %27 = vsyncpa %s26, 0
    %28 = vsyncpa [#allocation16], 0
    %s29 = scalar_lea.sflag [#allocation16], 1
    %30 = vsyncpa %s29, 0
    %31 = vsyncpa [#allocation19], 0
    %s32 = scalar_lea.sflag [#allocation19], 1
    %33 = vsyncpa %s32, 0
    %34 = vsyncpa [#allocation5], 0
    loop: start=0, step=1, limit=4
    $region2: #{tpu_custom_call.1} parent=1 // loop_pre_header
      _
    $region3: #{tpu_custom_call.1} parent=1 // loop_header
      %s36 = sphi 0, %s40
      %p37 = scmp.ge.s32.totalorder %s36, 4
      %s43 = sphi 0, %s55
      %s44 = sphi 0, %s51
      %s45 = sphi 0, %s43
      %s46 = sphi 0, %s44
      %s47 = sphi 0, %s45
      %s48 = sphi 0, %s46
      %s58 = sphi 0, %s60
      %s61 = sphi 0, %s58
      %s62 = sphi 0, %s61
      %s78 = sphi 0, %s62
      %s82 = sphi 0, %s82
      %s84 = sphi 0, %s82
      %s85 = sphi 0, %s84
      %s99 = sphi 0, %s85
      %s103 = sphi 0, %s103
      %s105 = sphi 0, %s103
      %s106 = sphi 0, %s105
      %s120 = sphi 0, %s106
      %s126 = sphi 0, %s128
      %s129 = sphi 0, %s126
      %s130 = sphi 0, %s129
      %s146 = sphi 0, %s130
      %s152 = sphi 0, %s154
      %s155 = sphi 0, %s152
      %s156 = sphi 0, %s155
      %s172 = sphi 0, %s156
      %s178 = sphi 0, %s180
      %s181 = sphi 0, %s178
      %s182 = sphi 0, %s181
      %s198 = sphi 0, %s182
      %s204 = sphi 0, %s206
      %s207 = sphi 0, %s204
      %s208 = sphi 0, %s207
      %s224 = sphi 0, %s208
      %s230 = sphi 0, %s232
      %s233 = sphi 0, %s230
      %s234 = sphi 0, %s233
      %s250 = sphi 0, %s234
      %s256 = sphi 0, %s258
      %s259 = sphi 0, %s256
      %s260 = sphi 0, %s259
      %s276 = sphi 0, %s260
      %s282 = sphi 0, %s284
      %s285 = sphi 0, %s282
      %s286 = sphi 0, %s285
      %s302 = sphi 0, %s286
      %s308 = sphi 0, %s310
      %s311 = sphi 0, %s308
      %s312 = sphi 0, %s311
      %s328 = sphi 0, %s312
      %s334 = sphi 0, %s336
      %s337 = sphi 0, %s334
      %s338 = sphi 0, %s337
      %s354 = sphi 0, %s338
      %s360 = sphi 0, %s362
      %s363 = sphi 0, %s360
      %s364 = sphi 0, %s363
      %s380 = sphi 0, %s364
      %s386 = sphi 0, %s388
      %s389 = sphi 0, %s386
      %s390 = sphi 0, %s389
      %s406 = sphi 0, %s390
      %s412 = sphi 0, %s414
      %s415 = sphi 0, %s412
      %s416 = sphi 0, %s415
      %s432 = sphi 0, %s416
      %s438 = sphi 0, %s440
      %s441 = sphi 0, %s438
      %s442 = sphi 0, %s441
      %s458 = sphi 0, %s442
    $region4: #{tpu_custom_call.1} parent=1 // loop_header_branch
      %39 = sbr.rel (%p37) target = $region8
    $region5: #{tpu_custom_call.1} parent=1 // loop_body
      %s41 = ssub.s32 %s36, 1
      %s42 = ssub.s32 %s36, 2
      %s49 = sadd.s32 1, %s44
      %p50 = scmp.ge.s32.totalorder %s49, 2
      %s51 = scalar_select %p50, 0, %s49
      %s52 = sadd.s32 1, %s43
      %s53 = scalar_select %p50, %s52, %s43
      %p54 = scmp.ge.s32.totalorder %s53, 1
      %s55 = scalar_select %p54, 0, %s53
      %s56 = ssub.s32 %s43, %s55
      %p57 = scmp.eq.s32.totalorder %s56, 0
      %s59 = sadd.s32 %s58, 1
      %s60 = scalar_select %p57, %s58, %s59
      %p63 = pneg %p57
      %p64 = scmp.eq.s32.totalorder %s36, 1
      %p65 = por %p63, %p64
      %p66 = scmp.ne.s32.totalorder %s58, %s61
      %p67 = scmp.eq.s32.totalorder %s36, 0
      %p68 = por %p66, %p67
      %p69 = scmp.ne.s32.totalorder %s58, %s61
      %p70 = scmp.eq.s32.totalorder %s41, 1
      %p71 = por %p69, %p70
      %p72 = scmp.ne.s32.totalorder %s61, %s62
      %p73 = scmp.eq.s32.totalorder %s41, 0
      %p74 = por %p72, %p73
      %p75 = scmp.ne.s32.totalorder %s61, %s62
      %p76 = scmp.eq.s32.totalorder %s42, 1
      %p77 = por %p75, %p76
      %p79 = scmp.ne.s32.totalorder %s62, %s78
      %p80 = scmp.eq.s32.totalorder %s42, 0
      %p81 = por %p79, %p80
      %s83 = sadd.s32 %s82, 1
      %p86 = scmp.eq.s32.totalorder %s36, 1
      %p87 = scmp.ne.s32.totalorder %s82, %s84
      %p88 = scmp.eq.s32.totalorder %s36, 0
      %p89 = por %p87, %p88
      %p90 = scmp.ne.s32.totalorder %s82, %s84
      %p91 = scmp.eq.s32.totalorder %s41, 1
      %p92 = por %p90, %p91
      %p93 = scmp.ne.s32.totalorder %s84, %s85
      %p94 = scmp.eq.s32.totalorder %s41, 0
      %p95 = por %p93, %p94
      %p96 = scmp.ne.s32.totalorder %s84, %s85
      %p97 = scmp.eq.s32.totalorder %s42, 1
      %p98 = por %p96, %p97
      %p100 = scmp.ne.s32.totalorder %s85, %s99
      %p101 = scmp.eq.s32.totalorder %s42, 0
      %p102 = por %p100, %p101
      %s104 = sadd.s32 %s103, 1
      %p107 = scmp.eq.s32.totalorder %s36, 1
      %p108 = scmp.ne.s32.totalorder %s103, %s105
      %p109 = scmp.eq.s32.totalorder %s36, 0
      %p110 = por %p108, %p109
      %p111 = scmp.ne.s32.totalorder %s103, %s105
      %p112 = scmp.eq.s32.totalorder %s41, 1
      %p113 = por %p111, %p112
      %p114 = scmp.ne.s32.totalorder %s105, %s106
      %p115 = scmp.eq.s32.totalorder %s41, 0
      %p116 = por %p114, %p115
      %p117 = scmp.ne.s32.totalorder %s105, %s106
      %p118 = scmp.eq.s32.totalorder %s42, 1
      %p119 = por %p117, %p118
      %p121 = scmp.ne.s32.totalorder %s106, %s120
      %p122 = scmp.eq.s32.totalorder %s42, 0
      %p123 = por %p121, %p122
      %s124 = ssub.s32 %s44, %s51
      %p125 = scmp.eq.s32.totalorder %s124, 0
      %s127 = sadd.s32 %s126, 1
      %s128 = scalar_select %p125, %s126, %s127
      %p131 = pneg %p125
      %p132 = scmp.eq.s32.totalorder %s36, 1
      %p133 = por %p131, %p132
      %p134 = scmp.ne.s32.totalorder %s126, %s129
      %p135 = scmp.eq.s32.totalorder %s36, 0
      %p136 = por %p134, %p135
      %p137 = scmp.ne.s32.totalorder %s126, %s129
      %p138 = scmp.eq.s32.totalorder %s41, 1
      %p139 = por %p137, %p138
      %p140 = scmp.ne.s32.totalorder %s129, %s130
      %p141 = scmp.eq.s32.totalorder %s41, 0
      %p142 = por %p140, %p141
      %p143 = scmp.ne.s32.totalorder %s129, %s130
      %p144 = scmp.eq.s32.totalorder %s42, 1
      %p145 = por %p143, %p144
      %p147 = scmp.ne.s32.totalorder %s130, %s146
      %p148 = scmp.eq.s32.totalorder %s42, 0
      %p149 = por %p147, %p148
      %s150 = ssub.s32 %s44, %s51
      %p151 = scmp.eq.s32.totalorder %s150, 0
      %s153 = sadd.s32 %s152, 1
      %s154 = scalar_select %p151, %s152, %s153
      %p157 = pneg %p151
      %p158 = scmp.eq.s32.totalorder %s36, 1
      %p159 = por %p157, %p158
      %p160 = scmp.ne.s32.totalorder %s152, %s155
      %p161 = scmp.eq.s32.totalorder %s36, 0
      %p162 = por %p160, %p161
      %p163 = scmp.ne.s32.totalorder %s152, %s155
      %p164 = scmp.eq.s32.totalorder %s41, 1
      %p165 = por %p163, %p164
      %p166 = scmp.ne.s32.totalorder %s155, %s156
      %p167 = scmp.eq.s32.totalorder %s41, 0
      %p168 = por %p166, %p167
      %p169 = scmp.ne.s32.totalorder %s155, %s156
      %p170 = scmp.eq.s32.totalorder %s42, 1
      %p171 = por %p169, %p170
      %p173 = scmp.ne.s32.totalorder %s156, %s172
      %p174 = scmp.eq.s32.totalorder %s42, 0
      %p175 = por %p173, %p174
      %s176 = ssub.s32 %s44, %s51
      %p177 = scmp.eq.s32.totalorder %s176, 0
      %s179 = sadd.s32 %s178, 1
      %s180 = scalar_select %p177, %s178, %s179
      %p183 = pneg %p177
      %p184 = scmp.eq.s32.totalorder %s36, 1
      %p185 = por %p183, %p184
      %p186 = scmp.ne.s32.totalorder %s178, %s181
      %p187 = scmp.eq.s32.totalorder %s36, 0
      %p188 = por %p186, %p187
      %p189 = scmp.ne.s32.totalorder %s178, %s181
      %p190 = scmp.eq.s32.totalorder %s41, 1
      %p191 = por %p189, %p190
      %p192 = scmp.ne.s32.totalorder %s181, %s182
      %p193 = scmp.eq.s32.totalorder %s41, 0
      %p194 = por %p192, %p193
      %p195 = scmp.ne.s32.totalorder %s181, %s182
      %p196 = scmp.eq.s32.totalorder %s42, 1
      %p197 = por %p195, %p196
      %p199 = scmp.ne.s32.totalorder %s182, %s198
      %p200 = scmp.eq.s32.totalorder %s42, 0
      %p201 = por %p199, %p200
      %s202 = ssub.s32 %s44, %s51
      %p203 = scmp.eq.s32.totalorder %s202, 0
      %s205 = sadd.s32 %s204, 1
      %s206 = scalar_select %p203, %s204, %s205
      %p209 = pneg %p203
      %p210 = scmp.eq.s32.totalorder %s36, 1
      %p211 = por %p209, %p210
      %p212 = scmp.ne.s32.totalorder %s204, %s207
      %p213 = scmp.eq.s32.totalorder %s36, 0
      %p214 = por %p212, %p213
      %p215 = scmp.ne.s32.totalorder %s204, %s207
      %p216 = scmp.eq.s32.totalorder %s41, 1
      %p217 = por %p215, %p216
      %p218 = scmp.ne.s32.totalorder %s207, %s208
      %p219 = scmp.eq.s32.totalorder %s41, 0
      %p220 = por %p218, %p219
      %p221 = scmp.ne.s32.totalorder %s207, %s208
      %p222 = scmp.eq.s32.totalorder %s42, 1
      %p223 = por %p221, %p222
      %p225 = scmp.ne.s32.totalorder %s208, %s224
      %p226 = scmp.eq.s32.totalorder %s42, 0
      %p227 = por %p225, %p226
      %s228 = ssub.s32 %s44, %s51
      %p229 = scmp.eq.s32.totalorder %s228, 0
      %s231 = sadd.s32 %s230, 1
      %s232 = scalar_select %p229, %s230, %s231
      %p235 = pneg %p229
      %p236 = scmp.eq.s32.totalorder %s36, 1
      %p237 = por %p235, %p236
      %p238 = scmp.ne.s32.totalorder %s230, %s233
      %p239 = scmp.eq.s32.totalorder %s36, 0
      %p240 = por %p238, %p239
      %p241 = scmp.ne.s32.totalorder %s230, %s233
      %p242 = scmp.eq.s32.totalorder %s41, 1
      %p243 = por %p241, %p242
      %p244 = scmp.ne.s32.totalorder %s233, %s234
      %p245 = scmp.eq.s32.totalorder %s41, 0
      %p246 = por %p244, %p245
      %p247 = scmp.ne.s32.totalorder %s233, %s234
      %p248 = scmp.eq.s32.totalorder %s42, 1
      %p249 = por %p247, %p248
      %p251 = scmp.ne.s32.totalorder %s234, %s250
      %p252 = scmp.eq.s32.totalorder %s42, 0
      %p253 = por %p251, %p252
      %s254 = ssub.s32 %s44, %s51
      %p255 = scmp.eq.s32.totalorder %s254, 0
      %s257 = sadd.s32 %s256, 1
      %s258 = scalar_select %p255, %s256, %s257
      %p261 = pneg %p255
      %p262 = scmp.eq.s32.totalorder %s36, 1
      %p263 = por %p261, %p262
      %p264 = scmp.ne.s32.totalorder %s256, %s259
      %p265 = scmp.eq.s32.totalorder %s36, 0
      %p266 = por %p264, %p265
      %p267 = scmp.ne.s32.totalorder %s256, %s259
      %p268 = scmp.eq.s32.totalorder %s41, 1
      %p269 = por %p267, %p268
      %p270 = scmp.ne.s32.totalorder %s259, %s260
      %p271 = scmp.eq.s32.totalorder %s41, 0
      %p272 = por %p270, %p271
      %p273 = scmp.ne.s32.totalorder %s259, %s260
      %p274 = scmp.eq.s32.totalorder %s42, 1
      %p275 = por %p273, %p274
      %p277 = scmp.ne.s32.totalorder %s260, %s276
      %p278 = scmp.eq.s32.totalorder %s42, 0
      %p279 = por %p277, %p278
      %s280 = ssub.s32 %s44, %s51
      %p281 = scmp.eq.s32.totalorder %s280, 0
      %s283 = sadd.s32 %s282, 1
      %s284 = scalar_select %p281, %s282, %s283
      %p287 = pneg %p281
      %p288 = scmp.eq.s32.totalorder %s36, 1
      %p289 = por %p287, %p288
      %p290 = scmp.ne.s32.totalorder %s282, %s285
      %p291 = scmp.eq.s32.totalorder %s36, 0
      %p292 = por %p290, %p291
      %p293 = scmp.ne.s32.totalorder %s282, %s285
      %p294 = scmp.eq.s32.totalorder %s41, 1
      %p295 = por %p293, %p294
      %p296 = scmp.ne.s32.totalorder %s285, %s286
      %p297 = scmp.eq.s32.totalorder %s41, 0
      %p298 = por %p296, %p297
      %p299 = scmp.ne.s32.totalorder %s285, %s286
      %p300 = scmp.eq.s32.totalorder %s42, 1
      %p301 = por %p299, %p300
      %p303 = scmp.ne.s32.totalorder %s286, %s302
      %p304 = scmp.eq.s32.totalorder %s42, 0
      %p305 = por %p303, %p304
      %s306 = ssub.s32 %s44, %s51
      %p307 = scmp.eq.s32.totalorder %s306, 0
      %s309 = sadd.s32 %s308, 1
      %s310 = scalar_select %p307, %s308, %s309
      %p313 = pneg %p307
      %p314 = scmp.eq.s32.totalorder %s36, 1
      %p315 = por %p313, %p314
      %p316 = scmp.ne.s32.totalorder %s308, %s311
      %p317 = scmp.eq.s32.totalorder %s36, 0
      %p318 = por %p316, %p317
      %p319 = scmp.ne.s32.totalorder %s308, %s311
      %p320 = scmp.eq.s32.totalorder %s41, 1
      %p321 = por %p319, %p320
      %p322 = scmp.ne.s32.totalorder %s311, %s312
      %p323 = scmp.eq.s32.totalorder %s41, 0
      %p324 = por %p322, %p323
      %p325 = scmp.ne.s32.totalorder %s311, %s312
      %p326 = scmp.eq.s32.totalorder %s42, 1
      %p327 = por %p325, %p326
      %p329 = scmp.ne.s32.totalorder %s312, %s328
      %p330 = scmp.eq.s32.totalorder %s42, 0
      %p331 = por %p329, %p330
      %s332 = ssub.s32 %s44, %s51
      %p333 = scmp.eq.s32.totalorder %s332, 0
      %s335 = sadd.s32 %s334, 1
      %s336 = scalar_select %p333, %s334, %s335
      %p339 = pneg %p333
      %p340 = scmp.eq.s32.totalorder %s36, 1
      %p341 = por %p339, %p340
      %p342 = scmp.ne.s32.totalorder %s334, %s337
      %p343 = scmp.eq.s32.totalorder %s36, 0
      %p344 = por %p342, %p343
      %p345 = scmp.ne.s32.totalorder %s334, %s337
      %p346 = scmp.eq.s32.totalorder %s41, 1
      %p347 = por %p345, %p346
      %p348 = scmp.ne.s32.totalorder %s337, %s338
      %p349 = scmp.eq.s32.totalorder %s41, 0
      %p350 = por %p348, %p349
      %p351 = scmp.ne.s32.totalorder %s337, %s338
      %p352 = scmp.eq.s32.totalorder %s42, 1
      %p353 = por %p351, %p352
      %p355 = scmp.ne.s32.totalorder %s338, %s354
      %p356 = scmp.eq.s32.totalorder %s42, 0
      %p357 = por %p355, %p356
      %s358 = ssub.s32 %s44, %s51
      %p359 = scmp.eq.s32.totalorder %s358, 0
      %s361 = sadd.s32 %s360, 1
      %s362 = scalar_select %p359, %s360, %s361
      %p365 = pneg %p359
      %p366 = scmp.eq.s32.totalorder %s36, 1
      %p367 = por %p365, %p366
      %p368 = scmp.ne.s32.totalorder %s360, %s363
      %p369 = scmp.eq.s32.totalorder %s36, 0
      %p370 = por %p368, %p369
      %p371 = scmp.ne.s32.totalorder %s360, %s363
      %p372 = scmp.eq.s32.totalorder %s41, 1
      %p373 = por %p371, %p372
      %p374 = scmp.ne.s32.totalorder %s363, %s364
      %p375 = scmp.eq.s32.totalorder %s41, 0
      %p376 = por %p374, %p375
      %p377 = scmp.ne.s32.totalorder %s363, %s364
      %p378 = scmp.eq.s32.totalorder %s42, 1
      %p379 = por %p377, %p378
      %p381 = scmp.ne.s32.totalorder %s364, %s380
      %p382 = scmp.eq.s32.totalorder %s42, 0
      %p383 = por %p381, %p382
      %s384 = ssub.s32 %s44, %s51
      %p385 = scmp.eq.s32.totalorder %s384, 0
      %s387 = sadd.s32 %s386, 1
      %s388 = scalar_select %p385, %s386, %s387
      %p391 = pneg %p385
      %p392 = scmp.eq.s32.totalorder %s36, 1
      %p393 = por %p391, %p392
      %p394 = scmp.ne.s32.totalorder %s386, %s389
      %p395 = scmp.eq.s32.totalorder %s36, 0
      %p396 = por %p394, %p395
      %p397 = scmp.ne.s32.totalorder %s386, %s389
      %p398 = scmp.eq.s32.totalorder %s41, 1
      %p399 = por %p397, %p398
      %p400 = scmp.ne.s32.totalorder %s389, %s390
      %p401 = scmp.eq.s32.totalorder %s41, 0
      %p402 = por %p400, %p401
      %p403 = scmp.ne.s32.totalorder %s389, %s390
      %p404 = scmp.eq.s32.totalorder %s42, 1
      %p405 = por %p403, %p404
      %p407 = scmp.ne.s32.totalorder %s390, %s406
      %p408 = scmp.eq.s32.totalorder %s42, 0
      %p409 = por %p407, %p408
      %s410 = ssub.s32 %s44, %s51
      %p411 = scmp.eq.s32.totalorder %s410, 0
      %s413 = sadd.s32 %s412, 1
      %s414 = scalar_select %p411, %s412, %s413
      %p417 = pneg %p411
      %p418 = scmp.eq.s32.totalorder %s36, 1
      %p419 = por %p417, %p418
      %p420 = scmp.ne.s32.totalorder %s412, %s415
      %p421 = scmp.eq.s32.totalorder %s36, 0
      %p422 = por %p420, %p421
      %p423 = scmp.ne.s32.totalorder %s412, %s415
      %p424 = scmp.eq.s32.totalorder %s41, 1
      %p425 = por %p423, %p424
      %p426 = scmp.ne.s32.totalorder %s415, %s416
      %p427 = scmp.eq.s32.totalorder %s41, 0
      %p428 = por %p426, %p427
      %p429 = scmp.ne.s32.totalorder %s415, %s416
      %p430 = scmp.eq.s32.totalorder %s42, 1
      %p431 = por %p429, %p430
      %p433 = scmp.ne.s32.totalorder %s416, %s432
      %p434 = scmp.eq.s32.totalorder %s42, 0
      %p435 = por %p433, %p434
      %s436 = ssub.s32 %s43, %s55
      %p437 = scmp.eq.s32.totalorder %s436, 0
      %s439 = sadd.s32 %s438, 1
      %s440 = scalar_select %p437, %s438, %s439
      %p443 = pneg %p437
      %p444 = scmp.eq.s32.totalorder %s36, 1
      %p445 = por %p443, %p444
      %p446 = scmp.ne.s32.totalorder %s438, %s441
      %p447 = scmp.eq.s32.totalorder %s36, 0
      %p448 = por %p446, %p447
      %p449 = scmp.ne.s32.totalorder %s438, %s441
      %p450 = scmp.eq.s32.totalorder %s41, 1
      %p451 = por %p449, %p450
      %p452 = scmp.ne.s32.totalorder %s441, %s442
      %p453 = scmp.eq.s32.totalorder %s41, 0
      %p454 = por %p452, %p453
      %p455 = scmp.ne.s32.totalorder %s441, %s442
      %p456 = scmp.eq.s32.totalorder %s42, 1
      %p457 = por %p455, %p456
      %p459 = scmp.ne.s32.totalorder %s442, %s458
      %p460 = scmp.eq.s32.totalorder %s42, 0
      %p461 = por %p459, %p460
      %p462 = scmp.le.s32.totalorder 1, %s36
      %p463 = scmp.lt.s32.totalorder %s36, 3
      %p464 = pnand %p462, %p463
      %p465 = pneg %p464
      // Predicated region
      $region9: #{tpu_custom_call.1} parent=5 // pred_check
        _
      $region10: #{tpu_custom_call.1} parent=5 // pred_check_branch
        %467 = sbr.rel (%p464) target = $region12
      $region11: #{tpu_custom_call.1} parent=5 // pred_region
        %s468 = ssub.s32 %s36, 1
        // Predicated region
        $region13: #{tpu_custom_call.1} parent=11 // pred_check
          %p469 = pneg %p74
        $region14: #{tpu_custom_call.1} parent=11 // pred_check_branch
          %471 = sbr.rel (%p469) target = $region16
        $region15: #{tpu_custom_call.1} parent=11 // pred_region
          %s472 = smul.u32 2, %s45
          %474 = vsyncadd [#allocation4], 0
          %s475 = smul.addr %s472, 8
          %s476 = scalar_lea.hbm %s0, %s475
          %s477 = sshll.u32 %s476, 4
          %s478 = int_to_ptr.hbm [resolvable:$true] %s477
          %s479 = sshll.u32 [#allocation3], 4
          %s480 = int_to_ptr.vmem [resolvable:$true] %s479
          %485 = dma.hbm_to_vmem [thread:$0]  %s478, 256, %s480, [#allocation4], 128, 128, 8
        $region16: #{tpu_custom_call.1} parent=11 // pred_fallthru
          _
        // Predicated region
        $region17: #{tpu_custom_call.1} parent=11 // pred_check
          %p486 = pneg %p95
        $region18: #{tpu_custom_call.1} parent=11 // pred_check_branch
          %488 = sbr.rel (%p486) target = $region20
        $region19: #{tpu_custom_call.1} parent=11 // pred_region
          %490 = vsyncadd [#allocation7], 0
          %s492 = sshll.u32 %s1, 4
          %s493 = int_to_ptr.hbm [resolvable:$true] %s492
          %s494 = sshll.u32 [#allocation6], 4
          %s495 = int_to_ptr.vmem [resolvable:$true] %s494
          %497 = dma.hbm_to_vmem [thread:$0]  %s493, 16, %s495, [#allocation7]
        $region20: #{tpu_custom_call.1} parent=11 // pred_fallthru
          _
        // Predicated region
        $region21: #{tpu_custom_call.1} parent=11 // pred_check
          %p498 = pneg %p116
        $region22: #{tpu_custom_call.1} parent=11 // pred_check_branch
          %500 = sbr.rel (%p498) target = $region24
        $region23: #{tpu_custom_call.1} parent=11 // pred_region
          %502 = vsyncadd [#allocation7], 0
          %s504 = sshll.u32 %s2, 4
          %s505 = int_to_ptr.hbm [resolvable:$true] %s504
          %s506 = sshll.u32 [#allocation8], 4
          %s507 = int_to_ptr.vmem [resolvable:$true] %s506
          %509 = dma.hbm_to_vmem [thread:$0]  %s505, 16, %s507, [#allocation7]
        $region24: #{tpu_custom_call.1} parent=11 // pred_fallthru
          _
      $region12: #{tpu_custom_call.1} parent=5 // pred_fallthru
        _
      %p510 = scmp.lt.s32.totalorder %s36, 2
      // Predicated region
      $region25: #{tpu_custom_call.1} parent=5 // pred_check
        %p511 = pneg %p510
      $region26: #{tpu_custom_call.1} parent=5 // pred_check_branch
        %513 = sbr.rel (%p511) target = $region28
      $region27: #{tpu_custom_call.1} parent=5 // pred_region
        // Predicated region
        $region29: #{tpu_custom_call.1} parent=27 // pred_check
          %p514 = pneg %p136
        $region30: #{tpu_custom_call.1} parent=27 // pred_check_branch
          %516 = sbr.rel (%p514) target = $region32
        $region31: #{tpu_custom_call.1} parent=27 // pred_region
          %s517 = sand.u32 %s36, 1
          %s518 = scalar_lea.sflag [#allocation10], %s517
          %s519 = sand.u32 %s126, 1
          %s520 = smul.addr %s519, 192
          %s521 = scalar_lea.vmem [#allocation9], %s520
          %523 = vsyncadd %s518, 0
          %s524 = smul.addr %s44, 48
          %s525 = smul.addr %s524, 4
          %s526 = scalar_lea.hbm %s3, %s525
          %s527 = sshll.u32 %s526, 4
          %s528 = int_to_ptr.hbm [resolvable:$true] %s527
          %s529 = sshll.u32 %s521, 4
          %s530 = int_to_ptr.vmem [resolvable:$true] %s529
          %535 = dma.hbm_to_vmem [thread:$0]  %s528, 3072, %s530, %s518, 64, 64, 4
        $region32: #{tpu_custom_call.1} parent=27 // pred_fallthru
          _
        // Predicated region
        $region33: #{tpu_custom_call.1} parent=27 // pred_check
          %p536 = pneg %p162
        $region34: #{tpu_custom_call.1} parent=27 // pred_check_branch
          %538 = sbr.rel (%p536) target = $region36
        $region35: #{tpu_custom_call.1} parent=27 // pred_region
          %s539 = sand.u32 %s36, 1
          %s540 = scalar_lea.sflag [#allocation10], %s539
          %s541 = sand.u32 %s152, 1
          %s542 = smul.addr %s541, 3
          %s543 = scalar_lea.vmem [#allocation11], %s542
          %545 = vsyncadd %s540, 0
          %s546 = smul.addr %s44, 3
          %s547 = scalar_lea.hbm %s4, %s546
          %s548 = sshll.u32 %s547, 4
          %s549 = int_to_ptr.hbm [resolvable:$true] %s548
          %s550 = sshll.u32 %s543, 4
          %s551 = int_to_ptr.vmem [resolvable:$true] %s550
          %556 = dma.hbm_to_vmem [thread:$0]  %s549, 48, %s551, %s540, 16, 16, 1
        $region36: #{tpu_custom_call.1} parent=27 // pred_fallthru
          _
        // Predicated region
        $region37: #{tpu_custom_call.1} parent=27 // pred_check
          %p557 = pneg %p188
        $region38: #{tpu_custom_call.1} parent=27 // pred_check_branch
          %559 = sbr.rel (%p557) target = $region40
        $region39: #{tpu_custom_call.1} parent=27 // pred_region
          %s560 = sand.u32 %s36, 1
          %s561 = scalar_lea.sflag [#allocation13], %s560
          %s562 = sand.u32 %s178, 1
          %s563 = smul.addr %s562, 64
          %s564 = scalar_lea.vmem [#allocation12], %s563
          %566 = vsyncadd %s561, 0
          %s567 = smul.addr %s44, 16
          %s568 = smul.addr %s567, 4
          %s569 = scalar_lea.hbm %s5, %s568
          %s570 = sshll.u32 %s569, 4
          %s571 = int_to_ptr.hbm [resolvable:$true] %s570
          %s572 = sshll.u32 %s564, 4
          %s573 = int_to_ptr.vmem [resolvable:$true] %s572
          %578 = dma.hbm_to_vmem [thread:$0]  %s571, 1024, %s573, %s561, 64, 64, 4
        $region40: #{tpu_custom_call.1} parent=27 // pred_fallthru
          _
        // Predicated region
        $region41: #{tpu_custom_call.1} parent=27 // pred_check
          %p579 = pneg %p214
        $region42: #{tpu_custom_call.1} parent=27 // pred_check_branch
          %581 = sbr.rel (%p579) target = $region44
        $region43: #{tpu_custom_call.1} parent=27 // pred_region
          %p582 = scmp.lt.s32.totalorder %s44, 1
          %s583 = scalar_select %p582, %s44, 1
          %s584 = scalar_lea.vmem %s6, %s583
        $region44: #{tpu_custom_call.1} parent=27 // pred_fallthru
          _
        // Predicated region
        $region45: #{tpu_custom_call.1} parent=27 // pred_check
          %p585 = pneg %p240
        $region46: #{tpu_custom_call.1} parent=27 // pred_check_branch
          %587 = sbr.rel (%p585) target = $region48
        $region47: #{tpu_custom_call.1} parent=27 // pred_region
          %s588 = sand.u32 %s36, 1
          %s589 = scalar_lea.sflag [#allocation13], %s588
          %s590 = sand.u32 %s230, 1
          %s591 = scalar_lea.vmem [#allocation14], %s590
          %593 = vsyncadd %s589, 0
          %s594 = scalar_lea.hbm %s7, %s44
          %s596 = sshll.u32 %s594, 4
          %s597 = int_to_ptr.hbm [resolvable:$true] %s596
          %s598 = sshll.u32 %s591, 4
          %s599 = int_to_ptr.vmem [resolvable:$true] %s598
          %601 = dma.hbm_to_vmem [thread:$0]  %s597, 16, %s599, %s589
        $region48: #{tpu_custom_call.1} parent=27 // pred_fallthru
          _
        // Predicated region
        $region49: #{tpu_custom_call.1} parent=27 // pred_check
          %p602 = pneg %p266
        $region50: #{tpu_custom_call.1} parent=27 // pred_check_branch
          %604 = sbr.rel (%p602) target = $region52
        $region51: #{tpu_custom_call.1} parent=27 // pred_region
          %s605 = sand.u32 %s36, 1
          %s606 = scalar_lea.sflag [#allocation16], %s605
          %s607 = sand.u32 %s256, 1
          %s608 = scalar_lea.vmem [#allocation15], %s607
          %610 = vsyncadd %s606, 0
          %s611 = scalar_lea.hbm %s8, %s44
          %s613 = sshll.u32 %s611, 4
          %s614 = int_to_ptr.hbm [resolvable:$true] %s613
          %s615 = sshll.u32 %s608, 4
          %s616 = int_to_ptr.vmem [resolvable:$true] %s615
          %618 = dma.hbm_to_vmem [thread:$0]  %s614, 16, %s616, %s606
        $region52: #{tpu_custom_call.1} parent=27 // pred_fallthru
          _
        // Predicated region
        $region53: #{tpu_custom_call.1} parent=27 // pred_check
          %p619 = pneg %p292
        $region54: #{tpu_custom_call.1} parent=27 // pred_check_branch
          %621 = sbr.rel (%p619) target = $region56
        $region55: #{tpu_custom_call.1} parent=27 // pred_region
          %s622 = sand.u32 %s36, 1
          %s623 = scalar_lea.sflag [#allocation16], %s622
          %s624 = sand.u32 %s282, 1
          %s625 = smul.addr %s624, 128
          %s626 = scalar_lea.vmem [#allocation17], %s625
          %628 = vsyncadd %s623, 0
          %s629 = smul.addr %s44, 32
          %s630 = smul.addr %s629, 4
          %s631 = scalar_lea.hbm %s9, %s630
          %s632 = sshll.u32 %s631, 4
          %s633 = int_to_ptr.hbm [resolvable:$true] %s632
          %s634 = sshll.u32 %s626, 4
          %s635 = int_to_ptr.vmem [resolvable:$true] %s634
          %640 = dma.hbm_to_vmem [thread:$0]  %s633, 2048, %s635, %s623, 128, 128, 8
        $region56: #{tpu_custom_call.1} parent=27 // pred_fallthru
          _
        // Predicated region
        $region57: #{tpu_custom_call.1} parent=27 // pred_check
          %p641 = pneg %p318
        $region58: #{tpu_custom_call.1} parent=27 // pred_check_branch
          %643 = sbr.rel (%p641) target = $region60
        $region59: #{tpu_custom_call.1} parent=27 // pred_region
          %p644 = scmp.lt.s32.totalorder %s44, 1
          %s645 = scalar_select %p644, %s44, 1
          %s646 = smul.addr %s645, 2
          %s647 = scalar_lea.vmem %s10, %s646
        $region60: #{tpu_custom_call.1} parent=27 // pred_fallthru
          _
        // Predicated region
        $region61: #{tpu_custom_call.1} parent=27 // pred_check
          %p648 = pneg %p344
        $region62: #{tpu_custom_call.1} parent=27 // pred_check_branch
          %650 = sbr.rel (%p648) target = $region64
        $region63: #{tpu_custom_call.1} parent=27 // pred_region
          %s651 = sand.u32 %s334, 1
          %s652 = scalar_lea.sflag [#allocation19], %s651
          %s653 = sand.u32 %s334, 1
          %s654 = smul.addr %s653, 128
          %s655 = scalar_lea.vmem [#allocation18], %s654
          %657 = vsyncadd %s652, 0
          %s658 = smul.addr %s44, 32
          %s659 = smul.addr %s658, 4
          %s660 = scalar_lea.hbm %s11, %s659
          %s661 = sshll.u32 %s660, 4
          %s662 = int_to_ptr.hbm [resolvable:$true] %s661
          %s663 = sshll.u32 %s655, 4
          %s664 = int_to_ptr.vmem [resolvable:$true] %s663
          %669 = dma.hbm_to_vmem [thread:$0]  %s662, 2048, %s664, %s652, 64, 64, 4
        $region64: #{tpu_custom_call.1} parent=27 // pred_fallthru
          _
        // Predicated region
        $region65: #{tpu_custom_call.1} parent=27 // pred_check
          %p670 = pneg %p370
        $region66: #{tpu_custom_call.1} parent=27 // pred_check_branch
          %672 = sbr.rel (%p670) target = $region68
        $region67: #{tpu_custom_call.1} parent=27 // pred_region
          %p673 = scmp.lt.s32.totalorder %s44, 1
          %s674 = scalar_select %p673, %s44, 1
          %s675 = scalar_lea.vmem %s12, %s674
        $region68: #{tpu_custom_call.1} parent=27 // pred_fallthru
          _
        // Predicated region
        $region69: #{tpu_custom_call.1} parent=27 // pred_check
          %p676 = pneg %p396
        $region70: #{tpu_custom_call.1} parent=27 // pred_check_branch
          %678 = sbr.rel (%p676) target = $region72
        $region71: #{tpu_custom_call.1} parent=27 // pred_region
          %p679 = scmp.lt.s32.totalorder %s44, 1
          %s680 = scalar_select %p679, %s44, 1
          %s681 = scalar_lea.vmem %s13, %s680
        $region72: #{tpu_custom_call.1} parent=27 // pred_fallthru
          _
        // Predicated region
        $region73: #{tpu_custom_call.1} parent=27 // pred_check
          %p682 = pneg %p422
        $region74: #{tpu_custom_call.1} parent=27 // pred_check_branch
          %684 = sbr.rel (%p682) target = $region76
        $region75: #{tpu_custom_call.1} parent=27 // pred_region
          %p685 = scmp.lt.s32.totalorder %s44, 1
          %s686 = scalar_select %p685, %s44, 1
          %s687 = scalar_lea.vmem %s14, %s686
        $region76: #{tpu_custom_call.1} parent=27 // pred_fallthru
          _
      $region28: #{tpu_custom_call.1} parent=5 // pred_fallthru
        _
      %p688 = scmp.le.s32.totalorder 1, %s36
      %p689 = scmp.lt.s32.totalorder %s36, 3
      %p690 = pnand %p688, %p689
      %p691 = pneg %p690
      // Predicated region
      $region77: #{tpu_custom_call.1} parent=5 // pred_check
        _
      $region78: #{tpu_custom_call.1} parent=5 // pred_check_branch
        %693 = sbr.rel (%p690) target = $region80
      $region79: #{tpu_custom_call.1} parent=5 // pred_region
        %s694 = ssub.s32 %s36, 1
        // Predicated region
        $region81: #{tpu_custom_call.1} parent=79 // pred_check
          %p695 = pneg %p74
        $region82: #{tpu_custom_call.1} parent=79 // pred_check_branch
          %697 = sbr.rel (%p695) target = $region84
        $region83: #{tpu_custom_call.1} parent=79 // pred_region
          %699 = dma.done [#allocation4], 256
        $region84: #{tpu_custom_call.1} parent=79 // pred_fallthru
          _
        // Predicated region
        $region85: #{tpu_custom_call.1} parent=79 // pred_check
          %p700 = pneg %p95
        $region86: #{tpu_custom_call.1} parent=79 // pred_check_branch
          %702 = sbr.rel (%p700) target = $region88
        $region87: #{tpu_custom_call.1} parent=79 // pred_region
          %704 = dma.done [#allocation7], 16
        $region88: #{tpu_custom_call.1} parent=79 // pred_fallthru
          _
        // Predicated region
        $region89: #{tpu_custom_call.1} parent=79 // pred_check
          %p705 = pneg %p116
        $region90: #{tpu_custom_call.1} parent=79 // pred_check_branch
          %707 = sbr.rel (%p705) target = $region92
        $region91: #{tpu_custom_call.1} parent=79 // pred_region
          %709 = dma.done [#allocation7], 16
        $region92: #{tpu_custom_call.1} parent=79 // pred_fallthru
          _
        %s710 = sand.u32 %s41, 1
        %s711 = scalar_lea.sflag [#allocation10], %s710
        %s712 = sand.u32 %s129, 1
        %s713 = smul.addr %s712, 192
        %s714 = scalar_lea.vmem [#allocation9], %s713
        // Predicated region
        $region93: #{tpu_custom_call.1} parent=79 // pred_check
          %p715 = pneg %p142
        $region94: #{tpu_custom_call.1} parent=79 // pred_check_branch
          %717 = sbr.rel (%p715) target = $region96
        $region95: #{tpu_custom_call.1} parent=79 // pred_region
          %719 = dma.done %s711, 3072
        $region96: #{tpu_custom_call.1} parent=79 // pred_fallthru
          _
        %s720 = sand.u32 %s41, 1
        %s721 = scalar_lea.sflag [#allocation10], %s720
        %s722 = sand.u32 %s155, 1
        %s723 = smul.addr %s722, 3
        %s724 = scalar_lea.vmem [#allocation11], %s723
        // Predicated region
        $region97: #{tpu_custom_call.1} parent=79 // pred_check
          %p725 = pneg %p168
        $region98: #{tpu_custom_call.1} parent=79 // pred_check_branch
          %727 = sbr.rel (%p725) target = $region100
        $region99: #{tpu_custom_call.1} parent=79 // pred_region
          %729 = dma.done %s721, 48
        $region100: #{tpu_custom_call.1} parent=79 // pred_fallthru
          _
        %s730 = sand.u32 %s41, 1
        %s731 = scalar_lea.sflag [#allocation13], %s730
        %s732 = sand.u32 %s181, 1
        %s733 = smul.addr %s732, 64
        %s734 = scalar_lea.vmem [#allocation12], %s733
        // Predicated region
        $region101: #{tpu_custom_call.1} parent=79 // pred_check
          %p735 = pneg %p194
        $region102: #{tpu_custom_call.1} parent=79 // pred_check_branch
          %737 = sbr.rel (%p735) target = $region104
        $region103: #{tpu_custom_call.1} parent=79 // pred_region
          %739 = dma.done %s731, 1024
        $region104: #{tpu_custom_call.1} parent=79 // pred_fallthru
          _
        %s740 = sand.u32 %s41, 1
        %s741 = scalar_lea.sflag [#allocation13], %s740
        %s742 = sand.u32 %s233, 1
        %s743 = scalar_lea.vmem [#allocation14], %s742
        // Predicated region
        $region105: #{tpu_custom_call.1} parent=79 // pred_check
          %p744 = pneg %p246
        $region106: #{tpu_custom_call.1} parent=79 // pred_check_branch
          %746 = sbr.rel (%p744) target = $region108
        $region107: #{tpu_custom_call.1} parent=79 // pred_region
          %748 = dma.done %s741, 16
        $region108: #{tpu_custom_call.1} parent=79 // pred_fallthru
          _
        %s749 = sand.u32 %s41, 1
        %s750 = scalar_lea.sflag [#allocation16], %s749
        %s751 = sand.u32 %s259, 1
        %s752 = scalar_lea.vmem [#allocation15], %s751
        // Predicated region
        $region109: #{tpu_custom_call.1} parent=79 // pred_check
          %p753 = pneg %p272
        $region110: #{tpu_custom_call.1} parent=79 // pred_check_branch
          %755 = sbr.rel (%p753) target = $region112
        $region111: #{tpu_custom_call.1} parent=79 // pred_region
          %757 = dma.done %s750, 16
        $region112: #{tpu_custom_call.1} parent=79 // pred_fallthru
          _
        %s758 = sand.u32 %s41, 1
        %s759 = scalar_lea.sflag [#allocation16], %s758
        %s760 = sand.u32 %s285, 1
        %s761 = smul.addr %s760, 128
        %s762 = scalar_lea.vmem [#allocation17], %s761
        // Predicated region
        $region113: #{tpu_custom_call.1} parent=79 // pred_check
          %p763 = pneg %p298
        $region114: #{tpu_custom_call.1} parent=79 // pred_check_branch
          %765 = sbr.rel (%p763) target = $region116
        $region115: #{tpu_custom_call.1} parent=79 // pred_region
          %767 = dma.done %s759, 2048
        $region116: #{tpu_custom_call.1} parent=79 // pred_fallthru
          _
        %s768 = sand.u32 %s337, 1
        %s769 = scalar_lea.sflag [#allocation19], %s768
        %s770 = sand.u32 %s337, 1
        %s771 = smul.addr %s770, 128
        %s772 = scalar_lea.vmem [#allocation18], %s771
        // Predicated region
        $region117: #{tpu_custom_call.1} parent=79 // pred_check
          %p773 = pneg %p350
        $region118: #{tpu_custom_call.1} parent=79 // pred_check_branch
          %775 = sbr.rel (%p773) target = $region120
        $region119: #{tpu_custom_call.1} parent=79 // pred_region
          %777 = dma.done %s769, 2048
        $region120: #{tpu_custom_call.1} parent=79 // pred_fallthru
          _
        %p778 = pneg %p74
        %p779 = pneg %p71
        %p780 = pneg %p95
        %p781 = pneg %p92
        %p782 = pneg %p116
        %p783 = pneg %p113
        %s784 = sand.u32 %s41, 1
        %s785 = scalar_lea.sflag [#allocation10], %s784
        %s786 = sand.u32 %s129, 1
        %s787 = smul.addr %s786, 192
        %s788 = scalar_lea.vmem [#allocation9], %s787
        %p789 = pneg %p142
        %p790 = pneg %p139
        %s791 = sand.u32 %s41, 1
        %s792 = scalar_lea.sflag [#allocation10], %s791
        %s793 = sand.u32 %s155, 1
        %s794 = smul.addr %s793, 3
        %s795 = scalar_lea.vmem [#allocation11], %s794
        %p796 = pneg %p168
        %p797 = pneg %p165
        %s798 = sand.u32 %s41, 1
        %s799 = scalar_lea.sflag [#allocation13], %s798
        %s800 = sand.u32 %s181, 1
        %s801 = smul.addr %s800, 64
        %s802 = scalar_lea.vmem [#allocation12], %s801
        %p803 = pneg %p194
        %p804 = pneg %p191
        %p805 = scmp.lt.s32.totalorder %s46, 1
        %s806 = scalar_select %p805, %s46, 1
        %s807 = scalar_lea.vmem %s6, %s806
        %p808 = pneg %p220
        %p809 = pneg %p217
        %s810 = sand.u32 %s41, 1
        %s811 = scalar_lea.sflag [#allocation13], %s810
        %s812 = sand.u32 %s233, 1
        %s813 = scalar_lea.vmem [#allocation14], %s812
        %p814 = pneg %p246
        %p815 = pneg %p243
        %s816 = sand.u32 %s41, 1
        %s817 = scalar_lea.sflag [#allocation16], %s816
        %s818 = sand.u32 %s259, 1
        %s819 = scalar_lea.vmem [#allocation15], %s818
        %p820 = pneg %p272
        %p821 = pneg %p269
        %s822 = sand.u32 %s41, 1
        %s823 = scalar_lea.sflag [#allocation16], %s822
        %s824 = sand.u32 %s285, 1
        %s825 = smul.addr %s824, 128
        %s826 = scalar_lea.vmem [#allocation17], %s825
        %p827 = pneg %p298
        %p828 = pneg %p295
        %p829 = scmp.lt.s32.totalorder %s46, 1
        %s830 = scalar_select %p829, %s46, 1
        %s831 = smul.addr %s830, 2
        %s832 = scalar_lea.vmem %s10, %s831
        %p833 = pneg %p324
        %p834 = pneg %p321
        %s835 = sand.u32 %s337, 1
        %s836 = scalar_lea.sflag [#allocation19], %s835
        %s837 = sand.u32 %s337, 1
        %s838 = smul.addr %s837, 128
        %s839 = scalar_lea.vmem [#allocation18], %s838
        %p840 = pneg %p350
        %p841 = pneg %p347
        %p842 = scmp.lt.s32.totalorder %s46, 1
        %s843 = scalar_select %p842, %s46, 1
        %s844 = scalar_lea.vmem %s12, %s843
        %p845 = pneg %p376
        %p846 = pneg %p373
        %p847 = scmp.lt.s32.totalorder %s46, 1
        %s848 = scalar_select %p847, %s46, 1
        %s849 = scalar_lea.vmem %s13, %s848
        %p850 = pneg %p402
        %p851 = pneg %p399
        %p852 = scmp.lt.s32.totalorder %s46, 1
        %s853 = scalar_select %p852, %s46, 1
        %s854 = scalar_lea.vmem %s14, %s853
        %p855 = pneg %p428
        %p856 = pneg %p425
        %p857 = pneg %p454
        %p858 = pneg %p451
        %s859 = smul.u32 2, %s45
        %p860 = scmp.lt.s32.totalorder %s46, 1
        %s861 = scalar_select %p860, %s46, 1
        %s862 = scalar_lea.vmem %s6, %s861
        %p863 = scmp.lt.s32.totalorder %s46, 1
        %s864 = scalar_select %p863, %s46, 1
        %s865 = smul.addr %s864, 2
        %s866 = scalar_lea.vmem %s10, %s865
        %p867 = scmp.lt.s32.totalorder %s46, 1
        %s868 = scalar_select %p867, %s46, 1
        %s869 = scalar_lea.vmem %s12, %s868
        %p870 = scmp.lt.s32.totalorder %s46, 1
        %s871 = scalar_select %p870, %s46, 1
        %s872 = scalar_lea.vmem %s13, %s871
        %p873 = scmp.lt.s32.totalorder %s46, 1
        %s874 = scalar_select %p873, %s46, 1
        %s875 = scalar_lea.vmem %s14, %s874
        %s876 = smul.u32 2, %s45
        %p878 = scmp.eq.s32.totalorder %s46, 0
        // Predicated region
        $region121: #{tpu_custom_call.1} parent=79 // pred_check
          %p879 = pneg %p878
        $region122: #{tpu_custom_call.1} parent=79 // pred_check_branch
          %881 = sbr.rel (%p879) target = $region124
        $region123: #{tpu_custom_call.1} parent=79 // pred_region
          %v882 = vld [vmem:[#allocation3] sm:$0xff]
          %v883 = vld [vmem:[#allocation3 + $0x8] sm:$0xff]
          %v884 = vld [vmem:[#allocation6] sm:$0x1]
          %v885 = vld [vmem:[#allocation8] sm:$0x1]
          %886 = vadd.xlane.f32.xlu0 %v882
          %v887 = vpop.xlane.xlu0 %886
          %888 = vadd.xlane.f32.xlu0 %v883
          %v889 = vpop.xlane.xlu0 %888
          %v890 = vrcp.pop 128.0
          %v891 = vmul.f32 128.0, %v890
          %v892 = vsub.f32 1.0, %v891
          %v893 = vmul.f32 %v890, %v892
          %v894 = vadd.f32 %v890, %v893
          %vm895 = vweird.f32 %v890
          %v896 = vsel %vm895, %v890, %v894
          %v897 = vmul.f32 %v887, %v896
          %v898 = vmul.f32 %v889, %v896
          %v899 = vsub.f32 %v882, %v897
          %v900 = vsub.f32 %v883, %v898
          %v901 = vmul.f32 %v899, %v899
          %v902 = vmul.f32 %v900, %v900
          %903 = vadd.xlane.f32.xlu0 %v901
          %v904 = vpop.xlane.xlu0 %903
          %905 = vadd.xlane.f32.xlu0 %v902
          %v906 = vpop.xlane.xlu0 %905
          %v907 = vmul.f32 %v904, %v896
          %v908 = vmul.f32 %v906, %v896
          %v909 = vadd.f32 %v907, 1e-05
          %v910 = vadd.f32 %v908, 1e-05
          %v911 = vrsqrt.pop %v909
          %v912 = vmul.f32 %v911, %v909
          %v913 = vmul.f32 %v912, %v911
          %v914 = vmul.f32 0.5, %v913
          %v915 = vsub.f32 1.5, %v914
          %v916 = vmul.f32 %v911, %v915
          %vm917 = vweird.f32 %v909
          %vm918 = vweird.f32 %v911
          %vm919 = vmor %vm917, %vm918
          %v920 = vsel %vm919, %v911, %v916
          %v921 = vrsqrt.pop %v910
          %v922 = vmul.f32 %v921, %v910
          %v923 = vmul.f32 %v922, %v921
          %v924 = vmul.f32 0.5, %v923
          %v925 = vsub.f32 1.5, %v924
          %v926 = vmul.f32 %v921, %v925
          %vm927 = vweird.f32 %v910
          %vm928 = vweird.f32 %v921
          %vm929 = vmor %vm927, %vm928
          %v930 = vsel %vm929, %v921, %v926
          %v931 = vmul.f32 %v899, %v920
          %v932 = vmul.f32 %v900, %v930
          %v934 = vperm.slane %v884, 0
          %v936 = vmul.f32 %v931, %v934
          %v937 = vmul.f32 %v932, %v934
          %v939 = vperm.slane %v885, 0
          %v941 = vadd.f32 %v936, %v939
          %v942 = vadd.f32 %v937, %v939
          %943 = vst [vmem:[#allocation2] sm:$0xff] %v941
          %944 = vst [vmem:[#allocation2 + $0x8] sm:$0xff] %v942
        $region124: #{tpu_custom_call.1} parent=79 // pred_fallthru
          _
        %v945 = vld [vmem:[#allocation2] sm:$0xff]
        %v946 = vld [vmem:[#allocation2 + $0x8] sm:$0xff]
        %v947 = vpack.c.bf16 %v946, %v945
        %v948 = vld [vmem:[%s714] sm:$0xf]
        %v949 = vld [vmem:[%s714 + $0x4] sm:$0xf]
        %v950 = vld [vmem:[%s714 + $0x8] sm:$0xf]
        %v951 = vld [vmem:[%s714 + $0xc] sm:$0xf]
        %v952 = vld [vmem:[%s714 + $0x10] sm:$0xf]
        %v953 = vld [vmem:[%s714 + $0x14] sm:$0xf]
        %v954 = vld [vmem:[%s714 + $0x18] sm:$0xf]
        %v955 = vld [vmem:[%s714 + $0x1c] sm:$0xf]
        %v956 = vld [vmem:[%s714 + $0x20] sm:$0xf]
        %v957 = vld [vmem:[%s714 + $0x24] sm:$0xf]
        %v958 = vld [vmem:[%s714 + $0x28] sm:$0xf]
        %v959 = vld [vmem:[%s714 + $0x2c] sm:$0xf]
        %v960 = vld [vmem:[%s714 + $0x30] sm:$0xf]
        %v961 = vld [vmem:[%s714 + $0x34] sm:$0xf]
        %v962 = vld [vmem:[%s714 + $0x38] sm:$0xf]
        %v963 = vld [vmem:[%s714 + $0x3c] sm:$0xf]
        %v964 = vld [vmem:[%s724] sm:$0x1]
        %v966 = vperm.slane %v964, 0
        %v984 = vunpack.c.l.b16 %v948
        %v985 = vunpack.c.l.b16 %v949
        %v986 = vunpack.c.l.b16 %v950
        %v987 = vunpack.c.l.b16 %v951
        %v988 = vunpack.c.l.b16 %v952
        %v989 = vunpack.c.l.b16 %v953
        %v990 = vunpack.c.l.b16 %v954
        %v991 = vunpack.c.l.b16 %v955
        %v992 = vunpack.c.l.b16 %v956
        %v993 = vunpack.c.l.b16 %v957
        %v994 = vunpack.c.l.b16 %v958
        %v995 = vunpack.c.l.b16 %v959
        %v996 = vunpack.c.l.b16 %v960
        %v997 = vunpack.c.l.b16 %v961
        %v998 = vunpack.c.l.b16 %v962
        %v999 = vunpack.c.l.b16 %v963
        %v1000 = vpack.c.b16 %v985, %v984
        %v1001 = vpack.c.b16 %v987, %v986
        %v1002 = vpack.c.b16 %v989, %v988
        %v1003 = vpack.c.b16 %v991, %v990
        %v1004 = vpack.c.b16 %v993, %v992
        %v1005 = vpack.c.b16 %v995, %v994
        %v1006 = vpack.c.b16 %v997, %v996
        %v1007 = vpack.c.b16 %v999, %v998
        %1016 = vmatpush.bf16.msra.mxu0 %v1007
        %1017 = vmatpush.bf16.msra.mxu0 %v1006
        %1018 = vmatpush.bf16.msra.mxu0 %v1005
        %1019 = vmatpush.bf16.msra.mxu0 %v1004
        %1020 = vmatpush.bf16.msra.mxu0 %v1003
        %1021 = vmatpush.bf16.msra.mxu0 %v1002
        %1022 = vmatpush.bf16.msra.mxu0 %v1001
        %1023 = vmatpush.bf16.msra.mxu0 %v1000
        %1024 = vmatmul.bf16.gmra.mxu0 %v947
        %v1025 = vpop.f32.mrf.mxu0
        %v1026 = vadd.f32 %v966, %v1025
        %v1027 = vpop.f32.mrf.mxu0
        %v1028 = vadd.f32 %v966, %v1027
        %1029 = vdwg.mxu0
        %v1030 = vmul.f32 %v1026, 0.25
        %v1031 = vmul.f32 %v1028, 0.25
        %s1032 = scalar_lea.vmem %s714, 64 [#allocation9]
        %v1033 = vld [vmem:[%s1032] sm:$0xf]
        %v1034 = vld [vmem:[%s1032 + $0x4] sm:$0xf]
        %v1035 = vld [vmem:[%s1032 + $0x8] sm:$0xf]
        %v1036 = vld [vmem:[%s1032 + $0xc] sm:$0xf]
        %v1037 = vld [vmem:[%s1032 + $0x10] sm:$0xf]
        %v1038 = vld [vmem:[%s1032 + $0x14] sm:$0xf]
        %v1039 = vld [vmem:[%s1032 + $0x18] sm:$0xf]
        %v1040 = vld [vmem:[%s1032 + $0x1c] sm:$0xf]
        %v1041 = vld [vmem:[%s1032 + $0x20] sm:$0xf]
        %v1042 = vld [vmem:[%s1032 + $0x24] sm:$0xf]
        %v1043 = vld [vmem:[%s1032 + $0x28] sm:$0xf]
        %v1044 = vld [vmem:[%s1032 + $0x2c] sm:$0xf]
        %v1045 = vld [vmem:[%s1032 + $0x30] sm:$0xf]
        %v1046 = vld [vmem:[%s1032 + $0x34] sm:$0xf]
        %v1047 = vld [vmem:[%s1032 + $0x38] sm:$0xf]
        %v1048 = vld [vmem:[%s1032 + $0x3c] sm:$0xf]
        %s1049 = scalar_lea.vmem %s724, 1 [#allocation11]
        %v1050 = vld [vmem:[%s1049] sm:$0x1]
        %v1052 = vperm.slane %v1050, 0
        %v1070 = vunpack.c.l.b16 %v1033
        %v1071 = vunpack.c.l.b16 %v1034
        %v1072 = vunpack.c.l.b16 %v1035
        %v1073 = vunpack.c.l.b16 %v1036
        %v1074 = vunpack.c.l.b16 %v1037
        %v1075 = vunpack.c.l.b16 %v1038
        %v1076 = vunpack.c.l.b16 %v1039
        %v1077 = vunpack.c.l.b16 %v1040
        %v1078 = vunpack.c.l.b16 %v1041
        %v1079 = vunpack.c.l.b16 %v1042
        %v1080 = vunpack.c.l.b16 %v1043
        %v1081 = vunpack.c.l.b16 %v1044
        %v1082 = vunpack.c.l.b16 %v1045
        %v1083 = vunpack.c.l.b16 %v1046
        %v1084 = vunpack.c.l.b16 %v1047
        %v1085 = vunpack.c.l.b16 %v1048
        %v1086 = vpack.c.b16 %v1071, %v1070
        %v1087 = vpack.c.b16 %v1073, %v1072
        %v1088 = vpack.c.b16 %v1075, %v1074
        %v1089 = vpack.c.b16 %v1077, %v1076
        %v1090 = vpack.c.b16 %v1079, %v1078
        %v1091 = vpack.c.b16 %v1081, %v1080
        %v1092 = vpack.c.b16 %v1083, %v1082
        %v1093 = vpack.c.b16 %v1085, %v1084
        %1102 = vmatpush.bf16.msra.mxu0 %v1093
        %1103 = vmatpush.bf16.msra.mxu0 %v1092
        %1104 = vmatpush.bf16.msra.mxu0 %v1091
        %1105 = vmatpush.bf16.msra.mxu0 %v1090
        %1106 = vmatpush.bf16.msra.mxu0 %v1089
        %1107 = vmatpush.bf16.msra.mxu0 %v1088
        %1108 = vmatpush.bf16.msra.mxu0 %v1087
        %1109 = vmatpush.bf16.msra.mxu0 %v1086
        %1110 = vmatmul.bf16.gmra.mxu0 %v947
        %v1111 = vpop.f32.mrf.mxu0
        %v1112 = vadd.f32 %v1052, %v1111
        %v1113 = vpop.f32.mrf.mxu0
        %v1114 = vadd.f32 %v1052, %v1113
        %1115 = vdwg.mxu0
        %s1116 = scalar_lea.vmem %s714, 128 [#allocation9]
        %v1117 = vld [vmem:[%s1116] sm:$0xf]
        %v1118 = vld [vmem:[%s1116 + $0x4] sm:$0xf]
        %v1119 = vld [vmem:[%s1116 + $0x8] sm:$0xf]
        %v1120 = vld [vmem:[%s1116 + $0xc] sm:$0xf]
        %v1121 = vld [vmem:[%s1116 + $0x10] sm:$0xf]
        %v1122 = vld [vmem:[%s1116 + $0x14] sm:$0xf]
        %v1123 = vld [vmem:[%s1116 + $0x18] sm:$0xf]
        %v1124 = vld [vmem:[%s1116 + $0x1c] sm:$0xf]
        %v1125 = vld [vmem:[%s1116 + $0x20] sm:$0xf]
        %v1126 = vld [vmem:[%s1116 + $0x24] sm:$0xf]
        %v1127 = vld [vmem:[%s1116 + $0x28] sm:$0xf]
        %v1128 = vld [vmem:[%s1116 + $0x2c] sm:$0xf]
        %v1129 = vld [vmem:[%s1116 + $0x30] sm:$0xf]
        %v1130 = vld [vmem:[%s1116 + $0x34] sm:$0xf]
        %v1131 = vld [vmem:[%s1116 + $0x38] sm:$0xf]
        %v1132 = vld [vmem:[%s1116 + $0x3c] sm:$0xf]
        %s1133 = scalar_lea.vmem %s724, 2 [#allocation11]
        %v1134 = vld [vmem:[%s1133] sm:$0x1]
        %v1136 = vperm.slane %v1134, 0
        %v1154 = vunpack.c.l.b16 %v1117
        %v1155 = vunpack.c.l.b16 %v1118
        %v1156 = vunpack.c.l.b16 %v1119
        %v1157 = vunpack.c.l.b16 %v1120
        %v1158 = vunpack.c.l.b16 %v1121
        %v1159 = vunpack.c.l.b16 %v1122
        %v1160 = vunpack.c.l.b16 %v1123
        %v1161 = vunpack.c.l.b16 %v1124
        %v1162 = vunpack.c.l.b16 %v1125
        %v1163 = vunpack.c.l.b16 %v1126
        %v1164 = vunpack.c.l.b16 %v1127
        %v1165 = vunpack.c.l.b16 %v1128
        %v1166 = vunpack.c.l.b16 %v1129
        %v1167 = vunpack.c.l.b16 %v1130
        %v1168 = vunpack.c.l.b16 %v1131
        %v1169 = vunpack.c.l.b16 %v1132
        %v1170 = vpack.c.b16 %v1155, %v1154
        %v1171 = vpack.c.b16 %v1157, %v1156
        %v1172 = vpack.c.b16 %v1159, %v1158
        %v1173 = vpack.c.b16 %v1161, %v1160
        %v1174 = vpack.c.b16 %v1163, %v1162
        %v1175 = vpack.c.b16 %v1165, %v1164
        %v1176 = vpack.c.b16 %v1167, %v1166
        %v1177 = vpack.c.b16 %v1169, %v1168
        %1186 = vmatpush.bf16.msra.mxu0 %v1177
        %1187 = vmatpush.bf16.msra.mxu0 %v1176
        %1188 = vmatpush.bf16.msra.mxu0 %v1175
        %1189 = vmatpush.bf16.msra.mxu0 %v1174
        %1190 = vmatpush.bf16.msra.mxu0 %v1173
        %1191 = vmatpush.bf16.msra.mxu0 %v1172
        %1192 = vmatpush.bf16.msra.mxu0 %v1171
        %1193 = vmatpush.bf16.msra.mxu0 %v1170
        %1194 = vmatmul.bf16.gmra.mxu0 %v947
        %v1195 = vpop.f32.mrf.mxu0
        %v1196 = vadd.f32 %v1136, %v1195
        %v1197 = vpop.f32.mrf.mxu0
        %v1198 = vadd.f32 %v1136, %v1197
        %1199 = vdwg.mxu0
        %1201 = vrot.lane.b32.xlu0 %v1030, 112
        %v1202 = vpop.permute.xlu0 %1201
        %1204 = vrot.lane.b32.xlu0 %v1030, 96
        %v1205 = vpop.permute.xlu0 %1204
        %1207 = vrot.lane.b32.xlu0 %v1030, 80
        %v1208 = vpop.permute.xlu0 %1207
        %1210 = vrot.lane.b32.xlu0 %v1030, 64
        %v1211 = vpop.permute.xlu0 %1210
        %1213 = vrot.lane.b32.xlu0 %v1030, 48
        %v1214 = vpop.permute.xlu0 %1213
        %1216 = vrot.lane.b32.xlu0 %v1030, 32
        %v1217 = vpop.permute.xlu0 %1216
        %1219 = vrot.lane.b32.xlu0 %v1030, 16
        %v1220 = vpop.permute.xlu0 %1219
        %v1222 = vpack.c.bf16 %v1030, %v1030
        %v1223 = vpack.c.bf16 %v1202, %v1202
        %v1224 = vpack.c.bf16 %v1205, %v1205
        %v1225 = vpack.c.bf16 %v1208, %v1208
        %v1226 = vpack.c.bf16 %v1211, %v1211
        %v1227 = vpack.c.bf16 %v1214, %v1214
        %v1228 = vpack.c.bf16 %v1217, %v1217
        %v1229 = vpack.c.bf16 %v1220, %v1220
        %1231 = vrot.lane.b32.xlu0 %v1112, 112
        %v1232 = vpop.permute.xlu0 %1231
        %1234 = vrot.lane.b32.xlu0 %v1112, 96
        %v1235 = vpop.permute.xlu0 %1234
        %1237 = vrot.lane.b32.xlu0 %v1112, 80
        %v1238 = vpop.permute.xlu0 %1237
        %1240 = vrot.lane.b32.xlu0 %v1112, 64
        %v1241 = vpop.permute.xlu0 %1240
        %1243 = vrot.lane.b32.xlu0 %v1112, 48
        %v1244 = vpop.permute.xlu0 %1243
        %1246 = vrot.lane.b32.xlu0 %v1112, 32
        %v1247 = vpop.permute.xlu0 %1246
        %1249 = vrot.lane.b32.xlu0 %v1112, 16
        %v1250 = vpop.permute.xlu0 %1249
        %v1252 = vpack.c.bf16 %v1112, %v1112
        %v1253 = vpack.c.bf16 %v1232, %v1232
        %v1254 = vpack.c.bf16 %v1235, %v1235
        %v1255 = vpack.c.bf16 %v1238, %v1238
        %v1256 = vpack.c.bf16 %v1241, %v1241
        %v1257 = vpack.c.bf16 %v1244, %v1244
        %v1258 = vpack.c.bf16 %v1247, %v1247
        %v1259 = vpack.c.bf16 %v1250, %v1250
        %1261 = vrot.lane.b32.xlu0 %v1196, 112
        %v1262 = vpop.permute.xlu0 %1261
        %1264 = vrot.lane.b32.xlu0 %v1196, 96
        %v1265 = vpop.permute.xlu0 %1264
        %1267 = vrot.lane.b32.xlu0 %v1196, 80
        %v1268 = vpop.permute.xlu0 %1267
        %1270 = vrot.lane.b32.xlu0 %v1196, 64
        %v1271 = vpop.permute.xlu0 %1270
        %1273 = vrot.lane.b32.xlu0 %v1196, 48
        %v1274 = vpop.permute.xlu0 %1273
        %1276 = vrot.lane.b32.xlu0 %v1196, 32
        %v1277 = vpop.permute.xlu0 %1276
        %1279 = vrot.lane.b32.xlu0 %v1196, 16
        %v1280 = vpop.permute.xlu0 %1279
        %v1282 = vpack.c.bf16 %v1196, %v1196
        %v1283 = vpack.c.bf16 %v1262, %v1262
        %v1284 = vpack.c.bf16 %v1265, %v1265
        %v1285 = vpack.c.bf16 %v1268, %v1268
        %v1286 = vpack.c.bf16 %v1271, %v1271
        %v1287 = vpack.c.bf16 %v1274, %v1274
        %v1288 = vpack.c.bf16 %v1277, %v1277
        %v1289 = vpack.c.bf16 %v1280, %v1280
        %vm1290 = vcmask 130048
        %v1292 = vsel %vm1290, %v1222, 0
        %v1295 = vsel %vm1290, %v1252, 0
        %1297 = vmatpush.bf16.xpose.msra.mxu0 0
        %1298 = vmatpush.bf16.xpose.msra.mxu0 0
        %1299 = vmatpush.bf16.xpose.msra.mxu0 0
        %1300 = vmatpush.bf16.xpose.msra.mxu0 0
        %1301 = vmatpush.bf16.xpose.msra.mxu0 0
        %1302 = vmatpush.bf16.xpose.msra.mxu0 0
        %1303 = vmatpush.bf16.xpose.msra.mxu0 0
        %1304 = vmatpush.bf16.xpose.msra.mxu0 %v1295
        %1305 = vmatmul.bf16.gmra.mxu0 %v1292
        %v1306 = vpop.f32.mrf.mxu0
        %v1307 = vadd.f32 0.0, %v1306
        %v1308 = vpop.f32.mrf.mxu0
        %1309 = vdwg.mxu0
        %v1311 = vsel %vm1290, %v1223, 0
        %v1314 = vsel %vm1290, %v1253, 0
        %1316 = vmatpush.bf16.xpose.msra.mxu0 0
        %1317 = vmatpush.bf16.xpose.msra.mxu0 0
        %1318 = vmatpush.bf16.xpose.msra.mxu0 0
        %1319 = vmatpush.bf16.xpose.msra.mxu0 0
        %1320 = vmatpush.bf16.xpose.msra.mxu0 0
        %1321 = vmatpush.bf16.xpose.msra.mxu0 0
        %1322 = vmatpush.bf16.xpose.msra.mxu0 0
        %1323 = vmatpush.bf16.xpose.msra.mxu0 %v1314
        %1324 = vmatmul.bf16.gmra.mxu0 %v1311
        %v1325 = vpop.f32.mrf.mxu0
        %v1326 = vadd.f32 0.0, %v1325
        %v1327 = vpop.f32.mrf.mxu0
        %1328 = vdwg.mxu0
        %v1330 = vsel %vm1290, %v1224, 0
        %v1333 = vsel %vm1290, %v1254, 0
        %1335 = vmatpush.bf16.xpose.msra.mxu0 0
        %1336 = vmatpush.bf16.xpose.msra.mxu0 0
        %1337 = vmatpush.bf16.xpose.msra.mxu0 0
        %1338 = vmatpush.bf16.xpose.msra.mxu0 0
        %1339 = vmatpush.bf16.xpose.msra.mxu0 0
        %1340 = vmatpush.bf16.xpose.msra.mxu0 0
        %1341 = vmatpush.bf16.xpose.msra.mxu0 0
        %1342 = vmatpush.bf16.xpose.msra.mxu0 %v1333
        %1343 = vmatmul.bf16.gmra.mxu0 %v1330
        %v1344 = vpop.f32.mrf.mxu0
        %v1345 = vadd.f32 0.0, %v1344
        %v1346 = vpop.f32.mrf.mxu0
        %1347 = vdwg.mxu0
        %v1349 = vsel %vm1290, %v1225, 0
        %v1352 = vsel %vm1290, %v1255, 0
        %1354 = vmatpush.bf16.xpose.msra.mxu0 0
        %1355 = vmatpush.bf16.xpose.msra.mxu0 0
        %1356 = vmatpush.bf16.xpose.msra.mxu0 0
        %1357 = vmatpush.bf16.xpose.msra.mxu0 0
        %1358 = vmatpush.bf16.xpose.msra.mxu0 0
        %1359 = vmatpush.bf16.xpose.msra.mxu0 0
        %1360 = vmatpush.bf16.xpose.msra.mxu0 0
        %1361 = vmatpush.bf16.xpose.msra.mxu0 %v1352
        %1362 = vmatmul.bf16.gmra.mxu0 %v1349
        %v1363 = vpop.f32.mrf.mxu0
        %v1364 = vadd.f32 0.0, %v1363
        %v1365 = vpop.f32.mrf.mxu0
        %1366 = vdwg.mxu0
        %v1368 = vsel %vm1290, %v1226, 0
        %v1371 = vsel %vm1290, %v1256, 0
        %1373 = vmatpush.bf16.xpose.msra.mxu0 0
        %1374 = vmatpush.bf16.xpose.msra.mxu0 0
        %1375 = vmatpush.bf16.xpose.msra.mxu0 0
        %1376 = vmatpush.bf16.xpose.msra.mxu0 0
        %1377 = vmatpush.bf16.xpose.msra.mxu0 0
        %1378 = vmatpush.bf16.xpose.msra.mxu0 0
        %1379 = vmatpush.bf16.xpose.msra.mxu0 0
        %1380 = vmatpush.bf16.xpose.msra.mxu0 %v1371
        %1381 = vmatmul.bf16.gmra.mxu0 %v1368
        %v1382 = vpop.f32.mrf.mxu0
        %v1383 = vadd.f32 0.0, %v1382
        %v1384 = vpop.f32.mrf.mxu0
        %1385 = vdwg.mxu0
        %v1387 = vsel %vm1290, %v1227, 0
        %v1390 = vsel %vm1290, %v1257, 0
        %1392 = vmatpush.bf16.xpose.msra.mxu0 0
        %1393 = vmatpush.bf16.xpose.msra.mxu0 0
        %1394 = vmatpush.bf16.xpose.msra.mxu0 0
        %1395 = vmatpush.bf16.xpose.msra.mxu0 0
        %1396 = vmatpush.bf16.xpose.msra.mxu0 0
        %1397 = vmatpush.bf16.xpose.msra.mxu0 0
        %1398 = vmatpush.bf16.xpose.msra.mxu0 0
        %1399 = vmatpush.bf16.xpose.msra.mxu0 %v1390
        %1400 = vmatmul.bf16.gmra.mxu0 %v1387
        %v1401 = vpop.f32.mrf.mxu0
        %v1402 = vadd.f32 0.0, %v1401
        %v1403 = vpop.f32.mrf.mxu0
        %1404 = vdwg.mxu0
        %v1406 = vsel %vm1290, %v1228, 0
        %v1409 = vsel %vm1290, %v1258, 0
        %1411 = vmatpush.bf16.xpose.msra.mxu0 0
        %1412 = vmatpush.bf16.xpose.msra.mxu0 0
        %1413 = vmatpush.bf16.xpose.msra.mxu0 0
        %1414 = vmatpush.bf16.xpose.msra.mxu0 0
        %1415 = vmatpush.bf16.xpose.msra.mxu0 0
        %1416 = vmatpush.bf16.xpose.msra.mxu0 0
        %1417 = vmatpush.bf16.xpose.msra.mxu0 0
        %1418 = vmatpush.bf16.xpose.msra.mxu0 %v1409
        %1419 = vmatmul.bf16.gmra.mxu0 %v1406
        %v1420 = vpop.f32.mrf.mxu0
        %v1421 = vadd.f32 0.0, %v1420
        %v1422 = vpop.f32.mrf.mxu0
        %1423 = vdwg.mxu0
        %v1425 = vsel %vm1290, %v1229, 0
        %v1428 = vsel %vm1290, %v1259, 0
        %1430 = vmatpush.bf16.xpose.msra.mxu0 0
        %1431 = vmatpush.bf16.xpose.msra.mxu0 0
        %1432 = vmatpush.bf16.xpose.msra.mxu0 0
        %1433 = vmatpush.bf16.xpose.msra.mxu0 0
        %1434 = vmatpush.bf16.xpose.msra.mxu0 0
        %1435 = vmatpush.bf16.xpose.msra.mxu0 0
        %1436 = vmatpush.bf16.xpose.msra.mxu0 0
        %1437 = vmatpush.bf16.xpose.msra.mxu0 %v1428
        %1438 = vmatmul.bf16.gmra.mxu0 %v1425
        %v1439 = vpop.f32.mrf.mxu0
        %v1440 = vadd.f32 0.0, %v1439
        %v1441 = vpop.f32.mrf.mxu0
        %1442 = vdwg.mxu0
        %vm1443 = vcmask 64512
        %v1444 = vsel %vm1443, %v1307, -inf
        %1445 = vmax.xlane.f32.xlu0 %v1444
        %v1446 = vpop.xlane.xlu0 %1445
        %v1447 = vsel %vm1443, %v1326, -inf
        %1448 = vmax.xlane.f32.xlu0 %v1447
        %v1449 = vpop.xlane.xlu0 %1448
        %v1450 = vsel %vm1443, %v1345, -inf
        %1451 = vmax.xlane.f32.xlu0 %v1450
        %v1452 = vpop.xlane.xlu0 %1451
        %v1453 = vsel %vm1443, %v1364, -inf
        %1454 = vmax.xlane.f32.xlu0 %v1453
        %v1455 = vpop.xlane.xlu0 %1454
        %v1456 = vsel %vm1443, %v1383, -inf
        %1457 = vmax.xlane.f32.xlu0 %v1456
        %v1458 = vpop.xlane.xlu0 %1457
        %v1459 = vsel %vm1443, %v1402, -inf
        %1460 = vmax.xlane.f32.xlu0 %v1459
        %v1461 = vpop.xlane.xlu0 %1460
        %v1462 = vsel %vm1443, %v1421, -inf
        %1463 = vmax.xlane.f32.xlu0 %v1462
        %v1464 = vpop.xlane.xlu0 %1463
        %v1465 = vsel %vm1443, %v1440, -inf
        %1466 = vmax.xlane.f32.xlu0 %v1465
        %v1467 = vpop.xlane.xlu0 %1466
        %v1468 = vsub.f32 %v1307, %v1446
        %v1469 = vsub.f32 %v1326, %v1449
        %v1470 = vsub.f32 %v1345, %v1452
        %v1471 = vsub.f32 %v1364, %v1455
        %v1472 = vsub.f32 %v1383, %v1458
        %v1473 = vsub.f32 %v1402, %v1461
        %v1474 = vsub.f32 %v1421, %v1464
        %v1475 = vsub.f32 %v1440, %v1467
        %v1476 = vmul.f32 %v1468, 1.442695
        %v1477 = vpow.pop %v1476
        %v1478 = vmul.f32 %v1469, 1.442695
        %v1479 = vpow.pop %v1478
        %v1480 = vmul.f32 %v1470, 1.442695
        %v1481 = vpow.pop %v1480
        %v1482 = vmul.f32 %v1471, 1.442695
        %v1483 = vpow.pop %v1482
        %v1484 = vmul.f32 %v1472, 1.442695
        %v1485 = vpow.pop %v1484
        %v1486 = vmul.f32 %v1473, 1.442695
        %v1487 = vpow.pop %v1486
        %v1488 = vmul.f32 %v1474, 1.442695
        %v1489 = vpow.pop %v1488
        %v1490 = vmul.f32 %v1475, 1.442695
        %v1491 = vpow.pop %v1490
        %v1492 = vsel %vm1443, %v1477, 0.0
        %1493 = vadd.xlane.f32.xlu0 %v1492
        %v1494 = vpop.xlane.xlu0 %1493
        %v1495 = vsel %vm1443, %v1479, 0.0
        %1496 = vadd.xlane.f32.xlu0 %v1495
        %v1497 = vpop.xlane.xlu0 %1496
        %v1498 = vsel %vm1443, %v1481, 0.0
        %1499 = vadd.xlane.f32.xlu0 %v1498
        %v1500 = vpop.xlane.xlu0 %1499
        %v1501 = vsel %vm1443, %v1483, 0.0
        %1502 = vadd.xlane.f32.xlu0 %v1501
        %v1503 = vpop.xlane.xlu0 %1502
        %v1504 = vsel %vm1443, %v1485, 0.0
        %1505 = vadd.xlane.f32.xlu0 %v1504
        %v1506 = vpop.xlane.xlu0 %1505
        %v1507 = vsel %vm1443, %v1487, 0.0
        %1508 = vadd.xlane.f32.xlu0 %v1507
        %v1509 = vpop.xlane.xlu0 %1508
        %v1510 = vsel %vm1443, %v1489, 0.0
        %1511 = vadd.xlane.f32.xlu0 %v1510
        %v1512 = vpop.xlane.xlu0 %1511
        %v1513 = vsel %vm1443, %v1491, 0.0
        %1514 = vadd.xlane.f32.xlu0 %v1513
        %v1515 = vpop.xlane.xlu0 %1514
        %v1516 = vrcp.pop %v1494
        %v1517 = vrcp.pop %v1497
        %v1518 = vrcp.pop %v1500
        %v1519 = vrcp.pop %v1503
        %v1520 = vrcp.pop %v1506
        %v1521 = vrcp.pop %v1509
        %v1522 = vrcp.pop %v1512
        %v1523 = vrcp.pop %v1515
        %v1524 = vmul.f32 %v1477, %v1516
        %v1525 = vmul.f32 %v1479, %v1517
        %v1526 = vmul.f32 %v1481, %v1518
        %v1527 = vmul.f32 %v1483, %v1519
        %v1528 = vmul.f32 %v1485, %v1520
        %v1529 = vmul.f32 %v1487, %v1521
        %v1530 = vmul.f32 %v1489, %v1522
        %v1531 = vmul.f32 %v1491, %v1523
        %v1532 = vpack.c.bf16 %v1524, %v1524
        %v1533 = vpack.c.bf16 %v1525, %v1525
        %v1534 = vpack.c.bf16 %v1526, %v1526
        %v1535 = vpack.c.bf16 %v1527, %v1527
        %v1536 = vpack.c.bf16 %v1528, %v1528
        %v1537 = vpack.c.bf16 %v1529, %v1529
        %v1538 = vpack.c.bf16 %v1530, %v1530
        %v1539 = vpack.c.bf16 %v1531, %v1531
        %v1541 = vsel %vm1443, %v1532, 0
        %vm1543 = vcmask 1043456
        %v1545 = vsel %vm1543, %v1282, 0
        %1547 = vmatpush.bf16.msra.mxu0 0
        %1548 = vmatpush.bf16.msra.mxu0 0
        %1549 = vmatpush.bf16.msra.mxu0 0
        %1550 = vmatpush.bf16.msra.mxu0 0
        %1551 = vmatpush.bf16.msra.mxu0 0
        %1552 = vmatpush.bf16.msra.mxu0 0
        %1553 = vmatpush.bf16.msra.mxu0 0
        %1554 = vmatpush.bf16.msra.mxu0 %v1545
        %1555 = vmatmul.bf16.gmra.mxu0 %v1541
        %v1556 = vpop.f32.mrf.mxu0
        %v1557 = vadd.f32 0.0, %v1556
        %v1558 = vpop.f32.mrf.mxu0
        %1559 = vdwg.mxu0
        %v1561 = vsel %vm1443, %v1533, 0
        %v1564 = vsel %vm1543, %v1283, 0
        %1566 = vmatpush.bf16.msra.mxu0 0
        %1567 = vmatpush.bf16.msra.mxu0 0
        %1568 = vmatpush.bf16.msra.mxu0 0
        %1569 = vmatpush.bf16.msra.mxu0 0
        %1570 = vmatpush.bf16.msra.mxu0 0
        %1571 = vmatpush.bf16.msra.mxu0 0
        %1572 = vmatpush.bf16.msra.mxu0 0
        %1573 = vmatpush.bf16.msra.mxu0 %v1564
        %1574 = vmatmul.bf16.gmra.mxu0 %v1561
        %v1575 = vpop.f32.mrf.mxu0
        %v1576 = vadd.f32 0.0, %v1575
        %v1577 = vpop.f32.mrf.mxu0
        %1578 = vdwg.mxu0
        %v1580 = vsel %vm1443, %v1534, 0
        %v1583 = vsel %vm1543, %v1284, 0
        %1585 = vmatpush.bf16.msra.mxu0 0
        %1586 = vmatpush.bf16.msra.mxu0 0
        %1587 = vmatpush.bf16.msra.mxu0 0
        %1588 = vmatpush.bf16.msra.mxu0 0
        %1589 = vmatpush.bf16.msra.mxu0 0
        %1590 = vmatpush.bf16.msra.mxu0 0
        %1591 = vmatpush.bf16.msra.mxu0 0
        %1592 = vmatpush.bf16.msra.mxu0 %v1583
        %1593 = vmatmul.bf16.gmra.mxu0 %v1580
        %v1594 = vpop.f32.mrf.mxu0
        %v1595 = vadd.f32 0.0, %v1594
        %v1596 = vpop.f32.mrf.mxu0
        %1597 = vdwg.mxu0
        %v1599 = vsel %vm1443, %v1535, 0
        %v1602 = vsel %vm1543, %v1285, 0
        %1604 = vmatpush.bf16.msra.mxu0 0
        %1605 = vmatpush.bf16.msra.mxu0 0
        %1606 = vmatpush.bf16.msra.mxu0 0
        %1607 = vmatpush.bf16.msra.mxu0 0
        %1608 = vmatpush.bf16.msra.mxu0 0
        %1609 = vmatpush.bf16.msra.mxu0 0
        %1610 = vmatpush.bf16.msra.mxu0 0
        %1611 = vmatpush.bf16.msra.mxu0 %v1602
        %1612 = vmatmul.bf16.gmra.mxu0 %v1599
        %v1613 = vpop.f32.mrf.mxu0
        %v1614 = vadd.f32 0.0, %v1613
        %v1615 = vpop.f32.mrf.mxu0
        %1616 = vdwg.mxu0
        %v1618 = vsel %vm1443, %v1536, 0
        %v1621 = vsel %vm1543, %v1286, 0
        %1623 = vmatpush.bf16.msra.mxu0 0
        %1624 = vmatpush.bf16.msra.mxu0 0
        %1625 = vmatpush.bf16.msra.mxu0 0
        %1626 = vmatpush.bf16.msra.mxu0 0
        %1627 = vmatpush.bf16.msra.mxu0 0
        %1628 = vmatpush.bf16.msra.mxu0 0
        %1629 = vmatpush.bf16.msra.mxu0 0
        %1630 = vmatpush.bf16.msra.mxu0 %v1621
        %1631 = vmatmul.bf16.gmra.mxu0 %v1618
        %v1632 = vpop.f32.mrf.mxu0
        %v1633 = vadd.f32 0.0, %v1632
        %v1634 = vpop.f32.mrf.mxu0
        %1635 = vdwg.mxu0
        %v1637 = vsel %vm1443, %v1537, 0
        %v1640 = vsel %vm1543, %v1287, 0
        %1642 = vmatpush.bf16.msra.mxu0 0
        %1643 = vmatpush.bf16.msra.mxu0 0
        %1644 = vmatpush.bf16.msra.mxu0 0
        %1645 = vmatpush.bf16.msra.mxu0 0
        %1646 = vmatpush.bf16.msra.mxu0 0
        %1647 = vmatpush.bf16.msra.mxu0 0
        %1648 = vmatpush.bf16.msra.mxu0 0
        %1649 = vmatpush.bf16.msra.mxu0 %v1640
        %1650 = vmatmul.bf16.gmra.mxu0 %v1637
        %v1651 = vpop.f32.mrf.mxu0
        %v1652 = vadd.f32 0.0, %v1651
        %v1653 = vpop.f32.mrf.mxu0
        %1654 = vdwg.mxu0
        %v1656 = vsel %vm1443, %v1538, 0
        %v1659 = vsel %vm1543, %v1288, 0
        %1661 = vmatpush.bf16.msra.mxu0 0
        %1662 = vmatpush.bf16.msra.mxu0 0
        %1663 = vmatpush.bf16.msra.mxu0 0
        %1664 = vmatpush.bf16.msra.mxu0 0
        %1665 = vmatpush.bf16.msra.mxu0 0
        %1666 = vmatpush.bf16.msra.mxu0 0
        %1667 = vmatpush.bf16.msra.mxu0 0
        %1668 = vmatpush.bf16.msra.mxu0 %v1659
        %1669 = vmatmul.bf16.gmra.mxu0 %v1656
        %v1670 = vpop.f32.mrf.mxu0
        %v1671 = vadd.f32 0.0, %v1670
        %v1672 = vpop.f32.mrf.mxu0
        %1673 = vdwg.mxu0
        %v1675 = vsel %vm1443, %v1539, 0
        %v1678 = vsel %vm1543, %v1289, 0
        %1680 = vmatpush.bf16.msra.mxu0 0
        %1681 = vmatpush.bf16.msra.mxu0 0
        %1682 = vmatpush.bf16.msra.mxu0 0
        %1683 = vmatpush.bf16.msra.mxu0 0
        %1684 = vmatpush.bf16.msra.mxu0 0
        %1685 = vmatpush.bf16.msra.mxu0 0
        %1686 = vmatpush.bf16.msra.mxu0 0
        %1687 = vmatpush.bf16.msra.mxu0 %v1678
        %1688 = vmatmul.bf16.gmra.mxu0 %v1675
        %v1689 = vpop.f32.mrf.mxu0
        %v1690 = vadd.f32 0.0, %v1689
        %v1691 = vpop.f32.mrf.mxu0
        %1692 = vdwg.mxu0
        %1694 = vrot.lane.b32.xlu0 %v1576, 16
        %v1695 = vpop.permute.xlu0 %1694
        %1698 = vrot.lane.b32.xlu0 %v1595, 32
        %v1699 = vpop.permute.xlu0 %1698
        %1702 = vrot.lane.b32.xlu0 %v1614, 48
        %v1703 = vpop.permute.xlu0 %1702
        %1706 = vrot.lane.b32.xlu0 %v1633, 64
        %v1707 = vpop.permute.xlu0 %1706
        %1710 = vrot.lane.b32.xlu0 %v1652, 80
        %v1711 = vpop.permute.xlu0 %1710
        %1714 = vrot.lane.b32.xlu0 %v1671, 96
        %v1715 = vpop.permute.xlu0 %1714
        %1718 = vrot.lane.b32.xlu0 %v1690, 112
        %v1719 = vpop.permute.xlu0 %1718
        %v1721 = vsel %vm1290, %v1557, %v1695
        %vm1722 = vcmask 261120
        %v1723 = vsel %vm1722, %v1721, %v1699
        %vm1724 = vcmask 392192
        %v1725 = vsel %vm1724, %v1723, %v1703
        %vm1726 = vcmask 523264
        %v1727 = vsel %vm1726, %v1725, %v1707
        %vm1728 = vcmask 654336
        %v1729 = vsel %vm1728, %v1727, %v1711
        %vm1730 = vcmask 785408
        %v1731 = vsel %vm1730, %v1729, %v1715
        %vm1732 = vcmask 916480
        %v1733 = vsel %vm1732, %v1731, %v1719
        %1735 = vrot.lane.b32.xlu0 %v1031, 112
        %v1736 = vpop.permute.xlu0 %1735
        %1738 = vrot.lane.b32.xlu0 %v1031, 96
        %v1739 = vpop.permute.xlu0 %1738
        %1741 = vrot.lane.b32.xlu0 %v1031, 80
        %v1742 = vpop.permute.xlu0 %1741
        %1744 = vrot.lane.b32.xlu0 %v1031, 64
        %v1745 = vpop.permute.xlu0 %1744
        %1747 = vrot.lane.b32.xlu0 %v1031, 48
        %v1748 = vpop.permute.xlu0 %1747
        %1750 = vrot.lane.b32.xlu0 %v1031, 32
        %v1751 = vpop.permute.xlu0 %1750
        %1753 = vrot.lane.b32.xlu0 %v1031, 16
        %v1754 = vpop.permute.xlu0 %1753
        %v1756 = vpack.c.bf16 %v1031, %v1031
        %v1757 = vpack.c.bf16 %v1736, %v1736
        %v1758 = vpack.c.bf16 %v1739, %v1739
        %v1759 = vpack.c.bf16 %v1742, %v1742
        %v1760 = vpack.c.bf16 %v1745, %v1745
        %v1761 = vpack.c.bf16 %v1748, %v1748
        %v1762 = vpack.c.bf16 %v1751, %v1751
        %v1763 = vpack.c.bf16 %v1754, %v1754
        %1765 = vrot.lane.b32.xlu0 %v1114, 112
        %v1766 = vpop.permute.xlu0 %1765
        %1768 = vrot.lane.b32.xlu0 %v1114, 96
        %v1769 = vpop.permute.xlu0 %1768
        %1771 = vrot.lane.b32.xlu0 %v1114, 80
        %v1772 = vpop.permute.xlu0 %1771
        %1774 = vrot.lane.b32.xlu0 %v1114, 64
        %v1775 = vpop.permute.xlu0 %1774
        %1777 = vrot.lane.b32.xlu0 %v1114, 48
        %v1778 = vpop.permute.xlu0 %1777
        %1780 = vrot.lane.b32.xlu0 %v1114, 32
        %v1781 = vpop.permute.xlu0 %1780
        %1783 = vrot.lane.b32.xlu0 %v1114, 16
        %v1784 = vpop.permute.xlu0 %1783
        %v1786 = vpack.c.bf16 %v1114, %v1114
        %v1787 = vpack.c.bf16 %v1766, %v1766
        %v1788 = vpack.c.bf16 %v1769, %v1769
        %v1789 = vpack.c.bf16 %v1772, %v1772
        %v1790 = vpack.c.bf16 %v1775, %v1775
        %v1791 = vpack.c.bf16 %v1778, %v1778
        %v1792 = vpack.c.bf16 %v1781, %v1781
        %v1793 = vpack.c.bf16 %v1784, %v1784
        %1795 = vrot.lane.b32.xlu0 %v1198, 112
        %v1796 = vpop.permute.xlu0 %1795
        %1798 = vrot.lane.b32.xlu0 %v1198, 96
        %v1799 = vpop.permute.xlu0 %1798
        %1801 = vrot.lane.b32.xlu0 %v1198, 80
        %v1802 = vpop.permute.xlu0 %1801
        %1804 = vrot.lane.b32.xlu0 %v1198, 64
        %v1805 = vpop.permute.xlu0 %1804
        %1807 = vrot.lane.b32.xlu0 %v1198, 48
        %v1808 = vpop.permute.xlu0 %1807
        %1810 = vrot.lane.b32.xlu0 %v1198, 32
        %v1811 = vpop.permute.xlu0 %1810
        %1813 = vrot.lane.b32.xlu0 %v1198, 16
        %v1814 = vpop.permute.xlu0 %1813
        %v1816 = vpack.c.bf16 %v1198, %v1198
        %v1817 = vpack.c.bf16 %v1796, %v1796
        %v1818 = vpack.c.bf16 %v1799, %v1799
        %v1819 = vpack.c.bf16 %v1802, %v1802
        %v1820 = vpack.c.bf16 %v1805, %v1805
        %v1821 = vpack.c.bf16 %v1808, %v1808
        %v1822 = vpack.c.bf16 %v1811, %v1811
        %v1823 = vpack.c.bf16 %v1814, %v1814
        %v1825 = vsel %vm1290, %v1756, 0
        %v1828 = vsel %vm1290, %v1786, 0
        %1830 = vmatpush.bf16.xpose.msra.mxu0 0
        %1831 = vmatpush.bf16.xpose.msra.mxu0 0
        %1832 = vmatpush.bf16.xpose.msra.mxu0 0
        %1833 = vmatpush.bf16.xpose.msra.mxu0 0
        %1834 = vmatpush.bf16.xpose.msra.mxu0 0
        %1835 = vmatpush.bf16.xpose.msra.mxu0 0
        %1836 = vmatpush.bf16.xpose.msra.mxu0 0
        %1837 = vmatpush.bf16.xpose.msra.mxu0 %v1828
        %1838 = vmatmul.bf16.gmra.mxu0 %v1825
        %v1839 = vpop.f32.mrf.mxu0
        %v1840 = vadd.f32 0.0, %v1839
        %v1841 = vpop.f32.mrf.mxu0
        %1842 = vdwg.mxu0
        %v1844 = vsel %vm1290, %v1757, 0
        %v1847 = vsel %vm1290, %v1787, 0
        %1849 = vmatpush.bf16.xpose.msra.mxu0 0
        %1850 = vmatpush.bf16.xpose.msra.mxu0 0
        %1851 = vmatpush.bf16.xpose.msra.mxu0 0
        %1852 = vmatpush.bf16.xpose.msra.mxu0 0
        %1853 = vmatpush.bf16.xpose.msra.mxu0 0
        %1854 = vmatpush.bf16.xpose.msra.mxu0 0
        %1855 = vmatpush.bf16.xpose.msra.mxu0 0
        %1856 = vmatpush.bf16.xpose.msra.mxu0 %v1847
        %1857 = vmatmul.bf16.gmra.mxu0 %v1844
        %v1858 = vpop.f32.mrf.mxu0
        %v1859 = vadd.f32 0.0, %v1858
        %v1860 = vpop.f32.mrf.mxu0
        %1861 = vdwg.mxu0
        %v1863 = vsel %vm1290, %v1758, 0
        %v1866 = vsel %vm1290, %v1788, 0
        %1868 = vmatpush.bf16.xpose.msra.mxu0 0
        %1869 = vmatpush.bf16.xpose.msra.mxu0 0
        %1870 = vmatpush.bf16.xpose.msra.mxu0 0
        %1871 = vmatpush.bf16.xpose.msra.mxu0 0
        %1872 = vmatpush.bf16.xpose.msra.mxu0 0
        %1873 = vmatpush.bf16.xpose.msra.mxu0 0
        %1874 = vmatpush.bf16.xpose.msra.mxu0 0
        %1875 = vmatpush.bf16.xpose.msra.mxu0 %v1866
        %1876 = vmatmul.bf16.gmra.mxu0 %v1863
        %v1877 = vpop.f32.mrf.mxu0
        %v1878 = vadd.f32 0.0, %v1877
        %v1879 = vpop.f32.mrf.mxu0
        %1880 = vdwg.mxu0
        %v1882 = vsel %vm1290, %v1759, 0
        %v1885 = vsel %vm1290, %v1789, 0
        %1887 = vmatpush.bf16.xpose.msra.mxu0 0
        %1888 = vmatpush.bf16.xpose.msra.mxu0 0
        %1889 = vmatpush.bf16.xpose.msra.mxu0 0
        %1890 = vmatpush.bf16.xpose.msra.mxu0 0
        %1891 = vmatpush.bf16.xpose.msra.mxu0 0
        %1892 = vmatpush.bf16.xpose.msra.mxu0 0
        %1893 = vmatpush.bf16.xpose.msra.mxu0 0
        %1894 = vmatpush.bf16.xpose.msra.mxu0 %v1885
        %1895 = vmatmul.bf16.gmra.mxu0 %v1882
        %v1896 = vpop.f32.mrf.mxu0
        %v1897 = vadd.f32 0.0, %v1896
        %v1898 = vpop.f32.mrf.mxu0
        %1899 = vdwg.mxu0
        %v1901 = vsel %vm1290, %v1760, 0
        %v1904 = vsel %vm1290, %v1790, 0
        %1906 = vmatpush.bf16.xpose.msra.mxu0 0
        %1907 = vmatpush.bf16.xpose.msra.mxu0 0
        %1908 = vmatpush.bf16.xpose.msra.mxu0 0
        %1909 = vmatpush.bf16.xpose.msra.mxu0 0
        %1910 = vmatpush.bf16.xpose.msra.mxu0 0
        %1911 = vmatpush.bf16.xpose.msra.mxu0 0
        %1912 = vmatpush.bf16.xpose.msra.mxu0 0
        %1913 = vmatpush.bf16.xpose.msra.mxu0 %v1904
        %1914 = vmatmul.bf16.gmra.mxu0 %v1901
        %v1915 = vpop.f32.mrf.mxu0
        %v1916 = vadd.f32 0.0, %v1915
        %v1917 = vpop.f32.mrf.mxu0
        %1918 = vdwg.mxu0
        %v1920 = vsel %vm1290, %v1761, 0
        %v1923 = vsel %vm1290, %v1791, 0
        %1925 = vmatpush.bf16.xpose.msra.mxu0 0
        %1926 = vmatpush.bf16.xpose.msra.mxu0 0
        %1927 = vmatpush.bf16.xpose.msra.mxu0 0
        %1928 = vmatpush.bf16.xpose.msra.mxu0 0
        %1929 = vmatpush.bf16.xpose.msra.mxu0 0
        %1930 = vmatpush.bf16.xpose.msra.mxu0 0
        %1931 = vmatpush.bf16.xpose.msra.mxu0 0
        %1932 = vmatpush.bf16.xpose.msra.mxu0 %v1923
        %1933 = vmatmul.bf16.gmra.mxu0 %v1920
        %v1934 = vpop.f32.mrf.mxu0
        %v1935 = vadd.f32 0.0, %v1934
        %v1936 = vpop.f32.mrf.mxu0
        %1937 = vdwg.mxu0
        %v1939 = vsel %vm1290, %v1762, 0
        %v1942 = vsel %vm1290, %v1792, 0
        %1944 = vmatpush.bf16.xpose.msra.mxu0 0
        %1945 = vmatpush.bf16.xpose.msra.mxu0 0
        %1946 = vmatpush.bf16.xpose.msra.mxu0 0
        %1947 = vmatpush.bf16.xpose.msra.mxu0 0
        %1948 = vmatpush.bf16.xpose.msra.mxu0 0
        %1949 = vmatpush.bf16.xpose.msra.mxu0 0
        %1950 = vmatpush.bf16.xpose.msra.mxu0 0
        %1951 = vmatpush.bf16.xpose.msra.mxu0 %v1942
        %1952 = vmatmul.bf16.gmra.mxu0 %v1939
        %v1953 = vpop.f32.mrf.mxu0
        %v1954 = vadd.f32 0.0, %v1953
        %v1955 = vpop.f32.mrf.mxu0
        %1956 = vdwg.mxu0
        %v1958 = vsel %vm1290, %v1763, 0
        %v1961 = vsel %vm1290, %v1793, 0
        %1963 = vmatpush.bf16.xpose.msra.mxu0 0
        %1964 = vmatpush.bf16.xpose.msra.mxu0 0
        %1965 = vmatpush.bf16.xpose.msra.mxu0 0
        %1966 = vmatpush.bf16.xpose.msra.mxu0 0
        %1967 = vmatpush.bf16.xpose.msra.mxu0 0
        %1968 = vmatpush.bf16.xpose.msra.mxu0 0
        %1969 = vmatpush.bf16.xpose.msra.mxu0 0
        %1970 = vmatpush.bf16.xpose.msra.mxu0 %v1961
        %1971 = vmatmul.bf16.gmra.mxu0 %v1958
        %v1972 = vpop.f32.mrf.mxu0
        %v1973 = vadd.f32 0.0, %v1972
        %v1974 = vpop.f32.mrf.mxu0
        %1975 = vdwg.mxu0
        %v1976 = vsel %vm1443, %v1840, -inf
        %1977 = vmax.xlane.f32.xlu0 %v1976
        %v1978 = vpop.xlane.xlu0 %1977
        %v1979 = vsel %vm1443, %v1859, -inf
        %1980 = vmax.xlane.f32.xlu0 %v1979
        %v1981 = vpop.xlane.xlu0 %1980
        %v1982 = vsel %vm1443, %v1878, -inf
        %1983 = vmax.xlane.f32.xlu0 %v1982
        %v1984 = vpop.xlane.xlu0 %1983
        %v1985 = vsel %vm1443, %v1897, -inf
        %1986 = vmax.xlane.f32.xlu0 %v1985
        %v1987 = vpop.xlane.xlu0 %1986
        %v1988 = vsel %vm1443, %v1916, -inf
        %1989 = vmax.xlane.f32.xlu0 %v1988
        %v1990 = vpop.xlane.xlu0 %1989
        %v1991 = vsel %vm1443, %v1935, -inf
        %1992 = vmax.xlane.f32.xlu0 %v1991
        %v1993 = vpop.xlane.xlu0 %1992
        %v1994 = vsel %vm1443, %v1954, -inf
        %1995 = vmax.xlane.f32.xlu0 %v1994
        %v1996 = vpop.xlane.xlu0 %1995
        %v1997 = vsel %vm1443, %v1973, -inf
        %1998 = vmax.xlane.f32.xlu0 %v1997
        %v1999 = vpop.xlane.xlu0 %1998
        %v2000 = vsub.f32 %v1840, %v1978
        %v2001 = vsub.f32 %v1859, %v1981
        %v2002 = vsub.f32 %v1878, %v1984
        %v2003 = vsub.f32 %v1897, %v1987
        %v2004 = vsub.f32 %v1916, %v1990
        %v2005 = vsub.f32 %v1935, %v1993
        %v2006 = vsub.f32 %v1954, %v1996
        %v2007 = vsub.f32 %v1973, %v1999
        %v2008 = vmul.f32 %v2000, 1.442695
        %v2009 = vpow.pop %v2008
        %v2010 = vmul.f32 %v2001, 1.442695
        %v2011 = vpow.pop %v2010
        %v2012 = vmul.f32 %v2002, 1.442695
        %v2013 = vpow.pop %v2012
        %v2014 = vmul.f32 %v2003, 1.442695
        %v2015 = vpow.pop %v2014
        %v2016 = vmul.f32 %v2004, 1.442695
        %v2017 = vpow.pop %v2016
        %v2018 = vmul.f32 %v2005, 1.442695
        %v2019 = vpow.pop %v2018
        %v2020 = vmul.f32 %v2006, 1.442695
        %v2021 = vpow.pop %v2020
        %v2022 = vmul.f32 %v2007, 1.442695
        %v2023 = vpow.pop %v2022
        %v2024 = vsel %vm1443, %v2009, 0.0
        %2025 = vadd.xlane.f32.xlu0 %v2024
        %v2026 = vpop.xlane.xlu0 %2025
        %v2027 = vsel %vm1443, %v2011, 0.0
        %2028 = vadd.xlane.f32.xlu0 %v2027
        %v2029 = vpop.xlane.xlu0 %2028
        %v2030 = vsel %vm1443, %v2013, 0.0
        %2031 = vadd.xlane.f32.xlu0 %v2030
        %v2032 = vpop.xlane.xlu0 %2031
        %v2033 = vsel %vm1443, %v2015, 0.0
        %2034 = vadd.xlane.f32.xlu0 %v2033
        %v2035 = vpop.xlane.xlu0 %2034
        %v2036 = vsel %vm1443, %v2017, 0.0
        %2037 = vadd.xlane.f32.xlu0 %v2036
        %v2038 = vpop.xlane.xlu0 %2037
        %v2039 = vsel %vm1443, %v2019, 0.0
        %2040 = vadd.xlane.f32.xlu0 %v2039
        %v2041 = vpop.xlane.xlu0 %2040
        %v2042 = vsel %vm1443, %v2021, 0.0
        %2043 = vadd.xlane.f32.xlu0 %v2042
        %v2044 = vpop.xlane.xlu0 %2043
        %v2045 = vsel %vm1443, %v2023, 0.0
        %2046 = vadd.xlane.f32.xlu0 %v2045
        %v2047 = vpop.xlane.xlu0 %2046
        %v2048 = vrcp.pop %v2026
        %v2049 = vrcp.pop %v2029
        %v2050 = vrcp.pop %v2032
        %v2051 = vrcp.pop %v2035
        %v2052 = vrcp.pop %v2038
        %v2053 = vrcp.pop %v2041
        %v2054 = vrcp.pop %v2044
        %v2055 = vrcp.pop %v2047
        %v2056 = vmul.f32 %v2009, %v2048
        %v2057 = vmul.f32 %v2011, %v2049
        %v2058 = vmul.f32 %v2013, %v2050
        %v2059 = vmul.f32 %v2015, %v2051
        %v2060 = vmul.f32 %v2017, %v2052
        %v2061 = vmul.f32 %v2019, %v2053
        %v2062 = vmul.f32 %v2021, %v2054
        %v2063 = vmul.f32 %v2023, %v2055
        %v2064 = vpack.c.bf16 %v2056, %v2056
        %v2065 = vpack.c.bf16 %v2057, %v2057
        %v2066 = vpack.c.bf16 %v2058, %v2058
        %v2067 = vpack.c.bf16 %v2059, %v2059
        %v2068 = vpack.c.bf16 %v2060, %v2060
        %v2069 = vpack.c.bf16 %v2061, %v2061
        %v2070 = vpack.c.bf16 %v2062, %v2062
        %v2071 = vpack.c.bf16 %v2063, %v2063
        %v2073 = vsel %vm1443, %v2064, 0
        %v2076 = vsel %vm1543, %v1816, 0
        %2078 = vmatpush.bf16.msra.mxu0 0
        %2079 = vmatpush.bf16.msra.mxu0 0
        %2080 = vmatpush.bf16.msra.mxu0 0
        %2081 = vmatpush.bf16.msra.mxu0 0
        %2082 = vmatpush.bf16.msra.mxu0 0
        %2083 = vmatpush.bf16.msra.mxu0 0
        %2084 = vmatpush.bf16.msra.mxu0 0
        %2085 = vmatpush.bf16.msra.mxu0 %v2076
        %2086 = vmatmul.bf16.gmra.mxu0 %v2073
        %v2087 = vpop.f32.mrf.mxu0
        %v2088 = vadd.f32 0.0, %v2087
        %v2089 = vpop.f32.mrf.mxu0
        %2090 = vdwg.mxu0
        %v2092 = vsel %vm1443, %v2065, 0
        %v2095 = vsel %vm1543, %v1817, 0
        %2097 = vmatpush.bf16.msra.mxu0 0
        %2098 = vmatpush.bf16.msra.mxu0 0
        %2099 = vmatpush.bf16.msra.mxu0 0
        %2100 = vmatpush.bf16.msra.mxu0 0
        %2101 = vmatpush.bf16.msra.mxu0 0
        %2102 = vmatpush.bf16.msra.mxu0 0
        %2103 = vmatpush.bf16.msra.mxu0 0
        %2104 = vmatpush.bf16.msra.mxu0 %v2095
        %2105 = vmatmul.bf16.gmra.mxu0 %v2092
        %v2106 = vpop.f32.mrf.mxu0
        %v2107 = vadd.f32 0.0, %v2106
        %v2108 = vpop.f32.mrf.mxu0
        %2109 = vdwg.mxu0
        %v2111 = vsel %vm1443, %v2066, 0
        %v2114 = vsel %vm1543, %v1818, 0
        %2116 = vmatpush.bf16.msra.mxu0 0
        %2117 = vmatpush.bf16.msra.mxu0 0
        %2118 = vmatpush.bf16.msra.mxu0 0
        %2119 = vmatpush.bf16.msra.mxu0 0
        %2120 = vmatpush.bf16.msra.mxu0 0
        %2121 = vmatpush.bf16.msra.mxu0 0
        %2122 = vmatpush.bf16.msra.mxu0 0
        %2123 = vmatpush.bf16.msra.mxu0 %v2114
        %2124 = vmatmul.bf16.gmra.mxu0 %v2111
        %v2125 = vpop.f32.mrf.mxu0
        %v2126 = vadd.f32 0.0, %v2125
        %v2127 = vpop.f32.mrf.mxu0
        %2128 = vdwg.mxu0
        %v2130 = vsel %vm1443, %v2067, 0
        %v2133 = vsel %vm1543, %v1819, 0
        %2135 = vmatpush.bf16.msra.mxu0 0
        %2136 = vmatpush.bf16.msra.mxu0 0
        %2137 = vmatpush.bf16.msra.mxu0 0
        %2138 = vmatpush.bf16.msra.mxu0 0
        %2139 = vmatpush.bf16.msra.mxu0 0
        %2140 = vmatpush.bf16.msra.mxu0 0
        %2141 = vmatpush.bf16.msra.mxu0 0
        %2142 = vmatpush.bf16.msra.mxu0 %v2133
        %2143 = vmatmul.bf16.gmra.mxu0 %v2130
        %v2144 = vpop.f32.mrf.mxu0
        %v2145 = vadd.f32 0.0, %v2144
        %v2146 = vpop.f32.mrf.mxu0
        %2147 = vdwg.mxu0
        %v2149 = vsel %vm1443, %v2068, 0
        %v2152 = vsel %vm1543, %v1820, 0
        %2154 = vmatpush.bf16.msra.mxu0 0
        %2155 = vmatpush.bf16.msra.mxu0 0
        %2156 = vmatpush.bf16.msra.mxu0 0
        %2157 = vmatpush.bf16.msra.mxu0 0
        %2158 = vmatpush.bf16.msra.mxu0 0
        %2159 = vmatpush.bf16.msra.mxu0 0
        %2160 = vmatpush.bf16.msra.mxu0 0
        %2161 = vmatpush.bf16.msra.mxu0 %v2152
        %2162 = vmatmul.bf16.gmra.mxu0 %v2149
        %v2163 = vpop.f32.mrf.mxu0
        %v2164 = vadd.f32 0.0, %v2163
        %v2165 = vpop.f32.mrf.mxu0
        %2166 = vdwg.mxu0
        %v2168 = vsel %vm1443, %v2069, 0
        %v2171 = vsel %vm1543, %v1821, 0
        %2173 = vmatpush.bf16.msra.mxu0 0
        %2174 = vmatpush.bf16.msra.mxu0 0
        %2175 = vmatpush.bf16.msra.mxu0 0
        %2176 = vmatpush.bf16.msra.mxu0 0
        %2177 = vmatpush.bf16.msra.mxu0 0
        %2178 = vmatpush.bf16.msra.mxu0 0
        %2179 = vmatpush.bf16.msra.mxu0 0
        %2180 = vmatpush.bf16.msra.mxu0 %v2171
        %2181 = vmatmul.bf16.gmra.mxu0 %v2168
        %v2182 = vpop.f32.mrf.mxu0
        %v2183 = vadd.f32 0.0, %v2182
        %v2184 = vpop.f32.mrf.mxu0
        %2185 = vdwg.mxu0
        %v2187 = vsel %vm1443, %v2070, 0
        %v2190 = vsel %vm1543, %v1822, 0
        %2192 = vmatpush.bf16.msra.mxu0 0
        %2193 = vmatpush.bf16.msra.mxu0 0
        %2194 = vmatpush.bf16.msra.mxu0 0
        %2195 = vmatpush.bf16.msra.mxu0 0
        %2196 = vmatpush.bf16.msra.mxu0 0
        %2197 = vmatpush.bf16.msra.mxu0 0
        %2198 = vmatpush.bf16.msra.mxu0 0
        %2199 = vmatpush.bf16.msra.mxu0 %v2190
        %2200 = vmatmul.bf16.gmra.mxu0 %v2187
        %v2201 = vpop.f32.mrf.mxu0
        %v2202 = vadd.f32 0.0, %v2201
        %v2203 = vpop.f32.mrf.mxu0
        %2204 = vdwg.mxu0
        %v2206 = vsel %vm1443, %v2071, 0
        %v2209 = vsel %vm1543, %v1823, 0
        %2211 = vmatpush.bf16.msra.mxu0 0
        %2212 = vmatpush.bf16.msra.mxu0 0
        %2213 = vmatpush.bf16.msra.mxu0 0
        %2214 = vmatpush.bf16.msra.mxu0 0
        %2215 = vmatpush.bf16.msra.mxu0 0
        %2216 = vmatpush.bf16.msra.mxu0 0
        %2217 = vmatpush.bf16.msra.mxu0 0
        %2218 = vmatpush.bf16.msra.mxu0 %v2209
        %2219 = vmatmul.bf16.gmra.mxu0 %v2206
        %v2220 = vpop.f32.mrf.mxu0
        %v2221 = vadd.f32 0.0, %v2220
        %v2222 = vpop.f32.mrf.mxu0
        %2223 = vdwg.mxu0
        %2225 = vrot.lane.b32.xlu0 %v2107, 16
        %v2226 = vpop.permute.xlu0 %2225
        %2229 = vrot.lane.b32.xlu0 %v2126, 32
        %v2230 = vpop.permute.xlu0 %2229
        %2233 = vrot.lane.b32.xlu0 %v2145, 48
        %v2234 = vpop.permute.xlu0 %2233
        %2237 = vrot.lane.b32.xlu0 %v2164, 64
        %v2238 = vpop.permute.xlu0 %2237
        %2241 = vrot.lane.b32.xlu0 %v2183, 80
        %v2242 = vpop.permute.xlu0 %2241
        %2245 = vrot.lane.b32.xlu0 %v2202, 96
        %v2246 = vpop.permute.xlu0 %2245
        %2249 = vrot.lane.b32.xlu0 %v2221, 112
        %v2250 = vpop.permute.xlu0 %2249
        %v2252 = vsel %vm1290, %v2088, %v2226
        %v2253 = vsel %vm1722, %v2252, %v2230
        %v2254 = vsel %vm1724, %v2253, %v2234
        %v2255 = vsel %vm1726, %v2254, %v2238
        %v2256 = vsel %vm1728, %v2255, %v2242
        %v2257 = vsel %vm1730, %v2256, %v2246
        %v2258 = vsel %vm1732, %v2257, %v2250
        %v2259 = vpack.c.bf16 %v2258, %v1733
        %v2260 = vld [vmem:[%s734] sm:$0xf]
        %v2261 = vld [vmem:[%s734 + $0x4] sm:$0xf]
        %v2262 = vld [vmem:[%s734 + $0x8] sm:$0xf]
        %v2263 = vld [vmem:[%s734 + $0xc] sm:$0xf]
        %v2264 = vld [vmem:[%s734 + $0x10] sm:$0xf]
        %v2265 = vld [vmem:[%s734 + $0x14] sm:$0xf]
        %v2266 = vld [vmem:[%s734 + $0x18] sm:$0xf]
        %v2267 = vld [vmem:[%s734 + $0x1c] sm:$0xf]
        %v2268 = vld [vmem:[%s734 + $0x20] sm:$0xf]
        %v2269 = vld [vmem:[%s734 + $0x24] sm:$0xf]
        %v2270 = vld [vmem:[%s734 + $0x28] sm:$0xf]
        %v2271 = vld [vmem:[%s734 + $0x2c] sm:$0xf]
        %v2272 = vld [vmem:[%s734 + $0x30] sm:$0xf]
        %v2273 = vld [vmem:[%s734 + $0x34] sm:$0xf]
        %v2274 = vld [vmem:[%s734 + $0x38] sm:$0xf]
        %v2275 = vld [vmem:[%s734 + $0x3c] sm:$0xf]
        %v2276 = vld [vmem:[%s862] sm:$0x1]
        %v2278 = vperm.slane %v2276, 0
        %v2296 = vunpack.c.l.b16 %v2260
        %v2297 = vunpack.c.l.b16 %v2261
        %v2298 = vunpack.c.l.b16 %v2262
        %v2299 = vunpack.c.l.b16 %v2263
        %v2300 = vunpack.c.l.b16 %v2264
        %v2301 = vunpack.c.l.b16 %v2265
        %v2302 = vunpack.c.l.b16 %v2266
        %v2303 = vunpack.c.l.b16 %v2267
        %v2304 = vunpack.c.l.b16 %v2268
        %v2305 = vunpack.c.l.b16 %v2269
        %v2306 = vunpack.c.l.b16 %v2270
        %v2307 = vunpack.c.l.b16 %v2271
        %v2308 = vunpack.c.l.b16 %v2272
        %v2309 = vunpack.c.l.b16 %v2273
        %v2310 = vunpack.c.l.b16 %v2274
        %v2311 = vunpack.c.l.b16 %v2275
        %v2312 = vpack.c.b16 %v2297, %v2296
        %v2313 = vpack.c.b16 %v2299, %v2298
        %v2314 = vpack.c.b16 %v2301, %v2300
        %v2315 = vpack.c.b16 %v2303, %v2302
        %v2316 = vpack.c.b16 %v2305, %v2304
        %v2317 = vpack.c.b16 %v2307, %v2306
        %v2318 = vpack.c.b16 %v2309, %v2308
        %v2319 = vpack.c.b16 %v2311, %v2310
        %2328 = vmatpush.bf16.msra.mxu0 %v2319
        %2329 = vmatpush.bf16.msra.mxu0 %v2318
        %2330 = vmatpush.bf16.msra.mxu0 %v2317
        %2331 = vmatpush.bf16.msra.mxu0 %v2316
        %2332 = vmatpush.bf16.msra.mxu0 %v2315
        %2333 = vmatpush.bf16.msra.mxu0 %v2314
        %2334 = vmatpush.bf16.msra.mxu0 %v2313
        %2335 = vmatpush.bf16.msra.mxu0 %v2312
        %2336 = vmatmul.bf16.gmra.mxu0 %v2259
        %v2337 = vpop.f32.mrf.mxu0
        %v2338 = vadd.f32 %v2278, %v2337
        %v2339 = vpop.f32.mrf.mxu0
        %v2340 = vadd.f32 %v2278, %v2339
        %2341 = vdwg.mxu0
        %v2342 = vadd.f32 %v945, %v2338
        %v2343 = vadd.f32 %v946, %v2340
        %v2344 = vld [vmem:[%s743] sm:$0x1]
        %v2345 = vld [vmem:[%s752] sm:$0x1]
        %2346 = vadd.xlane.f32.xlu0 %v2342
        %v2347 = vpop.xlane.xlu0 %2346
        %2348 = vadd.xlane.f32.xlu0 %v2343
        %v2349 = vpop.xlane.xlu0 %2348
        %v2350 = vrcp.pop 128.0
        %v2351 = vmul.f32 128.0, %v2350
        %v2352 = vsub.f32 1.0, %v2351
        %v2353 = vmul.f32 %v2350, %v2352
        %v2354 = vadd.f32 %v2350, %v2353
        %vm2355 = vweird.f32 %v2350
        %v2356 = vsel %vm2355, %v2350, %v2354
        %v2357 = vmul.f32 %v2347, %v2356
        %v2358 = vmul.f32 %v2349, %v2356
        %v2359 = vsub.f32 %v2342, %v2357
        %v2360 = vsub.f32 %v2343, %v2358
        %v2361 = vmul.f32 %v2359, %v2359
        %v2362 = vmul.f32 %v2360, %v2360
        %2363 = vadd.xlane.f32.xlu0 %v2361
        %v2364 = vpop.xlane.xlu0 %2363
        %2365 = vadd.xlane.f32.xlu0 %v2362
        %v2366 = vpop.xlane.xlu0 %2365
        %v2367 = vmul.f32 %v2364, %v2356
        %v2368 = vmul.f32 %v2366, %v2356
        %v2369 = vadd.f32 %v2367, 1e-05
        %v2370 = vadd.f32 %v2368, 1e-05
        %v2371 = vrsqrt.pop %v2369
        %v2372 = vmul.f32 %v2371, %v2369
        %v2373 = vmul.f32 %v2372, %v2371
        %v2374 = vmul.f32 0.5, %v2373
        %v2375 = vsub.f32 1.5, %v2374
        %v2376 = vmul.f32 %v2371, %v2375
        %vm2377 = vweird.f32 %v2369
        %vm2378 = vweird.f32 %v2371
        %vm2379 = vmor %vm2377, %vm2378
        %v2380 = vsel %vm2379, %v2371, %v2376
        %v2381 = vrsqrt.pop %v2370
        %v2382 = vmul.f32 %v2381, %v2370
        %v2383 = vmul.f32 %v2382, %v2381
        %v2384 = vmul.f32 0.5, %v2383
        %v2385 = vsub.f32 1.5, %v2384
        %v2386 = vmul.f32 %v2381, %v2385
        %vm2387 = vweird.f32 %v2370
        %vm2388 = vweird.f32 %v2381
        %vm2389 = vmor %vm2387, %vm2388
        %v2390 = vsel %vm2389, %v2381, %v2386
        %v2391 = vmul.f32 %v2359, %v2380
        %v2392 = vmul.f32 %v2360, %v2390
        %v2394 = vperm.slane %v2344, 0
        %v2396 = vmul.f32 %v2391, %v2394
        %v2397 = vmul.f32 %v2392, %v2394
        %v2399 = vperm.slane %v2345, 0
        %v2401 = vadd.f32 %v2396, %v2399
        %v2402 = vadd.f32 %v2397, %v2399
        %v2403 = vpack.c.bf16 %v2402, %v2401
        %v2404 = vld [vmem:[%s762] sm:$0xff]
        %v2405 = vld [vmem:[%s762 + $0x8] sm:$0xff]
        %v2406 = vld [vmem:[%s762 + $0x10] sm:$0xff]
        %v2407 = vld [vmem:[%s762 + $0x18] sm:$0xff]
        %v2408 = vld [vmem:[%s762 + $0x20] sm:$0xff]
        %v2409 = vld [vmem:[%s762 + $0x28] sm:$0xff]
        %v2410 = vld [vmem:[%s762 + $0x30] sm:$0xff]
        %v2411 = vld [vmem:[%s762 + $0x38] sm:$0xff]
        %v2412 = vld [vmem:[%s762 + $0x40] sm:$0xff]
        %v2413 = vld [vmem:[%s762 + $0x48] sm:$0xff]
        %v2414 = vld [vmem:[%s762 + $0x50] sm:$0xff]
        %v2415 = vld [vmem:[%s762 + $0x58] sm:$0xff]
        %v2416 = vld [vmem:[%s762 + $0x60] sm:$0xff]
        %v2417 = vld [vmem:[%s762 + $0x68] sm:$0xff]
        %v2418 = vld [vmem:[%s762 + $0x70] sm:$0xff]
        %v2419 = vld [vmem:[%s762 + $0x78] sm:$0xff]
        %v2420 = vld [vmem:[%s866] sm:$0x3]
        %v2422 = vperm.slane %v2420, 0
        %v2423 = vperm.slane %v2420, 1
        %v2442 = vunpack.c.l.b16 %v2404
        %v2443 = vunpack.c.h.b16 %v2404
        %v2444 = vunpack.c.l.b16 %v2405
        %v2445 = vunpack.c.h.b16 %v2405
        %v2446 = vunpack.c.l.b16 %v2406
        %v2447 = vunpack.c.h.b16 %v2406
        %v2448 = vunpack.c.l.b16 %v2407
        %v2449 = vunpack.c.h.b16 %v2407
        %v2450 = vunpack.c.l.b16 %v2408
        %v2451 = vunpack.c.h.b16 %v2408
        %v2452 = vunpack.c.l.b16 %v2409
        %v2453 = vunpack.c.h.b16 %v2409
        %v2454 = vunpack.c.l.b16 %v2410
        %v2455 = vunpack.c.h.b16 %v2410
        %v2456 = vunpack.c.l.b16 %v2411
        %v2457 = vunpack.c.h.b16 %v2411
        %v2458 = vunpack.c.l.b16 %v2412
        %v2459 = vunpack.c.h.b16 %v2412
        %v2460 = vunpack.c.l.b16 %v2413
        %v2461 = vunpack.c.h.b16 %v2413
        %v2462 = vunpack.c.l.b16 %v2414
        %v2463 = vunpack.c.h.b16 %v2414
        %v2464 = vunpack.c.l.b16 %v2415
        %v2465 = vunpack.c.h.b16 %v2415
        %v2466 = vunpack.c.l.b16 %v2416
        %v2467 = vunpack.c.h.b16 %v2416
        %v2468 = vunpack.c.l.b16 %v2417
        %v2469 = vunpack.c.h.b16 %v2417
        %v2470 = vunpack.c.l.b16 %v2418
        %v2471 = vunpack.c.h.b16 %v2418
        %v2472 = vunpack.c.l.b16 %v2419
        %v2473 = vunpack.c.h.b16 %v2419
        %v2474 = vpack.c.b16 %v2444, %v2442
        %v2475 = vpack.c.b16 %v2445, %v2443
        %v2476 = vpack.c.b16 %v2448, %v2446
        %v2477 = vpack.c.b16 %v2449, %v2447
        %v2478 = vpack.c.b16 %v2452, %v2450
        %v2479 = vpack.c.b16 %v2453, %v2451
        %v2480 = vpack.c.b16 %v2456, %v2454
        %v2481 = vpack.c.b16 %v2457, %v2455
        %v2482 = vpack.c.b16 %v2460, %v2458
        %v2483 = vpack.c.b16 %v2461, %v2459
        %v2484 = vpack.c.b16 %v2464, %v2462
        %v2485 = vpack.c.b16 %v2465, %v2463
        %v2486 = vpack.c.b16 %v2468, %v2466
        %v2487 = vpack.c.b16 %v2469, %v2467
        %v2488 = vpack.c.b16 %v2472, %v2470
        %v2489 = vpack.c.b16 %v2473, %v2471
        %2506 = vmatpush.bf16.msra.mxu0 %v2488
        %2507 = vmatpush.bf16.msra.mxu0 %v2486
        %2508 = vmatpush.bf16.msra.mxu0 %v2484
        %2509 = vmatpush.bf16.msra.mxu0 %v2482
        %2510 = vmatpush.bf16.msra.mxu0 %v2480
        %2511 = vmatpush.bf16.msra.mxu0 %v2478
        %2512 = vmatpush.bf16.msra.mxu0 %v2476
        %2513 = vmatpush.bf16.msra.mxu0 %v2474
        %2514 = vmatmul.bf16.gmra.mxu0 %v2403
        %v2515 = vpop.f32.mrf.mxu0
        %v2516 = vadd.f32 %v2422, %v2515
        %v2517 = vpop.f32.mrf.mxu0
        %v2518 = vadd.f32 %v2422, %v2517
        %2519 = vdwg.mxu0
        %2520 = vmatpush.bf16.msra.mxu0 %v2489
        %2521 = vmatpush.bf16.msra.mxu0 %v2487
        %2522 = vmatpush.bf16.msra.mxu0 %v2485
        %2523 = vmatpush.bf16.msra.mxu0 %v2483
        %2524 = vmatpush.bf16.msra.mxu0 %v2481
        %2525 = vmatpush.bf16.msra.mxu0 %v2479
        %2526 = vmatpush.bf16.msra.mxu0 %v2477
        %2527 = vmatpush.bf16.msra.mxu0 %v2475
        %2528 = vmatmul.bf16.gmra.mxu0 %v2403
        %v2529 = vpop.f32.mrf.mxu0
        %v2530 = vadd.f32 %v2423, %v2529
        %v2531 = vpop.f32.mrf.mxu0
        %v2532 = vadd.f32 %v2423, %v2531
        %2533 = vdwg.mxu0
        %v2534 = vmax.f32 %v2516, 0.0
        %v2535 = vmax.f32 %v2530, 0.0
        %v2536 = vmax.f32 %v2518, 0.0
        %v2537 = vmax.f32 %v2532, 0.0
        %v2538 = vpack.c.bf16 %v2536, %v2534
        %v2539 = vpack.c.bf16 %v2537, %v2535
        %v2540 = vld [vmem:[%s772] sm:$0xf]
        %v2541 = vld [vmem:[%s772 + $0x4] sm:$0xf]
        %v2542 = vld [vmem:[%s772 + $0x8] sm:$0xf]
        %v2543 = vld [vmem:[%s772 + $0xc] sm:$0xf]
        %v2544 = vld [vmem:[%s772 + $0x10] sm:$0xf]
        %v2545 = vld [vmem:[%s772 + $0x14] sm:$0xf]
        %v2546 = vld [vmem:[%s772 + $0x18] sm:$0xf]
        %v2547 = vld [vmem:[%s772 + $0x1c] sm:$0xf]
        %v2548 = vld [vmem:[%s772 + $0x20] sm:$0xf]
        %v2549 = vld [vmem:[%s772 + $0x24] sm:$0xf]
        %v2550 = vld [vmem:[%s772 + $0x28] sm:$0xf]
        %v2551 = vld [vmem:[%s772 + $0x2c] sm:$0xf]
        %v2552 = vld [vmem:[%s772 + $0x30] sm:$0xf]
        %v2553 = vld [vmem:[%s772 + $0x34] sm:$0xf]
        %v2554 = vld [vmem:[%s772 + $0x38] sm:$0xf]
        %v2555 = vld [vmem:[%s772 + $0x3c] sm:$0xf]
        %v2556 = vld [vmem:[%s772 + $0x40] sm:$0xf]
        %v2557 = vld [vmem:[%s772 + $0x44] sm:$0xf]
        %v2558 = vld [vmem:[%s772 + $0x48] sm:$0xf]
        %v2559 = vld [vmem:[%s772 + $0x4c] sm:$0xf]
        %v2560 = vld [vmem:[%s772 + $0x50] sm:$0xf]
        %v2561 = vld [vmem:[%s772 + $0x54] sm:$0xf]
        %v2562 = vld [vmem:[%s772 + $0x58] sm:$0xf]
        %v2563 = vld [vmem:[%s772 + $0x5c] sm:$0xf]
        %v2564 = vld [vmem:[%s772 + $0x60] sm:$0xf]
        %v2565 = vld [vmem:[%s772 + $0x64] sm:$0xf]
        %v2566 = vld [vmem:[%s772 + $0x68] sm:$0xf]
        %v2567 = vld [vmem:[%s772 + $0x6c] sm:$0xf]
        %v2568 = vld [vmem:[%s772 + $0x70] sm:$0xf]
        %v2569 = vld [vmem:[%s772 + $0x74] sm:$0xf]
        %v2570 = vld [vmem:[%s772 + $0x78] sm:$0xf]
        %v2571 = vld [vmem:[%s772 + $0x7c] sm:$0xf]
        %v2572 = vld [vmem:[%s869] sm:$0x1]
        %v2574 = vperm.slane %v2572, 0
        %v2608 = vunpack.c.l.b16 %v2540
        %v2609 = vunpack.c.l.b16 %v2541
        %v2610 = vunpack.c.l.b16 %v2542
        %v2611 = vunpack.c.l.b16 %v2543
        %v2612 = vunpack.c.l.b16 %v2544
        %v2613 = vunpack.c.l.b16 %v2545
        %v2614 = vunpack.c.l.b16 %v2546
        %v2615 = vunpack.c.l.b16 %v2547
        %v2616 = vunpack.c.l.b16 %v2548
        %v2617 = vunpack.c.l.b16 %v2549
        %v2618 = vunpack.c.l.b16 %v2550
        %v2619 = vunpack.c.l.b16 %v2551
        %v2620 = vunpack.c.l.b16 %v2552
        %v2621 = vunpack.c.l.b16 %v2553
        %v2622 = vunpack.c.l.b16 %v2554
        %v2623 = vunpack.c.l.b16 %v2555
        %v2624 = vunpack.c.l.b16 %v2556
        %v2625 = vunpack.c.l.b16 %v2557
        %v2626 = vunpack.c.l.b16 %v2558
        %v2627 = vunpack.c.l.b16 %v2559
        %v2628 = vunpack.c.l.b16 %v2560
        %v2629 = vunpack.c.l.b16 %v2561
        %v2630 = vunpack.c.l.b16 %v2562
        %v2631 = vunpack.c.l.b16 %v2563
        %v2632 = vunpack.c.l.b16 %v2564
        %v2633 = vunpack.c.l.b16 %v2565
        %v2634 = vunpack.c.l.b16 %v2566
        %v2635 = vunpack.c.l.b16 %v2567
        %v2636 = vunpack.c.l.b16 %v2568
        %v2637 = vunpack.c.l.b16 %v2569
        %v2638 = vunpack.c.l.b16 %v2570
        %v2639 = vunpack.c.l.b16 %v2571
        %v2640 = vpack.c.b16 %v2609, %v2608
        %v2641 = vpack.c.b16 %v2611, %v2610
        %v2642 = vpack.c.b16 %v2613, %v2612
        %v2643 = vpack.c.b16 %v2615, %v2614
        %v2644 = vpack.c.b16 %v2617, %v2616
        %v2645 = vpack.c.b16 %v2619, %v2618
        %v2646 = vpack.c.b16 %v2621, %v2620
        %v2647 = vpack.c.b16 %v2623, %v2622
        %v2648 = vpack.c.b16 %v2625, %v2624
        %v2649 = vpack.c.b16 %v2627, %v2626
        %v2650 = vpack.c.b16 %v2629, %v2628
        %v2651 = vpack.c.b16 %v2631, %v2630
        %v2652 = vpack.c.b16 %v2633, %v2632
        %v2653 = vpack.c.b16 %v2635, %v2634
        %v2654 = vpack.c.b16 %v2637, %v2636
        %v2655 = vpack.c.b16 %v2639, %v2638
        %2672 = vmatpush.bf16.msra.mxu0 %v2647
        %2673 = vmatpush.bf16.msra.mxu0 %v2646
        %2674 = vmatpush.bf16.msra.mxu0 %v2645
        %2675 = vmatpush.bf16.msra.mxu0 %v2644
        %2676 = vmatpush.bf16.msra.mxu0 %v2643
        %2677 = vmatpush.bf16.msra.mxu0 %v2642
        %2678 = vmatpush.bf16.msra.mxu0 %v2641
        %2679 = vmatpush.bf16.msra.mxu0 %v2640
        %2680 = vmatmul.bf16.gmra.mxu0 %v2538
        %v2681 = vpop.f32.mrf.mxu0
        %v2682 = vadd.f32 %v2574, %v2681
        %v2683 = vpop.f32.mrf.mxu0
        %v2684 = vadd.f32 %v2574, %v2683
        %2685 = vdwg.mxu0
        %2686 = vmatpush.bf16.msra.mxu0 %v2655
        %2687 = vmatpush.bf16.msra.mxu0 %v2654
        %2688 = vmatpush.bf16.msra.mxu0 %v2653
        %2689 = vmatpush.bf16.msra.mxu0 %v2652
        %2690 = vmatpush.bf16.msra.mxu0 %v2651
        %2691 = vmatpush.bf16.msra.mxu0 %v2650
        %2692 = vmatpush.bf16.msra.mxu0 %v2649
        %2693 = vmatpush.bf16.msra.mxu0 %v2648
        %2694 = vmatmul.bf16.gmra.mxu0 %v2539
        %v2695 = vpop.f32.mrf.mxu0
        %v2696 = vadd.f32 %v2682, %v2695
        %v2697 = vpop.f32.mrf.mxu0
        %v2698 = vadd.f32 %v2684, %v2697
        %2699 = vdwg.mxu0
        %v2700 = vadd.f32 %v2401, %v2696
        %v2701 = vadd.f32 %v2402, %v2698
        %v2702 = vld [vmem:[%s872] sm:$0x1]
        %v2703 = vld [vmem:[%s875] sm:$0x1]
        %2704 = vadd.xlane.f32.xlu0 %v2700
        %v2705 = vpop.xlane.xlu0 %2704
        %2706 = vadd.xlane.f32.xlu0 %v2701
        %v2707 = vpop.xlane.xlu0 %2706
        %v2708 = vmul.f32 %v2705, %v2356
        %v2709 = vmul.f32 %v2707, %v2356
        %v2710 = vsub.f32 %v2700, %v2708
        %v2711 = vsub.f32 %v2701, %v2709
        %v2712 = vmul.f32 %v2710, %v2710
        %v2713 = vmul.f32 %v2711, %v2711
        %2714 = vadd.xlane.f32.xlu0 %v2712
        %v2715 = vpop.xlane.xlu0 %2714
        %2716 = vadd.xlane.f32.xlu0 %v2713
        %v2717 = vpop.xlane.xlu0 %2716
        %v2718 = vmul.f32 %v2715, %v2356
        %v2719 = vmul.f32 %v2717, %v2356
        %v2720 = vadd.f32 %v2718, 1e-05
        %v2721 = vadd.f32 %v2719, 1e-05
        %v2722 = vrsqrt.pop %v2720
        %v2723 = vmul.f32 %v2722, %v2720
        %v2724 = vmul.f32 %v2723, %v2722
        %v2725 = vmul.f32 0.5, %v2724
        %v2726 = vsub.f32 1.5, %v2725
        %v2727 = vmul.f32 %v2722, %v2726
        %vm2728 = vweird.f32 %v2720
        %vm2729 = vweird.f32 %v2722
        %vm2730 = vmor %vm2728, %vm2729
        %v2731 = vsel %vm2730, %v2722, %v2727
        %v2732 = vrsqrt.pop %v2721
        %v2733 = vmul.f32 %v2732, %v2721
        %v2734 = vmul.f32 %v2733, %v2732
        %v2735 = vmul.f32 0.5, %v2734
        %v2736 = vsub.f32 1.5, %v2735
        %v2737 = vmul.f32 %v2732, %v2736
        %vm2738 = vweird.f32 %v2721
        %vm2739 = vweird.f32 %v2732
        %vm2740 = vmor %vm2738, %vm2739
        %v2741 = vsel %vm2740, %v2732, %v2737
        %v2742 = vmul.f32 %v2710, %v2731
        %v2743 = vmul.f32 %v2711, %v2741
        %v2745 = vperm.slane %v2702, 0
        %v2747 = vmul.f32 %v2742, %v2745
        %v2748 = vmul.f32 %v2743, %v2745
        %v2750 = vperm.slane %v2703, 0
        %v2752 = vadd.f32 %v2747, %v2750
        %v2753 = vadd.f32 %v2748, %v2750
        %2754 = vst [vmem:[#allocation2] sm:$0xff] %v2752
        %2755 = vst [vmem:[#allocation2 + $0x8] sm:$0xff] %v2753
        %p2756 = scmp.eq.s32.totalorder %s46, 1
        // Predicated region
        $region125: #{tpu_custom_call.1} parent=79 // pred_check
          %p2757 = pneg %p2756
        $region126: #{tpu_custom_call.1} parent=79 // pred_check_branch
          %2759 = sbr.rel (%p2757) target = $region128
        $region127: #{tpu_custom_call.1} parent=79 // pred_region
          %2760 = vst [vmem:[#allocation20] sm:$0xff] %v2752
          %2761 = vst [vmem:[#allocation20 + $0x8] sm:$0xff] %v2753
        $region128: #{tpu_custom_call.1} parent=79 // pred_fallthru
          _
        // Predicated region
        $region129: #{tpu_custom_call.1} parent=79 // pred_check
          %p2762 = pneg %p451
        $region130: #{tpu_custom_call.1} parent=79 // pred_check_branch
          %2764 = sbr.rel (%p2762) target = $region132
        $region131: #{tpu_custom_call.1} parent=79 // pred_region
          %s2765 = smul.u32 2, %s45
          %2767 = vsyncadd [#allocation5], 0
          %s2768 = smul.addr %s2765, 8
          %s2769 = scalar_lea.hbm %s15, %s2768
          %s2770 = sshll.u32 [#allocation20], 4
          %s2771 = int_to_ptr.vmem [resolvable:$true] %s2770
          %s2772 = sshll.u32 %s2769, 4
          %s2773 = int_to_ptr.hbm [resolvable:$true] %s2772
          %2778 = dma.vmem_to_hbm [thread:$0]  %s2771, 256, %s2773, [#allocation5], 128, 128, 8
        $region132: #{tpu_custom_call.1} parent=79 // pred_fallthru
          _
        // Predicated region
        $region133: #{tpu_custom_call.1} parent=79 // pred_check
          %p2779 = pneg %p451
        $region134: #{tpu_custom_call.1} parent=79 // pred_check_branch
          %2781 = sbr.rel (%p2779) target = $region136
        $region135: #{tpu_custom_call.1} parent=79 // pred_region
          %2783 = dma.done [#allocation5], 256
        $region136: #{tpu_custom_call.1} parent=79 // pred_fallthru
          _
      $region80: #{tpu_custom_call.1} parent=5 // pred_fallthru
        _
      %p2784 = scmp.le.s32.totalorder 2, %s36
      // Predicated region
      $region137: #{tpu_custom_call.1} parent=5 // pred_check
        %p2785 = pneg %p2784
      $region138: #{tpu_custom_call.1} parent=5 // pred_check_branch
        %2787 = sbr.rel (%p2785) target = $region140
      $region139: #{tpu_custom_call.1} parent=5 // pred_region
        %s2788 = ssub.s32 %s36, 2
      $region140: #{tpu_custom_call.1} parent=5 // pred_fallthru
        _
    $region6: #{tpu_custom_call.1} parent=1 // loop_footer
      %s40 = sadd.s32 1, %s36
    $region7: #{tpu_custom_call.1} parent=1 // loop_footer_branch
      %35 = sbr.rel target = $region3
    $region8: #{tpu_custom_call.1} parent=1 // loop_exit
      _
    %2789 = vsyncpa [#allocation4], 1
    %s2790 = scalar_lea.sflag [#allocation4], 1
    %2791 = vsyncpa %s2790, 1
    %2792 = vsyncpa [#allocation7], 1
    %2793 = vsyncpa [#allocation10], 1
    %s2794 = scalar_lea.sflag [#allocation10], 1
    %2795 = vsyncpa %s2794, 1
    %2796 = vsyncpa [#allocation13], 1
    %s2797 = scalar_lea.sflag [#allocation13], 1
    %2798 = vsyncpa %s2797, 1
    %2799 = vsyncpa [#allocation16], 1
    %s2800 = scalar_lea.sflag [#allocation16], 1
    %2801 = vsyncpa %s2800, 1
    %2802 = vsyncpa [#allocation19], 1
    %s2803 = scalar_lea.sflag [#allocation19], 1
    %2804 = vsyncpa %s2803, 1
    %2805 = vsyncpa [#allocation5], 1
    %s2806 = scalar_lea.sflag [#allocation5], 1
    %2807 = vsyncpa %s2806, 1

</llo_original>
